<compile_context>
chip_gen: v5e
topology: v5e:2x2
jax: 0.10.0
libtpu: 0.0.40
codegen_flags: <defaults>
</compile_context>

<pallas_src>
import functools

import jax
import jax.numpy as jnp
from jax.experimental import pallas as pl
from jax.experimental.pallas import tpu as pltpu


def _round_up(x, m):
    return ((x + m - 1) // m) * m


def _cdiv(a, b):
    return (a + b - 1) // b


# ----------------------------- Pallas kernel ---------------------------------

def _conv_gemm_kernel(*refs, apply_act, has_bias, has_res):
    """out_bf16 = [leaky_relu_0.2](A @ W + bias) [+ residual]  (whole-K, single step)."""
    a_ref, w_ref = refs[0], refs[1]
    i = 2
    b_ref = None
    r_ref = None
    if has_bias:
        b_ref = refs[i]
        i += 1
    if has_res:
        r_ref = refs[i]
        i += 1
    o_ref = refs[i]

    # bf16 x bf16 -> f32 accumulate on the MXU.
    y = jnp.dot(a_ref[...], w_ref[...], preferred_element_type=jnp.float32)
    if has_bias:
        y = y + b_ref[...]                       # bias kept in f32
    if apply_act:
        y = jnp.maximum(y, 0.2 * y)              # leaky_relu(negative_slope=0.2)
    if has_res:
        y = y + r_ref[...].astype(jnp.float32)   # skip added AFTER the activation
    o_ref[...] = y.astype(o_ref.dtype)           # bf16 store (lane-dense, >=128 wide)


def _choose_tm(m):
    """M-tile heuristic: big tiles for big layers, but always >=2 M blocks when
    feasible so v7x's two TensorCores both get a 'parallel' grid step."""
    if m >= 1024:
        return 512
    if m >= 512:
        return 256
    if m >= 64:
        return _round_up(_cdiv(m, 2), 16)
    return _round_up(max(m, 8), 8)


def fused_conv_gemm(a, w_packed, bias_packed, residual_padded, apply_act):
    """Fused matmul + epilogue.

    a:               (M, Kp) bf16 patches, K already padded to Kp by the extractor
    w_packed:        (Kp, Np) bf16, pre-padded GEMM weight (packed once at init)
    bias_packed:     (1, Np) f32 or None
    residual_padded: (Mp, Np) bf16 padded output of an earlier layer, or None
    Returns the padded (Mp, Np) bf16 result; caller slices [:M, :cout].
    """
    M, Kp = a.shape
    Kw, Np = w_packed.shape
    assert Kw == Kp, (Kw, Kp)

    TM = _choose_tm(M)
    TN = 256 if Np % 256 == 0 else 128       # 256-wide N tiles feed v6e/v7x's wider MXU
    Mp = _round_up(M, TM)

    a_p = jnp.pad(a, ((0, Mp - M), (0, 0))) if Mp > M else a

    inputs = [a_p, w_packed]
    in_specs = [
        pl.BlockSpec((TM, Kp), lambda i, j: (i, 0)),   # A tile (bf16, whole K)
        pl.BlockSpec((Kp, TN), lambda i, j: (0, j)),   # weight slab (bf16)
    ]
    bytes_accessed = Mp * Kp * 2 + Kp * Np * 2 + Mp * Np * 2
    if bias_packed is not None:
        inputs.append(bias_packed)
        in_specs.append(pl.BlockSpec((1, TN), lambda i, j: (0, j)))
        bytes_accessed += Np * 4
    if residual_padded is not None:
        # Skip connection is consumed as the producer's already-padded buffer:
        # same M (same spatial size) and same TM heuristic => same Mp/Np.
        assert residual_padded.shape == (Mp, Np), (residual_padded.shape, (Mp, Np))
        assert residual_padded.dtype == jnp.bfloat16
        inputs.append(residual_padded)
        in_specs.append(pl.BlockSpec((TM, TN), lambda i, j: (i, j)))
        bytes_accessed += Mp * Np * 2

    kern = functools.partial(_conv_gemm_kernel, apply_act=apply_act,
                             has_bias=bias_packed is not None,
                             has_res=residual_padded is not None)

    out = pl.pallas_call(
        kern,
        out_shape=jax.ShapeDtypeStruct((Mp, Np), jnp.bfloat16),
        grid_spec=pltpu.PrefetchScalarGridSpec(
            num_scalar_prefetch=0,
            grid=(Mp // TM, Np // TN),
            in_specs=in_specs,
            out_specs=pl.BlockSpec((TM, TN), lambda i, j: (i, j)),
        ),
        compiler_params=pltpu.CompilerParams(
            dimension_semantics=("parallel", "parallel"),
            # Worst-case double-buffered footprint here is ~3-4 MiB; an explicit
            # limit keeps headroom obvious on v7x's halved (64 MiB) VMEM.
            vmem_limit_bytes=32 * 1024 * 1024),
        cost_estimate=pl.CostEstimate(
            flops=2 * Mp * Kp * Np,
            transcendentals=0,
            bytes_accessed=int(bytes_accessed)),
    )(*inputs)
    return out


# ------------------------------ conv wrapper ----------------------------------

def _extract_patches_bf16(x, ksize, stride, pad, kp):
    """im2col on bf16 NHWC input: (N,H,W,C) -> (N*Ho*Wo, Kp), (kh,kw,cin) order,
    with the K padding fused into the concat (single bf16 materialization)."""
    n, h, w, c = x.shape
    xp = jnp.pad(x, ((0, 0), (pad, pad), (pad, pad), (0, 0)))
    ho = (h + 2 * pad - ksize) // stride + 1
    wo = (w + 2 * pad - ksize) // stride + 1
    cols = []
    for kh in range(ksize):
        for kw in range(ksize):
            cols.append(xp[:, kh:kh + stride * ho:stride,
                           kw:kw + stride * wo:stride, :])
    k = ksize * ksize * c
    if kp > k:
        cols.append(jnp.zeros((n, ho, wo, kp - k), x.dtype))
    patches = jnp.concatenate(cols, axis=-1)
    return patches.reshape(n * ho * wo, kp), (n, ho, wo)


def conv2d_pallas(x, w_packed, bias_packed, *, ksize, stride, pad, cout,
                  apply_act=True, residual_padded=None):
    """2D conv (bf16 NHWC activations, pre-packed GEMM weight) via im2col + fused
    Pallas matmul.  Returns (nhwc_bf16, padded_2d_bf16); the padded form can be
    fed straight back in as a later layer's residual (no slice + re-pad)."""
    kp = w_packed.shape[0]
    a, (n, ho, wo) = _extract_patches_bf16(x, ksize, stride, pad, kp)
    m = a.shape[0]
    out_padded = fused_conv_gemm(a, w_packed, bias_packed, residual_padded, apply_act)
    nhwc = out_padded[:m, :cout].reshape(n, ho, wo, cout)
    return nhwc, out_padded


# ------------------------- bilinear upsample (glue) ----------------------------

def _up2_axis(x, axis):
    """2x upsample along `axis`, PyTorch bilinear align_corners=False weights (bf16)."""
    n = x.shape[axis]
    idx = jnp.arange(n)
    xm1 = jnp.take(x, jnp.clip(idx - 1, 0, n - 1), axis=axis)
    xp1 = jnp.take(x, jnp.clip(idx + 1, 0, n - 1), axis=axis)
    even = 0.75 * x + 0.25 * xm1      # out[2i]   <- in[i - 0.25]
    odd = 0.75 * x + 0.25 * xp1       # out[2i+1] <- in[i + 0.25]
    stacked = jnp.stack([even, odd], axis=axis + 1)
    new_shape = list(x.shape)
    new_shape[axis] = 2 * n
    return stacked.reshape(new_shape)


def upsample2x_bilinear(x):
    # separable bilinear (exact for 2x, align_corners=False); runs in bf16 now
    return _up2_axis(_up2_axis(x, 1), 2)


# ------------------------------ parameters -------------------------------------

def _spectral_normalize(w_hwio, key, n_iter=10):
    """Divide by top singular value of the (Cout, Cin*KH*KW) matrix (SN in eval mode)."""
    kh, kw, cin, cout = w_hwio.shape
    wm = jnp.transpose(w_hwio, (3, 2, 0, 1)).reshape(cout, -1)
    u = jax.random.normal(key, (cout,), jnp.float32)
    u = u / (jnp.linalg.norm(u) + 1e-12)
    v = None
    for _ in range(n_iter):
        v = wm.T @ u
        v = v / (jnp.linalg.norm(v) + 1e-12)
        u = wm @ v
        u = u / (jnp.linalg.norm(u) + 1e-12)
    sigma = u @ (wm @ v)
    return w_hwio / sigma


def init_params(key, input_nc=3, ndf=16):
    """Raw HWIO weights (+ the two real biases).  conv1..conv8 have bias=False
    in the PyTorch reference, so no bias is created (or streamed) for them."""
    shapes = {
        'w0': (3, 3, input_nc, ndf),
        'w1': (4, 4, ndf, ndf * 2),
        'w2': (4, 4, ndf * 2, ndf * 4),
        'w3': (4, 4, ndf * 4, ndf * 8),
        'w4': (3, 3, ndf * 8, ndf * 4),
        'w5': (3, 3, ndf * 4, ndf * 2),
        'w6': (3, 3, ndf * 2, ndf),
        'w7': (3, 3, ndf, ndf),
        'w8': (3, 3, ndf, ndf),
        'w9': (3, 3, ndf, 1),
    }
    sn_names = {'w1', 'w2', 'w3', 'w4', 'w5', 'w6', 'w7', 'w8'}
    params = {}
    keys = jax.random.split(key, 2 * len(shapes) + 2)
    for i, (name, shp) in enumerate(sorted(shapes.items())):
        w = 0.05 * jax.random.normal(keys[2 * i], shp, jnp.float32)
        if name in sn_names:
            w = _spectral_normalize(w, keys[2 * i + 1])
        params[name] = w
    params['b0'] = 0.01 * jax.random.normal(keys[-2], (ndf,), jnp.float32)
    params['b9'] = 0.01 * jax.random.normal(keys[-1], (1,), jnp.float32)
    return params


def _pack_weight(w_hwio):
    """HWIO -> (Kp, Np) bf16 GEMM matrix.  K padded only to 16 (bf16 sublane
    pack; full-array dim so the (8,128) BlockSpec rule stays satisfied), Cout
    padded to 128 for a lane-dense output."""
    kh, kw, cin, cout = w_hwio.shape
    k = kh * kw * cin
    kp = _round_up(k, 16)
    np_ = _round_up(cout, 128)
    wm = w_hwio.reshape(k, cout).astype(jnp.bfloat16)
    return jnp.pad(wm, ((0, kp - k), (0, np_ - cout)))


def _pack_bias(b):
    np_ = _round_up(b.shape[0], 128)
    return jnp.pad(b.reshape(1, -1).astype(jnp.float32),
                   ((0, 0), (0, np_ - b.shape[0])))


def prepare_params(params):
    """One-time packing of weights/biases for the Pallas GEMM (hoisted out of
    the per-forward path)."""
    packed = {}
    for name, val in params.items():
        packed[name] = _pack_weight(val) if name.startswith('w') else _pack_bias(val)
    return packed


# ------------------------------ forward pass -----------------------------------

def discriminator_unet_forward(packed, x_nchw, *, ndf=16):
    """External interface is NCHW f32 (PyTorch convention); internally NHWC bf16."""
    p = packed
    x = jnp.transpose(x_nchw, (0, 2, 3, 1)).astype(jnp.bfloat16)

    # Encoder.  Padded 2-D outputs of x0/x1/x2 are kept for the U-Net skips.
    x0, x0_pad = conv2d_pallas(x, p['w0'], p['b0'], ksize=3, stride=1, pad=1,
                               cout=ndf, apply_act=True)
    x1, x1_pad = conv2d_pallas(x0, p['w1'], None, ksize=4, stride=2, pad=1,
                               cout=ndf * 2, apply_act=True)
    x2, x2_pad = conv2d_pallas(x1, p['w2'], None, ksize=4, stride=2, pad=1,
                               cout=ndf * 4, apply_act=True)
    x3, _ = conv2d_pallas(x2, p['w3'], None, ksize=4, stride=2, pad=1,
                          cout=ndf * 8, apply_act=True)

    # Decoder with skips: y = lrelu(conv(up(x))) + skip  (skip added post-activation).
    x3 = upsample2x_bilinear(x3)
    x4, _ = conv2d_pallas(x3, p['w4'], None, ksize=3, stride=1, pad=1,
                          cout=ndf * 4, apply_act=True, residual_padded=x2_pad)
    x4 = upsample2x_bilinear(x4)
    x5, _ = conv2d_pallas(x4, p['w5'], None, ksize=3, stride=1, pad=1,
                          cout=ndf * 2, apply_act=True, residual_padded=x1_pad)
    x5 = upsample2x_bilinear(x5)
    x6, _ = conv2d_pallas(x5, p['w6'], None, ksize=3, stride=1, pad=1,
                          cout=ndf, apply_act=True, residual_padded=x0_pad)

    out, _ = conv2d_pallas(x6, p['w7'], None, ksize=3, stride=1, pad=1,
                           cout=ndf, apply_act=True)
    out, _ = conv2d_pallas(out, p['w8'], None, ksize=3, stride=1, pad=1,
                           cout=ndf, apply_act=True)
    out, _ = conv2d_pallas(out, p['w9'], p['b9'], ksize=3, stride=1, pad=1,
                           cout=1, apply_act=False)

    # back to NCHW f32: (N, 1, H, W)
    return jnp.transpose(out.astype(jnp.float32), (0, 3, 1, 2))


# --------------------------------- main -----------------------------------------

if __name__ == "__main__":
    key = jax.random.PRNGKey(0)
    k_param, k_input = jax.random.split(key)

    B, C, H, W = 2, 3, 16, 16          # small shapes; H, W must be divisible by 8
    NDF = 16
    raw_params = init_params(k_param, input_nc=C, ndf=NDF)
    packed_params = prepare_params(raw_params)   # one-time weight packing
    x = jax.random.normal(k_input, (B, C, H, W), jnp.float32)

    fwd = jax.jit(functools.partial(discriminator_unet_forward, ndf=NDF))
    out = fwd(packed_params, x)
    out = jax.block_until_ready(out)

    assert out.shape == (B, 1, H, W), out.shape
    assert bool(jnp.all(jnp.isfinite(out)))
    print("KERNEL_OK")
</pallas_src>

<mosaic_0001>
module attributes {stable_mosaic.version = 11 : i64} {
  func.func @_conv_gemm_kernel(%arg0: i32, %arg1: i32, %arg2: memref<256x32xbf16, #tpu.memory_space<vmem>>, %arg3: memref<32x128xbf16, #tpu.memory_space<vmem>>, %arg4: memref<1x128xf32, #tpu.memory_space<vmem>>, %arg5: memref<256x128xbf16, #tpu.memory_space<vmem>>) attributes {dimension_semantics = [#tpu.dimension_semantics<parallel>, #tpu.dimension_semantics<parallel>], iteration_bounds = array<i64: 2, 1>, scalar_prefetch = 0 : i64, scratch_operands = 0 : i64, tpu.core_type = #tpu.core_type<tc>, window_params = [{transform_indices = @transform_0, window_bounds = array<i64: 256, 32>}, {transform_indices = @transform_1, window_bounds = array<i64: 32, 128>}, {transform_indices = @transform_2, window_bounds = array<i64: 1, 128>}, {transform_indices = @transform_3, window_bounds = array<i64: 256, 128>}]} {
    %c0 = arith.constant 0 : index
    %c0_0 = arith.constant 0 : index
    %0 = vector.load %arg2[%c0, %c0_0] : memref<256x32xbf16, #tpu.memory_space<vmem>>, vector<256x32xbf16>
    %c0_1 = arith.constant 0 : index
    %c0_2 = arith.constant 0 : index
    %1 = vector.load %arg3[%c0_1, %c0_2] : memref<32x128xbf16, #tpu.memory_space<vmem>>, vector<32x128xbf16>
    %cst = arith.constant dense<0.000000e+00> : vector<256x128xf32>
    %2 = tpu.matmul %0, %1, %cst {dimension_numbers = #tpu.dot_dimension_numbers<[1], [0], [0], [1], [0, 0, 1, 1], [], []>} : vector<256x32xbf16>, vector<32x128xbf16>, vector<256x128xf32> -> vector<256x128xf32>
    %c0_3 = arith.constant 0 : index
    %c0_4 = arith.constant 0 : index
    %3 = vector.load %arg4[%c0_3, %c0_4] : memref<1x128xf32, #tpu.memory_space<vmem>>, vector<1x128xf32>
    %4 = vector.broadcast %3 : vector<1x128xf32> to vector<256x128xf32>
    %5 = arith.addf %2, %4 : vector<256x128xf32>
    %cst_5 = arith.constant 2.000000e-01 : f32
    %6 = vector.broadcast %cst_5 : f32 to vector<256x128xf32>
    %7 = arith.mulf %6, %5 : vector<256x128xf32>
    %8 = arith.maximumf %5, %7 : vector<256x128xf32>
    %9 = arith.truncf %8 : vector<256x128xf32> to vector<256x128xbf16>
    %c0_6 = arith.constant 0 : index
    %c0_7 = arith.constant 0 : index
    %10 = vector.load %arg5[%c0_6, %c0_7] : memref<256x128xbf16, #tpu.memory_space<vmem>>, vector<256x128xbf16>
    tpu.vector_store %arg5[%c0_6, %c0_7], %9 {strides = array<i32>} : memref<256x128xbf16, #tpu.memory_space<vmem>>, vector<256x128xbf16>,
    return
  }
  func.func @transform_0(%arg0: i32, %arg1: i32) -> (i32, i32) {
    %c0_i32 = arith.constant 0 : i32
    %c0_i32_0 = arith.constant 0 : i32
    return %arg0, %c0_i32 : i32, i32
  }
  func.func @transform_1(%arg0: i32, %arg1: i32) -> (i32, i32) {
    %c0_i32 = arith.constant 0 : i32
    %c0_i32_0 = arith.constant 0 : i32
    return %c0_i32, %arg1 : i32, i32
  }
  func.func @transform_2(%arg0: i32, %arg1: i32) -> (i32, i32) {
    %c0_i32 = arith.constant 0 : i32
    %c0_i32_0 = arith.constant 0 : i32
    return %c0_i32, %arg1 : i32, i32
  }
  func.func @transform_3(%arg0: i32, %arg1: i32) -> (i32, i32) {
    %c0_i32 = arith.constant 0 : i32
    return %arg0, %arg1 : i32, i32
  }
}

module attributes {stable_mosaic.version = 11 : i64} {
  func.func @_conv_gemm_kernel(%arg0: i32, %arg1: i32, %arg2: memref<64x256xbf16, #tpu.memory_space<vmem>>, %arg3: memref<256x128xbf16, #tpu.memory_space<vmem>>, %arg4: memref<64x128xbf16, #tpu.memory_space<vmem>>) attributes {dimension_semantics = [#tpu.dimension_semantics<parallel>, #tpu.dimension_semantics<parallel>], iteration_bounds = array<i64: 2, 1>, scalar_prefetch = 0 : i64, scratch_operands = 0 : i64, tpu.core_type = #tpu.core_type<tc>, window_params = [{transform_indices = @transform_0, window_bounds = array<i64: 64, 256>}, {transform_indices = @transform_1, window_bounds = array<i64: 256, 128>}, {transform_indices = @transform_2, window_bounds = array<i64: 64, 128>}]} {
    %c0 = arith.constant 0 : index
    %c0_0 = arith.constant 0 : index
    %0 = vector.load %arg2[%c0, %c0_0] : memref<64x256xbf16, #tpu.memory_space<vmem>>, vector<64x256xbf16>
    %c0_1 = arith.constant 0 : index
    %c0_2 = arith.constant 0 : index
    %1 = vector.load %arg3[%c0_1, %c0_2] : memref<256x128xbf16, #tpu.memory_space<vmem>>, vector<256x128xbf16>
    %cst = arith.constant dense<0.000000e+00> : vector<64x128xf32>
    %2 = tpu.matmul %0, %1, %cst {dimension_numbers = #tpu.dot_dimension_numbers<[1], [0], [0], [1], [0, 0, 1, 1], [], []>} : vector<64x256xbf16>, vector<256x128xbf16>, vector<64x128xf32> -> vector<64x128xf32>
    %cst_3 = arith.constant 2.000000e-01 : f32
    %3 = vector.broadcast %cst_3 : f32 to vector<64x128xf32>
    %4 = arith.mulf %3, %2 : vector<64x128xf32>
    %5 = arith.maximumf %2, %4 : vector<64x128xf32>
    %6 = arith.truncf %5 : vector<64x128xf32> to vector<64x128xbf16>
    %c0_4 = arith.constant 0 : index
    %c0_5 = arith.constant 0 : index
    %7 = vector.load %arg4[%c0_4, %c0_5] : memref<64x128xbf16, #tpu.memory_space<vmem>>, vector<64x128xbf16>
    tpu.vector_store %arg4[%c0_4, %c0_5], %6 {strides = array<i32>} : memref<64x128xbf16, #tpu.memory_space<vmem>>, vector<64x128xbf16>,
    return
  }
  func.func @transform_0(%arg0: i32, %arg1: i32) -> (i32, i32) {
    %c0_i32 = arith.constant 0 : i32
    %c0_i32_0 = arith.constant 0 : i32
    return %arg0, %c0_i32 : i32, i32
  }
  func.func @transform_1(%arg0: i32, %arg1: i32) -> (i32, i32) {
    %c0_i32 = arith.constant 0 : i32
    %c0_i32_0 = arith.constant 0 : i32
    return %c0_i32, %arg1 : i32, i32
  }
  func.func @transform_2(%arg0: i32, %arg1: i32) -> (i32, i32) {
    %c0_i32 = arith.constant 0 : i32
    return %arg0, %arg1 : i32, i32
  }
}

module attributes {stable_mosaic.version = 11 : i64} {
  func.func @_conv_gemm_kernel(%arg0: i32, %arg1: i32, %arg2: memref<32x512xbf16, #tpu.memory_space<vmem>>, %arg3: memref<512x128xbf16, #tpu.memory_space<vmem>>, %arg4: memref<32x128xbf16, #tpu.memory_space<vmem>>) attributes {dimension_semantics = [#tpu.dimension_semantics<parallel>, #tpu.dimension_semantics<parallel>], iteration_bounds = array<i64: 1, 1>, scalar_prefetch = 0 : i64, scratch_operands = 0 : i64, tpu.core_type = #tpu.core_type<tc>, window_params = [{transform_indices = @transform_0, window_bounds = array<i64: 32, 512>}, {transform_indices = @transform_1, window_bounds = array<i64: 512, 128>}, {transform_indices = @transform_2, window_bounds = array<i64: 32, 128>}]} {
    %c0 = arith.constant 0 : index
    %c0_0 = arith.constant 0 : index
    %0 = vector.load %arg2[%c0, %c0_0] : memref<32x512xbf16, #tpu.memory_space<vmem>>, vector<32x512xbf16>
    %c0_1 = arith.constant 0 : index
    %c0_2 = arith.constant 0 : index
    %1 = vector.load %arg3[%c0_1, %c0_2] : memref<512x128xbf16, #tpu.memory_space<vmem>>, vector<512x128xbf16>
    %cst = arith.constant dense<0.000000e+00> : vector<32x128xf32>
    %2 = tpu.matmul %0, %1, %cst {dimension_numbers = #tpu.dot_dimension_numbers<[1], [0], [0], [1], [0, 0, 1, 1], [], []>} : vector<32x512xbf16>, vector<512x128xbf16>, vector<32x128xf32> -> vector<32x128xf32>
    %cst_3 = arith.constant 2.000000e-01 : f32
    %3 = vector.broadcast %cst_3 : f32 to vector<32x128xf32>
    %4 = arith.mulf %3, %2 : vector<32x128xf32>
    %5 = arith.maximumf %2, %4 : vector<32x128xf32>
    %6 = arith.truncf %5 : vector<32x128xf32> to vector<32x128xbf16>
    %c0_4 = arith.constant 0 : index
    %c0_5 = arith.constant 0 : index
    %7 = vector.load %arg4[%c0_4, %c0_5] : memref<32x128xbf16, #tpu.memory_space<vmem>>, vector<32x128xbf16>
    tpu.vector_store %arg4[%c0_4, %c0_5], %6 {strides = array<i32>} : memref<32x128xbf16, #tpu.memory_space<vmem>>, vector<32x128xbf16>,
    return
  }
  func.func @transform_0(%arg0: i32, %arg1: i32) -> (i32, i32) {
    %c0_i32 = arith.constant 0 : i32
    %c0_i32_0 = arith.constant 0 : i32
    return %arg0, %c0_i32 : i32, i32
  }
  func.func @transform_1(%arg0: i32, %arg1: i32) -> (i32, i32) {
    %c0_i32 = arith.constant 0 : i32
    %c0_i32_0 = arith.constant 0 : i32
    return %c0_i32, %arg1 : i32, i32
  }
  func.func @transform_2(%arg0: i32, %arg1: i32) -> (i32, i32) {
    %c0_i32 = arith.constant 0 : i32
    return %arg0, %arg1 : i32, i32
  }
}

module attributes {stable_mosaic.version = 11 : i64} {
  func.func @_conv_gemm_kernel(%arg0: i32, %arg1: i32, %arg2: memref<8x1024xbf16, #tpu.memory_space<vmem>>, %arg3: memref<1024x128xbf16, #tpu.memory_space<vmem>>, %arg4: memref<8x128xbf16, #tpu.memory_space<vmem>>) attributes {dimension_semantics = [#tpu.dimension_semantics<parallel>, #tpu.dimension_semantics<parallel>], iteration_bounds = array<i64: 1, 1>, scalar_prefetch = 0 : i64, scratch_operands = 0 : i64, tpu.core_type = #tpu.core_type<tc>, window_params = [{transform_indices = @transform_0, window_bounds = array<i64: 8, 1024>}, {transform_indices = @transform_1, window_bounds = array<i64: 1024, 128>}, {transform_indices = @transform_2, window_bounds = array<i64: 8, 128>}]} {
    %c0 = arith.constant 0 : index
    %c0_0 = arith.constant 0 : index
    %0 = vector.load %arg2[%c0, %c0_0] : memref<8x1024xbf16, #tpu.memory_space<vmem>>, vector<8x1024xbf16>
    %c0_1 = arith.constant 0 : index
    %c0_2 = arith.constant 0 : index
    %1 = vector.load %arg3[%c0_1, %c0_2] : memref<1024x128xbf16, #tpu.memory_space<vmem>>, vector<1024x128xbf16>
    %cst = arith.constant dense<0.000000e+00> : vector<8x128xf32>
    %2 = tpu.matmul %0, %1, %cst {dimension_numbers = #tpu.dot_dimension_numbers<[1], [0], [0], [1], [0, 0, 1, 1], [], []>} : vector<8x1024xbf16>, vector<1024x128xbf16>, vector<8x128xf32> -> vector<8x128xf32>
    %cst_3 = arith.constant 2.000000e-01 : f32
    %3 = vector.broadcast %cst_3 : f32 to vector<8x128xf32>
    %4 = arith.mulf %3, %2 : vector<8x128xf32>
    %5 = arith.maximumf %2, %4 : vector<8x128xf32>
    %6 = arith.truncf %5 : vector<8x128xf32> to vector<8x128xbf16>
    %c0_4 = arith.constant 0 : index
    %c0_5 = arith.constant 0 : index
    %7 = vector.load %arg4[%c0_4, %c0_5] : memref<8x128xbf16, #tpu.memory_space<vmem>>, vector<8x128xbf16>
    tpu.vector_store %arg4[%c0_4, %c0_5], %6 {strides = array<i32>} : memref<8x128xbf16, #tpu.memory_space<vmem>>, vector<8x128xbf16>,
    return
  }
  func.func @transform_0(%arg0: i32, %arg1: i32) -> (i32, i32) {
    %c0_i32 = arith.constant 0 : i32
    %c0_i32_0 = arith.constant 0 : i32
    return %arg0, %c0_i32 : i32, i32
  }
  func.func @transform_1(%arg0: i32, %arg1: i32) -> (i32, i32) {
    %c0_i32 = arith.constant 0 : i32
    %c0_i32_0 = arith.constant 0 : i32
    return %c0_i32, %arg1 : i32, i32
  }
  func.func @transform_2(%arg0: i32, %arg1: i32) -> (i32, i32) {
    %c0_i32 = arith.constant 0 : i32
    return %arg0, %arg1 : i32, i32
  }
}

module attributes {stable_mosaic.version = 11 : i64} {
  func.func @_conv_gemm_kernel(%arg0: i32, %arg1: i32, %arg2: memref<32x1152xbf16, #tpu.memory_space<vmem>>, %arg3: memref<1152x128xbf16, #tpu.memory_space<vmem>>, %arg4: memref<32x128xbf16, #tpu.memory_space<vmem>>, %arg5: memref<32x128xbf16, #tpu.memory_space<vmem>>) attributes {dimension_semantics = [#tpu.dimension_semantics<parallel>, #tpu.dimension_semantics<parallel>], iteration_bounds = array<i64: 1, 1>, scalar_prefetch = 0 : i64, scratch_operands = 0 : i64, tpu.core_type = #tpu.core_type<tc>, window_params = [{transform_indices = @transform_0, window_bounds = array<i64: 32, 1152>}, {transform_indices = @transform_1, window_bounds = array<i64: 1152, 128>}, {transform_indices = @transform_2, window_bounds = array<i64: 32, 128>}, {transform_indices = @transform_3, window_bounds = array<i64: 32, 128>}]} {
    %c0 = arith.constant 0 : index
    %c0_0 = arith.constant 0 : index
    %0 = vector.load %arg2[%c0, %c0_0] : memref<32x1152xbf16, #tpu.memory_space<vmem>>, vector<32x1152xbf16>
    %c0_1 = arith.constant 0 : index
    %c0_2 = arith.constant 0 : index
    %1 = vector.load %arg3[%c0_1, %c0_2] : memref<1152x128xbf16, #tpu.memory_space<vmem>>, vector<1152x128xbf16>
    %cst = arith.constant dense<0.000000e+00> : vector<32x128xf32>
    %2 = tpu.matmul %0, %1, %cst {dimension_numbers = #tpu.dot_dimension_numbers<[1], [0], [0], [1], [0, 0, 1, 1], [], []>} : vector<32x1152xbf16>, vector<1152x128xbf16>, vector<32x128xf32> -> vector<32x128xf32>
    %cst_3 = arith.constant 2.000000e-01 : f32
    %3 = vector.broadcast %cst_3 : f32 to vector<32x128xf32>
    %4 = arith.mulf %3, %2 : vector<32x128xf32>
    %5 = arith.maximumf %2, %4 : vector<32x128xf32>
    %c0_4 = arith.constant 0 : index
    %c0_5 = arith.constant 0 : index
    %6 = vector.load %arg4[%c0_4, %c0_5] : memref<32x128xbf16, #tpu.memory_space<vmem>>, vector<32x128xbf16>
    %7 = arith.extf %6 : vector<32x128xbf16> to vector<32x128xf32>
    %8 = arith.addf %5, %7 : vector<32x128xf32>
    %9 = arith.truncf %8 : vector<32x128xf32> to vector<32x128xbf16>
    %c0_6 = arith.constant 0 : index
    %c0_7 = arith.constant 0 : index
    %10 = vector.load %arg5[%c0_6, %c0_7] : memref<32x128xbf16, #tpu.memory_space<vmem>>, vector<32x128xbf16>
    tpu.vector_store %arg5[%c0_6, %c0_7], %9 {strides = array<i32>} : memref<32x128xbf16, #tpu.memory_space<vmem>>, vector<32x128xbf16>,
    return
  }
  func.func @transform_0(%arg0: i32, %arg1: i32) -> (i32, i32) {
    %c0_i32 = arith.constant 0 : i32
    %c0_i32_0 = arith.constant 0 : i32
    return %arg0, %c0_i32 : i32, i32
  }
  func.func @transform_1(%arg0: i32, %arg1: i32) -> (i32, i32) {
    %c0_i32 = arith.constant 0 : i32
    %c0_i32_0 = arith.constant 0 : i32
    return %c0_i32, %arg1 : i32, i32
  }
  func.func @transform_2(%arg0: i32, %arg1: i32) -> (i32, i32) {
    %c0_i32 = arith.constant 0 : i32
    return %arg0, %arg1 : i32, i32
  }
  func.func @transform_3(%arg0: i32, %arg1: i32) -> (i32, i32) {
    %c0_i32 = arith.constant 0 : i32
    return %arg0, %arg1 : i32, i32
  }
}

module attributes {stable_mosaic.version = 11 : i64} {
  func.func @_conv_gemm_kernel(%arg0: i32, %arg1: i32, %arg2: memref<64x576xbf16, #tpu.memory_space<vmem>>, %arg3: memref<576x128xbf16, #tpu.memory_space<vmem>>, %arg4: memref<64x128xbf16, #tpu.memory_space<vmem>>, %arg5: memref<64x128xbf16, #tpu.memory_space<vmem>>) attributes {dimension_semantics = [#tpu.dimension_semantics<parallel>, #tpu.dimension_semantics<parallel>], iteration_bounds = array<i64: 2, 1>, scalar_prefetch = 0 : i64, scratch_operands = 0 : i64, tpu.core_type = #tpu.core_type<tc>, window_params = [{transform_indices = @transform_0, window_bounds = array<i64: 64, 576>}, {transform_indices = @transform_1, window_bounds = array<i64: 576, 128>}, {transform_indices = @transform_2, window_bounds = array<i64: 64, 128>}, {transform_indices = @transform_3, window_bounds = array<i64: 64, 128>}]} {
    %c0 = arith.constant 0 : index
    %c0_0 = arith.constant 0 : index
    %0 = vector.load %arg2[%c0, %c0_0] : memref<64x576xbf16, #tpu.memory_space<vmem>>, vector<64x576xbf16>
    %c0_1 = arith.constant 0 : index
    %c0_2 = arith.constant 0 : index
    %1 = vector.load %arg3[%c0_1, %c0_2] : memref<576x128xbf16, #tpu.memory_space<vmem>>, vector<576x128xbf16>
    %cst = arith.constant dense<0.000000e+00> : vector<64x128xf32>
    %2 = tpu.matmul %0, %1, %cst {dimension_numbers = #tpu.dot_dimension_numbers<[1], [0], [0], [1], [0, 0, 1, 1], [], []>} : vector<64x576xbf16>, vector<576x128xbf16>, vector<64x128xf32> -> vector<64x128xf32>
    %cst_3 = arith.constant 2.000000e-01 : f32
    %3 = vector.broadcast %cst_3 : f32 to vector<64x128xf32>
    %4 = arith.mulf %3, %2 : vector<64x128xf32>
    %5 = arith.maximumf %2, %4 : vector<64x128xf32>
    %c0_4 = arith.constant 0 : index
    %c0_5 = arith.constant 0 : index
    %6 = vector.load %arg4[%c0_4, %c0_5] : memref<64x128xbf16, #tpu.memory_space<vmem>>, vector<64x128xbf16>
    %7 = arith.extf %6 : vector<64x128xbf16> to vector<64x128xf32>
    %8 = arith.addf %5, %7 : vector<64x128xf32>
    %9 = arith.truncf %8 : vector<64x128xf32> to vector<64x128xbf16>
    %c0_6 = arith.constant 0 : index
    %c0_7 = arith.constant 0 : index
    %10 = vector.load %arg5[%c0_6, %c0_7] : memref<64x128xbf16, #tpu.memory_space<vmem>>, vector<64x128xbf16>
    tpu.vector_store %arg5[%c0_6, %c0_7], %9 {strides = array<i32>} : memref<64x128xbf16, #tpu.memory_space<vmem>>, vector<64x128xbf16>,
    return
  }
  func.func @transform_0(%arg0: i32, %arg1: i32) -> (i32, i32) {
    %c0_i32 = arith.constant 0 : i32
    %c0_i32_0 = arith.constant 0 : i32
    return %arg0, %c0_i32 : i32, i32
  }
  func.func @transform_1(%arg0: i32, %arg1: i32) -> (i32, i32) {
    %c0_i32 = arith.constant 0 : i32
    %c0_i32_0 = arith.constant 0 : i32
    return %c0_i32, %arg1 : i32, i32
  }
  func.func @transform_2(%arg0: i32, %arg1: i32) -> (i32, i32) {
    %c0_i32 = arith.constant 0 : i32
    return %arg0, %arg1 : i32, i32
  }
  func.func @transform_3(%arg0: i32, %arg1: i32) -> (i32, i32) {
    %c0_i32 = arith.constant 0 : i32
    return %arg0, %arg1 : i32, i32
  }
}

module attributes {stable_mosaic.version = 11 : i64} {
  func.func @_conv_gemm_kernel(%arg0: i32, %arg1: i32, %arg2: memref<256x288xbf16, #tpu.memory_space<vmem>>, %arg3: memref<288x128xbf16, #tpu.memory_space<vmem>>, %arg4: memref<256x128xbf16, #tpu.memory_space<vmem>>, %arg5: memref<256x128xbf16, #tpu.memory_space<vmem>>) attributes {dimension_semantics = [#tpu.dimension_semantics<parallel>, #tpu.dimension_semantics<parallel>], iteration_bounds = array<i64: 2, 1>, scalar_prefetch = 0 : i64, scratch_operands = 0 : i64, tpu.core_type = #tpu.core_type<tc>, window_params = [{transform_indices = @transform_0, window_bounds = array<i64: 256, 288>}, {transform_indices = @transform_1, window_bounds = array<i64: 288, 128>}, {transform_indices = @transform_2, window_bounds = array<i64: 256, 128>}, {transform_indices = @transform_3, window_bounds = array<i64: 256, 128>}]} {
    %c0 = arith.constant 0 : index
    %c0_0 = arith.constant 0 : index
    %0 = vector.load %arg2[%c0, %c0_0] : memref<256x288xbf16, #tpu.memory_space<vmem>>, vector<256x288xbf16>
    %c0_1 = arith.constant 0 : index
    %c0_2 = arith.constant 0 : index
    %1 = vector.load %arg3[%c0_1, %c0_2] : memref<288x128xbf16, #tpu.memory_space<vmem>>, vector<288x128xbf16>
    %cst = arith.constant dense<0.000000e+00> : vector<256x128xf32>
    %2 = tpu.matmul %0, %1, %cst {dimension_numbers = #tpu.dot_dimension_numbers<[1], [0], [0], [1], [0, 0, 1, 1], [], []>} : vector<256x288xbf16>, vector<288x128xbf16>, vector<256x128xf32> -> vector<256x128xf32>
    %cst_3 = arith.constant 2.000000e-01 : f32
    %3 = vector.broadcast %cst_3 : f32 to vector<256x128xf32>
    %4 = arith.mulf %3, %2 : vector<256x128xf32>
    %5 = arith.maximumf %2, %4 : vector<256x128xf32>
    %c0_4 = arith.constant 0 : index
    %c0_5 = arith.constant 0 : index
    %6 = vector.load %arg4[%c0_4, %c0_5] : memref<256x128xbf16, #tpu.memory_space<vmem>>, vector<256x128xbf16>
    %7 = arith.extf %6 : vector<256x128xbf16> to vector<256x128xf32>
    %8 = arith.addf %5, %7 : vector<256x128xf32>
    %9 = arith.truncf %8 : vector<256x128xf32> to vector<256x128xbf16>
    %c0_6 = arith.constant 0 : index
    %c0_7 = arith.constant 0 : index
    %10 = vector.load %arg5[%c0_6, %c0_7] : memref<256x128xbf16, #tpu.memory_space<vmem>>, vector<256x128xbf16>
    tpu.vector_store %arg5[%c0_6, %c0_7], %9 {strides = array<i32>} : memref<256x128xbf16, #tpu.memory_space<vmem>>, vector<256x128xbf16>,
    return
  }
  func.func @transform_0(%arg0: i32, %arg1: i32) -> (i32, i32) {
    %c0_i32 = arith.constant 0 : i32
    %c0_i32_0 = arith.constant 0 : i32
    return %arg0, %c0_i32 : i32, i32
  }
  func.func @transform_1(%arg0: i32, %arg1: i32) -> (i32, i32) {
    %c0_i32 = arith.constant 0 : i32
    %c0_i32_0 = arith.constant 0 : i32
    return %c0_i32, %arg1 : i32, i32
  }
  func.func @transform_2(%arg0: i32, %arg1: i32) -> (i32, i32) {
    %c0_i32 = arith.constant 0 : i32
    return %arg0, %arg1 : i32, i32
  }
  func.func @transform_3(%arg0: i32, %arg1: i32) -> (i32, i32) {
    %c0_i32 = arith.constant 0 : i32
    return %arg0, %arg1 : i32, i32
  }
}

module attributes {stable_mosaic.version = 11 : i64} {
  func.func @_conv_gemm_kernel(%arg0: i32, %arg1: i32, %arg2: memref<256x144xbf16, #tpu.memory_space<vmem>>, %arg3: memref<144x128xbf16, #tpu.memory_space<vmem>>, %arg4: memref<256x128xbf16, #tpu.memory_space<vmem>>) attributes {dimension_semantics = [#tpu.dimension_semantics<parallel>, #tpu.dimension_semantics<parallel>], iteration_bounds = array<i64: 2, 1>, scalar_prefetch = 0 : i64, scratch_operands = 0 : i64, tpu.core_type = #tpu.core_type<tc>, window_params = [{transform_indices = @transform_0, window_bounds = array<i64: 256, 144>}, {transform_indices = @transform_1, window_bounds = array<i64: 144, 128>}, {transform_indices = @transform_2, window_bounds = array<i64: 256, 128>}]} {
    %c0 = arith.constant 0 : index
    %c0_0 = arith.constant 0 : index
    %0 = vector.load %arg2[%c0, %c0_0] : memref<256x144xbf16, #tpu.memory_space<vmem>>, vector<256x144xbf16>
    %c0_1 = arith.constant 0 : index
    %c0_2 = arith.constant 0 : index
    %1 = vector.load %arg3[%c0_1, %c0_2] : memref<144x128xbf16, #tpu.memory_space<vmem>>, vector<144x128xbf16>
    %cst = arith.constant dense<0.000000e+00> : vector<256x128xf32>
    %2 = tpu.matmul %0, %1, %cst {dimension_numbers = #tpu.dot_dimension_numbers<[1], [0], [0], [1], [0, 0, 1, 1], [], []>} : vector<256x144xbf16>, vector<144x128xbf16>, vector<256x128xf32> -> vector<256x128xf32>
    %cst_3 = arith.constant 2.000000e-01 : f32
    %3 = vector.broadcast %cst_3 : f32 to vector<256x128xf32>
    %4 = arith.mulf %3, %2 : vector<256x128xf32>
    %5 = arith.maximumf %2, %4 : vector<256x128xf32>
    %6 = arith.truncf %5 : vector<256x128xf32> to vector<256x128xbf16>
    %c0_4 = arith.constant 0 : index
    %c0_5 = arith.constant 0 : index
    %7 = vector.load %arg4[%c0_4, %c0_5] : memref<256x128xbf16, #tpu.memory_space<vmem>>, vector<256x128xbf16>
    tpu.vector_store %arg4[%c0_4, %c0_5], %6 {strides = array<i32>} : memref<256x128xbf16, #tpu.memory_space<vmem>>, vector<256x128xbf16>,
    return
  }
  func.func @transform_0(%arg0: i32, %arg1: i32) -> (i32, i32) {
    %c0_i32 = arith.constant 0 : i32
    %c0_i32_0 = arith.constant 0 : i32
    return %arg0, %c0_i32 : i32, i32
  }
  func.func @transform_1(%arg0: i32, %arg1: i32) -> (i32, i32) {
    %c0_i32 = arith.constant 0 : i32
    %c0_i32_0 = arith.constant 0 : i32
    return %c0_i32, %arg1 : i32, i32
  }
  func.func @transform_2(%arg0: i32, %arg1: i32) -> (i32, i32) {
    %c0_i32 = arith.constant 0 : i32
    return %arg0, %arg1 : i32, i32
  }
}

module attributes {stable_mosaic.version = 11 : i64} {
  func.func @_conv_gemm_kernel(%arg0: i32, %arg1: i32, %arg2: memref<256x144xbf16, #tpu.memory_space<vmem>>, %arg3: memref<144x128xbf16, #tpu.memory_space<vmem>>, %arg4: memref<1x128xf32, #tpu.memory_space<vmem>>, %arg5: memref<256x128xbf16, #tpu.memory_space<vmem>>) attributes {dimension_semantics = [#tpu.dimension_semantics<parallel>, #tpu.dimension_semantics<parallel>], iteration_bounds = array<i64: 2, 1>, scalar_prefetch = 0 : i64, scratch_operands = 0 : i64, tpu.core_type = #tpu.core_type<tc>, window_params = [{transform_indices = @transform_0, window_bounds = array<i64: 256, 144>}, {transform_indices = @transform_1, window_bounds = array<i64: 144, 128>}, {transform_indices = @transform_2, window_bounds = array<i64: 1, 128>}, {transform_indices = @transform_3, window_bounds = array<i64: 256, 128>}]} {
    %c0 = arith.constant 0 : index
    %c0_0 = arith.constant 0 : index
    %0 = vector.load %arg2[%c0, %c0_0] : memref<256x144xbf16, #tpu.memory_space<vmem>>, vector<256x144xbf16>
    %c0_1 = arith.constant 0 : index
    %c0_2 = arith.constant 0 : index
    %1 = vector.load %arg3[%c0_1, %c0_2] : memref<144x128xbf16, #tpu.memory_space<vmem>>, vector<144x128xbf16>
    %cst = arith.constant dense<0.000000e+00> : vector<256x128xf32>
    %2 = tpu.matmul %0, %1, %cst {dimension_numbers = #tpu.dot_dimension_numbers<[1], [0], [0], [1], [0, 0, 1, 1], [], []>} : vector<256x144xbf16>, vector<144x128xbf16>, vector<256x128xf32> -> vector<256x128xf32>
    %c0_3 = arith.constant 0 : index
    %c0_4 = arith.constant 0 : index
    %3 = vector.load %arg4[%c0_3, %c0_4] : memref<1x128xf32, #tpu.memory_space<vmem>>, vector<1x128xf32>
    %4 = vector.broadcast %3 : vector<1x128xf32> to vector<256x128xf32>
    %5 = arith.addf %2, %4 : vector<256x128xf32>
    %6 = arith.truncf %5 : vector<256x128xf32> to vector<256x128xbf16>
    %c0_5 = arith.constant 0 : index
    %c0_6 = arith.constant 0 : index
    %7 = vector.load %arg5[%c0_5, %c0_6] : memref<256x128xbf16, #tpu.memory_space<vmem>>, vector<256x128xbf16>
    tpu.vector_store %arg5[%c0_5, %c0_6], %6 {strides = array<i32>} : memref<256x128xbf16, #tpu.memory_space<vmem>>, vector<256x128xbf16>,
    return
  }
  func.func @transform_0(%arg0: i32, %arg1: i32) -> (i32, i32) {
    %c0_i32 = arith.constant 0 : i32
    %c0_i32_0 = arith.constant 0 : i32
    return %arg0, %c0_i32 : i32, i32
  }
  func.func @transform_1(%arg0: i32, %arg1: i32) -> (i32, i32) {
    %c0_i32 = arith.constant 0 : i32
    %c0_i32_0 = arith.constant 0 : i32
    return %c0_i32, %arg1 : i32, i32
  }
  func.func @transform_2(%arg0: i32, %arg1: i32) -> (i32, i32) {
    %c0_i32 = arith.constant 0 : i32
    %c0_i32_0 = arith.constant 0 : i32
    return %c0_i32, %arg1 : i32, i32
  }
  func.func @transform_3(%arg0: i32, %arg1: i32) -> (i32, i32) {
    %c0_i32 = arith.constant 0 : i32
    return %arg0, %arg1 : i32, i32
  }
}

</mosaic_0001>

<llo_original>
// kernel: discriminator_unet_forward.10
$region0: #{discriminator_unet_forward.10}
  #allocation0 [shape = 'u32[]', space=smem, size = 0x4, offset = 0x4, fixed_abs, tag = 'smem constant byte address 0x4 - core index']
  #allocation1 [shape = 'u32[72,128]{1,0:T(1,128)}', space=vmem, size = 0x9000, scoped, tag = 'internal scratch']
  %s0 = inlined_call_operand.vmem [shape: bf16[512,32], index: 0, kind: input, shape index: {}]
  %s1 = inlined_call_operand.vmem [shape: bf16[32,128], index: 1, kind: input, shape index: {}]
  %s2 = inlined_call_operand.vmem [shape: f32[1,128], index: 2, kind: input, shape index: {}]
  %s3 = inlined_call_operand.vmem [shape: bf16[512,128], index: 3, kind: output, shape index: {}]
  %s4 = sld [smem:[#allocation0]]
  $region45: #{discriminator_unet_forward.10} parent=0
    _
  %s6 = ssub.s32 1, %s4
  %s7 = scalar_select 0, %s6, %s4
  loop: start=0, step=1, limit=4
  $region2: #{discriminator_unet_forward.10} parent=0 // loop_pre_header
    _
  $region3: #{discriminator_unet_forward.10} parent=0 // loop_header
    %s9 = sphi 0, %s13
    %p10 = scmp.ge.s32.totalorder %s9, 4
    %s16 = sphi 0, %s28
    %s17 = sphi 0, %s24
    %s18 = sphi 0, %s16
    %s19 = sphi 0, %s17
    %s20 = sphi 0, %s18
    %s21 = sphi 0, %s19
    %s31 = sphi 0, %s33
    %s34 = sphi 0, %s31
    %s35 = sphi 0, %s34
    %s51 = sphi 0, %s35
    %s57 = sphi 0, %s59
    %s60 = sphi 0, %s57
    %s61 = sphi 0, %s60
    %s77 = sphi 0, %s61
    %s83 = sphi 0, %s85
    %s86 = sphi 0, %s83
    %s87 = sphi 0, %s86
    %s103 = sphi 0, %s87
    %s111 = sphi 0, %s113
    %s114 = sphi 0, %s111
    %s115 = sphi 0, %s114
    %s131 = sphi 0, %s115
  $region4: #{discriminator_unet_forward.10} parent=0 // loop_header_branch
    %12 = sbr.rel (%p10) target = $region8
  $region5: #{discriminator_unet_forward.10} parent=0 // loop_body
    %s14 = ssub.s32 %s9, 1
    %s15 = ssub.s32 %s9, 2
    %s22 = sadd.s32 1, %s17
    %p23 = scmp.ge.s32.totalorder %s22, 1
    %s24 = scalar_select %p23, 0, %s22
    %s25 = sadd.s32 1, %s16
    %s26 = scalar_select %p23, %s25, %s16
    %p27 = scmp.ge.s32.totalorder %s26, 2
    %s28 = scalar_select %p27, 0, %s26
    %s29 = ssub.s32 %s16, %s28
    %p30 = scmp.eq.s32.totalorder %s29, 0
    %s32 = sadd.s32 %s31, 1
    %s33 = scalar_select %p30, %s31, %s32
    %p36 = pneg %p30
    %p37 = scmp.eq.s32.totalorder %s9, 1
    %p38 = por %p36, %p37
    %p39 = scmp.ne.s32.totalorder %s31, %s34
    %p40 = scmp.eq.s32.totalorder %s9, 0
    %p41 = por %p39, %p40
    %p42 = scmp.ne.s32.totalorder %s31, %s34
    %p43 = scmp.eq.s32.totalorder %s14, 1
    %p44 = por %p42, %p43
    %p45 = scmp.ne.s32.totalorder %s34, %s35
    %p46 = scmp.eq.s32.totalorder %s14, 0
    %p47 = por %p45, %p46
    %p48 = scmp.ne.s32.totalorder %s34, %s35
    %p49 = scmp.eq.s32.totalorder %s15, 1
    %p50 = por %p48, %p49
    %p52 = scmp.ne.s32.totalorder %s35, %s51
    %p53 = scmp.eq.s32.totalorder %s15, 0
    %p54 = por %p52, %p53
    %s55 = ssub.s32 %s17, %s24
    %p56 = scmp.eq.s32.totalorder %s55, 0
    %s58 = sadd.s32 %s57, 1
    %s59 = scalar_select %p56, %s57, %s58
    %p62 = pneg %p56
    %p63 = scmp.eq.s32.totalorder %s9, 1
    %p64 = por %p62, %p63
    %p65 = scmp.ne.s32.totalorder %s57, %s60
    %p66 = scmp.eq.s32.totalorder %s9, 0
    %p67 = por %p65, %p66
    %p68 = scmp.ne.s32.totalorder %s57, %s60
    %p69 = scmp.eq.s32.totalorder %s14, 1
    %p70 = por %p68, %p69
    %p71 = scmp.ne.s32.totalorder %s60, %s61
    %p72 = scmp.eq.s32.totalorder %s14, 0
    %p73 = por %p71, %p72
    %p74 = scmp.ne.s32.totalorder %s60, %s61
    %p75 = scmp.eq.s32.totalorder %s15, 1
    %p76 = por %p74, %p75
    %p78 = scmp.ne.s32.totalorder %s61, %s77
    %p79 = scmp.eq.s32.totalorder %s15, 0
    %p80 = por %p78, %p79
    %s81 = ssub.s32 %s17, %s24
    %p82 = scmp.eq.s32.totalorder %s81, 0
    %s84 = sadd.s32 %s83, 1
    %s85 = scalar_select %p82, %s83, %s84
    %p88 = pneg %p82
    %p89 = scmp.eq.s32.totalorder %s9, 1
    %p90 = por %p88, %p89
    %p91 = scmp.ne.s32.totalorder %s83, %s86
    %p92 = scmp.eq.s32.totalorder %s9, 0
    %p93 = por %p91, %p92
    %p94 = scmp.ne.s32.totalorder %s83, %s86
    %p95 = scmp.eq.s32.totalorder %s14, 1
    %p96 = por %p94, %p95
    %p97 = scmp.ne.s32.totalorder %s86, %s87
    %p98 = scmp.eq.s32.totalorder %s14, 0
    %p99 = por %p97, %p98
    %p100 = scmp.ne.s32.totalorder %s86, %s87
    %p101 = scmp.eq.s32.totalorder %s15, 1
    %p102 = por %p100, %p101
    %p104 = scmp.ne.s32.totalorder %s87, %s103
    %p105 = scmp.eq.s32.totalorder %s15, 0
    %p106 = por %p104, %p105
    %s107 = ssub.s32 %s16, %s28
    %s108 = ssub.s32 %s17, %s24
    %s109 = sor.u32 %s107, %s108
    %p110 = scmp.eq.s32.totalorder %s109, 0
    %s112 = sadd.s32 %s111, 1
    %s113 = scalar_select %p110, %s111, %s112
    %p116 = pneg %p110
    %p117 = scmp.eq.s32.totalorder %s9, 1
    %p118 = por %p116, %p117
    %p119 = scmp.ne.s32.totalorder %s111, %s114
    %p120 = scmp.eq.s32.totalorder %s9, 0
    %p121 = por %p119, %p120
    %p122 = scmp.ne.s32.totalorder %s111, %s114
    %p123 = scmp.eq.s32.totalorder %s14, 1
    %p124 = por %p122, %p123
    %p125 = scmp.ne.s32.totalorder %s114, %s115
    %p126 = scmp.eq.s32.totalorder %s14, 0
    %p127 = por %p125, %p126
    %p128 = scmp.ne.s32.totalorder %s114, %s115
    %p129 = scmp.eq.s32.totalorder %s15, 1
    %p130 = por %p128, %p129
    %p132 = scmp.ne.s32.totalorder %s115, %s131
    %p133 = scmp.eq.s32.totalorder %s15, 0
    %p134 = por %p132, %p133
    %p135 = scmp.le.s32.totalorder 1, %s9
    %p136 = scmp.lt.s32.totalorder %s9, 3
    %p137 = pnand %p135, %p136
    %p138 = pneg %p137
    // Predicated region
    $region9: #{discriminator_unet_forward.10} parent=5 // pred_check
      _
    $region10: #{discriminator_unet_forward.10} parent=5 // pred_check_branch
      %140 = sbr.rel (%p137) target = $region12
    $region11: #{discriminator_unet_forward.10} parent=5 // pred_region
      %s141 = ssub.s32 %s9, 1
      // Predicated region
      $region13: #{discriminator_unet_forward.10} parent=11 // pred_check
        %p142 = pneg %p73
      $region14: #{discriminator_unet_forward.10} parent=11 // pred_check_branch
        %144 = sbr.rel (%p142) target = $region16
      $region15: #{discriminator_unet_forward.10} parent=11 // pred_region
        %p145 = scmp.lt.s32.totalorder %s19, 0
        %s146 = scalar_select %p145, %s19, 0
        %s147 = smul.addr %s146, 4
        %s148 = scalar_lea.vmem %s1, %s147
      $region16: #{discriminator_unet_forward.10} parent=11 // pred_fallthru
        _
      // Predicated region
      $region17: #{discriminator_unet_forward.10} parent=11 // pred_check
        %p149 = pneg %p99
      $region18: #{discriminator_unet_forward.10} parent=11 // pred_check_branch
        %151 = sbr.rel (%p149) target = $region20
      $region19: #{discriminator_unet_forward.10} parent=11 // pred_region
        %p152 = scmp.lt.s32.totalorder %s19, 0
        %s153 = scalar_select %p152, %s19, 0
        %s154 = scalar_lea.vmem %s2, %s153
      $region20: #{discriminator_unet_forward.10} parent=11 // pred_fallthru
        _
    $region12: #{discriminator_unet_forward.10} parent=5 // pred_fallthru
      _
    %p155 = scmp.lt.s32.totalorder %s9, 2
    // Predicated region
    $region21: #{discriminator_unet_forward.10} parent=5 // pred_check
      %p156 = pneg %p155
    $region22: #{discriminator_unet_forward.10} parent=5 // pred_check_branch
      %158 = sbr.rel (%p156) target = $region24
    $region23: #{discriminator_unet_forward.10} parent=5 // pred_region
      // Predicated region
      $region25: #{discriminator_unet_forward.10} parent=23 // pred_check
        %p159 = pneg %p41
      $region26: #{discriminator_unet_forward.10} parent=23 // pred_check_branch
        %161 = sbr.rel (%p159) target = $region28
      $region27: #{discriminator_unet_forward.10} parent=23 // pred_region
        %s162 = smul.u32 32, %s16
        %p163 = scmp.lt.s32.totalorder %s162, 63
        %s164 = scalar_select %p163, %s162, 63
        %s165 = smul.addr %s164, 4
        %s166 = scalar_lea.vmem %s0, %s165
        %s167 = smul.u32 32, %s16
      $region28: #{discriminator_unet_forward.10} parent=23 // pred_fallthru
        _
    $region24: #{discriminator_unet_forward.10} parent=5 // pred_fallthru
      _
    %p168 = scmp.le.s32.totalorder 1, %s9
    %p169 = scmp.lt.s32.totalorder %s9, 3
    %p170 = pnand %p168, %p169
    %p171 = pneg %p170
    // Predicated region
    $region29: #{discriminator_unet_forward.10} parent=5 // pred_check
      _
    $region30: #{discriminator_unet_forward.10} parent=5 // pred_check_branch
      %173 = sbr.rel (%p170) target = $region32
    $region31: #{discriminator_unet_forward.10} parent=5 // pred_region
      %s174 = ssub.s32 %s9, 1
      %s175 = smul.u32 32, %s18
      %p176 = scmp.lt.s32.totalorder %s175, 63
      %s177 = scalar_select %p176, %s175, 63
      %s178 = smul.addr %s177, 4
      %s179 = scalar_lea.vmem %s0, %s178
      %p180 = pneg %p47
      %p181 = pneg %p44
      %p182 = scmp.lt.s32.totalorder %s19, 0
      %s183 = scalar_select %p182, %s19, 0
      %s184 = smul.addr %s183, 4
      %s185 = scalar_lea.vmem %s1, %s184
      %p186 = pneg %p73
      %p187 = pneg %p70
      %p188 = scmp.lt.s32.totalorder %s19, 0
      %s189 = scalar_select %p188, %s19, 0
      %s190 = scalar_lea.vmem %s2, %s189
      %p191 = pneg %p99
      %p192 = pneg %p96
      %p193 = pneg %p127
      %p194 = pneg %p124
      %s195 = smul.u32 32, %s18
      %p196 = scmp.lt.s32.totalorder %s195, 63
      %s197 = scalar_select %p196, %s195, 63
      %p198 = scmp.lt.s32.totalorder %s19, 0
      %s199 = scalar_select %p198, %s19, 0
      %s200 = sadd.s32 %s199, %s197
      %s201 = smul.addr %s200, 4
      %s202 = scalar_lea.vmem %s3, %s201
      %s203 = smul.u32 32, %s18
      %p204 = scmp.lt.s32.totalorder %s203, 63
      %s205 = scalar_select %p204, %s203, 63
      %s206 = smul.addr %s205, 4
      %s207 = scalar_lea.vmem %s0, %s206
      %s208 = smul.u32 32, %s18
      %p209 = scmp.lt.s32.totalorder %s19, 0
      %s210 = scalar_select %p209, %s19, 0
      %s211 = smul.addr %s210, 4
      %s212 = scalar_lea.vmem %s1, %s211
      %p213 = scmp.lt.s32.totalorder %s19, 0
      %s214 = scalar_select %p213, %s19, 0
      %s215 = scalar_lea.vmem %s2, %s214
      %s216 = smul.u32 32, %s18
      %p217 = scmp.lt.s32.totalorder %s216, 63
      %s218 = scalar_select %p217, %s216, 63
      %p219 = scmp.lt.s32.totalorder %s19, 0
      %s220 = scalar_select %p219, %s19, 0
      %s221 = sadd.s32 %s220, %s218
      %s222 = smul.addr %s221, 4
      %s223 = scalar_lea.vmem %s3, %s222
      %s224 = smul.u32 32, %s18
      %v226 = vld [vmem:[%s207] sm:$0xf]
      %v227 = vld [vmem:[%s207 + $0x4] sm:$0xf]
      %v228 = vld [vmem:[%s207 + $0x8] sm:$0xf]
      %v229 = vld [vmem:[%s207 + $0xc] sm:$0xf]
      %v230 = vld [vmem:[%s207 + $0x10] sm:$0xf]
      %v231 = vld [vmem:[%s207 + $0x14] sm:$0xf]
      %v232 = vld [vmem:[%s207 + $0x18] sm:$0xf]
      %v233 = vld [vmem:[%s207 + $0x1c] sm:$0xf]
      %v234 = vld [vmem:[%s207 + $0x20] sm:$0xf]
      %v235 = vld [vmem:[%s207 + $0x24] sm:$0xf]
      %v236 = vld [vmem:[%s207 + $0x28] sm:$0xf]
      %v237 = vld [vmem:[%s207 + $0x2c] sm:$0xf]
      %v238 = vld [vmem:[%s207 + $0x30] sm:$0xf]
      %v239 = vld [vmem:[%s207 + $0x34] sm:$0xf]
      %v240 = vld [vmem:[%s207 + $0x38] sm:$0xf]
      %v241 = vld [vmem:[%s207 + $0x3c] sm:$0xf]
      %v242 = vld [vmem:[%s207 + $0x40] sm:$0xf]
      %v243 = vld [vmem:[%s207 + $0x44] sm:$0xf]
      %v244 = vld [vmem:[%s207 + $0x48] sm:$0xf]
      %v245 = vld [vmem:[%s207 + $0x4c] sm:$0xf]
      %v246 = vld [vmem:[%s207 + $0x50] sm:$0xf]
      %v247 = vld [vmem:[%s207 + $0x54] sm:$0xf]
      %v248 = vld [vmem:[%s207 + $0x58] sm:$0xf]
      %v249 = vld [vmem:[%s207 + $0x5c] sm:$0xf]
      %v250 = vld [vmem:[%s207 + $0x60] sm:$0xf]
      %v251 = vld [vmem:[%s207 + $0x64] sm:$0xf]
      %v252 = vld [vmem:[%s207 + $0x68] sm:$0xf]
      %v253 = vld [vmem:[%s207 + $0x6c] sm:$0xf]
      %v254 = vld [vmem:[%s207 + $0x70] sm:$0xf]
      %v255 = vld [vmem:[%s207 + $0x74] sm:$0xf]
      %v256 = vld [vmem:[%s207 + $0x78] sm:$0xf]
      %v257 = vld [vmem:[%s207 + $0x7c] sm:$0xf]
      %v258 = vld [vmem:[%s212] sm:$0xf]
      %v259 = vld [vmem:[%s212 + $0x4] sm:$0xf]
      %v260 = vld [vmem:[%s212 + $0x8] sm:$0xf]
      %v261 = vld [vmem:[%s212 + $0xc] sm:$0xf]
      %v262 = vld [vmem:[%s215] sm:$0x1]
      %v264 = vperm.slane %v262, 0
      %v298 = vunpack.c.l.b16 %v226
      %v299 = vunpack.c.l.b16 %v227
      %v300 = vunpack.c.l.b16 %v228
      %v301 = vunpack.c.l.b16 %v229
      %v302 = vunpack.c.l.b16 %v230
      %v303 = vunpack.c.l.b16 %v231
      %v304 = vunpack.c.l.b16 %v232
      %v305 = vunpack.c.l.b16 %v233
      %v306 = vunpack.c.l.b16 %v234
      %v307 = vunpack.c.l.b16 %v235
      %v308 = vunpack.c.l.b16 %v236
      %v309 = vunpack.c.l.b16 %v237
      %v310 = vunpack.c.l.b16 %v238
      %v311 = vunpack.c.l.b16 %v239
      %v312 = vunpack.c.l.b16 %v240
      %v313 = vunpack.c.l.b16 %v241
      %v314 = vunpack.c.l.b16 %v242
      %v315 = vunpack.c.l.b16 %v243
      %v316 = vunpack.c.l.b16 %v244
      %v317 = vunpack.c.l.b16 %v245
      %v318 = vunpack.c.l.b16 %v246
      %v319 = vunpack.c.l.b16 %v247
      %v320 = vunpack.c.l.b16 %v248
      %v321 = vunpack.c.l.b16 %v249
      %v322 = vunpack.c.l.b16 %v250
      %v323 = vunpack.c.l.b16 %v251
      %v324 = vunpack.c.l.b16 %v252
      %v325 = vunpack.c.l.b16 %v253
      %v326 = vunpack.c.l.b16 %v254
      %v327 = vunpack.c.l.b16 %v255
      %v328 = vunpack.c.l.b16 %v256
      %v329 = vunpack.c.l.b16 %v257
      %v330 = vpack.c.b16 %v299, %v298
      %v331 = vpack.c.b16 %v301, %v300
      %v332 = vpack.c.b16 %v303, %v302
      %v333 = vpack.c.b16 %v305, %v304
      %v334 = vpack.c.b16 %v307, %v306
      %v335 = vpack.c.b16 %v309, %v308
      %v336 = vpack.c.b16 %v311, %v310
      %v337 = vpack.c.b16 %v313, %v312
      %v338 = vpack.c.b16 %v315, %v314
      %v339 = vpack.c.b16 %v317, %v316
      %v340 = vpack.c.b16 %v319, %v318
      %v341 = vpack.c.b16 %v321, %v320
      %v342 = vpack.c.b16 %v323, %v322
      %v343 = vpack.c.b16 %v325, %v324
      %v344 = vpack.c.b16 %v327, %v326
      %v345 = vpack.c.b16 %v329, %v328
      %v350 = vunpack.c.l.b16 %v258
      %v351 = vunpack.c.l.b16 %v259
      %v352 = vunpack.c.l.b16 %v260
      %v353 = vunpack.c.l.b16 %v261
      %v354 = vpack.c.b16 %v351, %v350
      %v355 = vpack.c.b16 %v353, %v352
      %vm358 = vcmask 261120
      %v360 = vsel %vm358, %v330, 0
      %v363 = vsel %vm358, %v331, 0
      %v366 = vsel %vm358, %v332, 0
      %v369 = vsel %vm358, %v333, 0
      %v372 = vsel %vm358, %v334, 0
      %v375 = vsel %vm358, %v335, 0
      %v378 = vsel %vm358, %v336, 0
      %v381 = vsel %vm358, %v337, 0
      %v384 = vsel %vm358, %v338, 0
      %v387 = vsel %vm358, %v339, 0
      %v390 = vsel %vm358, %v340, 0
      %v393 = vsel %vm358, %v341, 0
      %v396 = vsel %vm358, %v342, 0
      %v399 = vsel %vm358, %v343, 0
      %v402 = vsel %vm358, %v344, 0
      %v405 = vsel %vm358, %v345, 0
      %407 = vmatpush.bf16.msra.mxu0 0
      %408 = vmatpush.bf16.msra.mxu0 0
      %409 = vmatpush.bf16.msra.mxu0 0
      %410 = vmatpush.bf16.msra.mxu0 0
      %411 = vmatpush.bf16.msra.mxu0 0
      %412 = vmatpush.bf16.msra.mxu0 0
      %413 = vmatpush.bf16.msra.mxu0 %v355
      %414 = vmatpush.bf16.msra.mxu0 %v354
      %415 = vmatmul.bf16.gmra.mxu0 %v360
      %v416 = vpop.f32.mrf.mxu0
      %v417 = vadd.f32 %v264, %v416
      %v418 = vpop.f32.mrf.mxu0
      %v419 = vadd.f32 %v264, %v418
      %420 = vmatmul.bf16.gmra.mxu0 %v363
      %v421 = vpop.f32.mrf.mxu0
      %v422 = vadd.f32 %v264, %v421
      %v423 = vpop.f32.mrf.mxu0
      %v424 = vadd.f32 %v264, %v423
      %425 = vmatmul.bf16.gmra.mxu0 %v366
      %v426 = vpop.f32.mrf.mxu0
      %v427 = vadd.f32 %v264, %v426
      %v428 = vpop.f32.mrf.mxu0
      %v429 = vadd.f32 %v264, %v428
      %430 = vmatmul.bf16.gmra.mxu0 %v369
      %v431 = vpop.f32.mrf.mxu0
      %v432 = vadd.f32 %v264, %v431
      %v433 = vpop.f32.mrf.mxu0
      %v434 = vadd.f32 %v264, %v433
      %435 = vmatmul.bf16.gmra.mxu0 %v372
      %v436 = vpop.f32.mrf.mxu0
      %v437 = vadd.f32 %v264, %v436
      %v438 = vpop.f32.mrf.mxu0
      %v439 = vadd.f32 %v264, %v438
      %440 = vmatmul.bf16.gmra.mxu0 %v375
      %v441 = vpop.f32.mrf.mxu0
      %v442 = vadd.f32 %v264, %v441
      %v443 = vpop.f32.mrf.mxu0
      %v444 = vadd.f32 %v264, %v443
      %445 = vmatmul.bf16.gmra.mxu0 %v378
      %v446 = vpop.f32.mrf.mxu0
      %v447 = vadd.f32 %v264, %v446
      %v448 = vpop.f32.mrf.mxu0
      %v449 = vadd.f32 %v264, %v448
      %450 = vmatmul.bf16.gmra.mxu0 %v381
      %v451 = vpop.f32.mrf.mxu0
      %v452 = vadd.f32 %v264, %v451
      %v453 = vpop.f32.mrf.mxu0
      %v454 = vadd.f32 %v264, %v453
      %455 = vmatmul.bf16.gmra.mxu0 %v384
      %v456 = vpop.f32.mrf.mxu0
      %v457 = vadd.f32 %v264, %v456
      %v458 = vpop.f32.mrf.mxu0
      %v459 = vadd.f32 %v264, %v458
      %460 = vmatmul.bf16.gmra.mxu0 %v387
      %v461 = vpop.f32.mrf.mxu0
      %v462 = vadd.f32 %v264, %v461
      %v463 = vpop.f32.mrf.mxu0
      %v464 = vadd.f32 %v264, %v463
      %465 = vmatmul.bf16.gmra.mxu0 %v390
      %v466 = vpop.f32.mrf.mxu0
      %v467 = vadd.f32 %v264, %v466
      %v468 = vpop.f32.mrf.mxu0
      %v469 = vadd.f32 %v264, %v468
      %470 = vmatmul.bf16.gmra.mxu0 %v393
      %v471 = vpop.f32.mrf.mxu0
      %v472 = vadd.f32 %v264, %v471
      %v473 = vpop.f32.mrf.mxu0
      %v474 = vadd.f32 %v264, %v473
      %475 = vmatmul.bf16.gmra.mxu0 %v396
      %v476 = vpop.f32.mrf.mxu0
      %v477 = vadd.f32 %v264, %v476
      %v478 = vpop.f32.mrf.mxu0
      %v479 = vadd.f32 %v264, %v478
      %480 = vmatmul.bf16.gmra.mxu0 %v399
      %v481 = vpop.f32.mrf.mxu0
      %v482 = vadd.f32 %v264, %v481
      %v483 = vpop.f32.mrf.mxu0
      %v484 = vadd.f32 %v264, %v483
      %485 = vmatmul.bf16.gmra.mxu0 %v402
      %v486 = vpop.f32.mrf.mxu0
      %v487 = vadd.f32 %v264, %v486
      %v488 = vpop.f32.mrf.mxu0
      %v489 = vadd.f32 %v264, %v488
      %490 = vmatmul.bf16.gmra.mxu0 %v405
      %v491 = vpop.f32.mrf.mxu0
      %v492 = vadd.f32 %v264, %v491
      %v493 = vpop.f32.mrf.mxu0
      %v494 = vadd.f32 %v264, %v493
      %495 = vdwg.mxu0
      %v496 = vmul.f32 %v417, 0.2
      %v497 = vmul.f32 %v419, 0.2
      %v498 = vmul.f32 %v422, 0.2
      %v499 = vmul.f32 %v424, 0.2
      %v500 = vmul.f32 %v427, 0.2
      %v501 = vmul.f32 %v429, 0.2
      %v502 = vmul.f32 %v432, 0.2
      %v503 = vmul.f32 %v434, 0.2
      %v504 = vmul.f32 %v437, 0.2
      %v505 = vmul.f32 %v439, 0.2
      %v506 = vmul.f32 %v442, 0.2
      %v507 = vmul.f32 %v444, 0.2
      %v508 = vmul.f32 %v447, 0.2
      %v509 = vmul.f32 %v449, 0.2
      %v510 = vmul.f32 %v452, 0.2
      %v511 = vmul.f32 %v454, 0.2
      %v512 = vmul.f32 %v457, 0.2
      %v513 = vmul.f32 %v459, 0.2
      %v514 = vmul.f32 %v462, 0.2
      %v515 = vmul.f32 %v464, 0.2
      %v516 = vmul.f32 %v467, 0.2
      %v517 = vmul.f32 %v469, 0.2
      %v518 = vmul.f32 %v472, 0.2
      %v519 = vmul.f32 %v474, 0.2
      %v520 = vmul.f32 %v477, 0.2
      %v521 = vmul.f32 %v479, 0.2
      %v522 = vmul.f32 %v482, 0.2
      %v523 = vmul.f32 %v484, 0.2
      %v524 = vmul.f32 %v487, 0.2
      %v525 = vmul.f32 %v489, 0.2
      %v526 = vmul.f32 %v492, 0.2
      %v527 = vmul.f32 %v494, 0.2
      %v528 = vmax.f32 %v417, %v496
      %v529 = vmax.f32 %v419, %v497
      %v530 = vmax.f32 %v422, %v498
      %v531 = vmax.f32 %v424, %v499
      %v532 = vmax.f32 %v427, %v500
      %v533 = vmax.f32 %v429, %v501
      %v534 = vmax.f32 %v432, %v502
      %v535 = vmax.f32 %v434, %v503
      %v536 = vmax.f32 %v437, %v504
      %v537 = vmax.f32 %v439, %v505
      %v538 = vmax.f32 %v442, %v506
      %v539 = vmax.f32 %v444, %v507
      %v540 = vmax.f32 %v447, %v508
      %v541 = vmax.f32 %v449, %v509
      %v542 = vmax.f32 %v452, %v510
      %v543 = vmax.f32 %v454, %v511
      %v544 = vmax.f32 %v457, %v512
      %v545 = vmax.f32 %v459, %v513
      %v546 = vmax.f32 %v462, %v514
      %v547 = vmax.f32 %v464, %v515
      %v548 = vmax.f32 %v467, %v516
      %v549 = vmax.f32 %v469, %v517
      %v550 = vmax.f32 %v472, %v518
      %v551 = vmax.f32 %v474, %v519
      %v552 = vmax.f32 %v477, %v520
      %v553 = vmax.f32 %v479, %v521
      %v554 = vmax.f32 %v482, %v522
      %v555 = vmax.f32 %v484, %v523
      %v556 = vmax.f32 %v487, %v524
      %v557 = vmax.f32 %v489, %v525
      %v558 = vmax.f32 %v492, %v526
      %v559 = vmax.f32 %v494, %v527
      %v560 = vpack.c.bf16 %v528, %v528
      %v561 = vpack.c.bf16 %v529, %v529
      %v562 = vpack.c.bf16 %v530, %v530
      %v563 = vpack.c.bf16 %v531, %v531
      %v564 = vpack.c.bf16 %v532, %v532
      %v565 = vpack.c.bf16 %v533, %v533
      %v566 = vpack.c.bf16 %v534, %v534
      %v567 = vpack.c.bf16 %v535, %v535
      %v568 = vpack.c.bf16 %v536, %v536
      %v569 = vpack.c.bf16 %v537, %v537
      %v570 = vpack.c.bf16 %v538, %v538
      %v571 = vpack.c.bf16 %v539, %v539
      %v572 = vpack.c.bf16 %v540, %v540
      %v573 = vpack.c.bf16 %v541, %v541
      %v574 = vpack.c.bf16 %v542, %v542
      %v575 = vpack.c.bf16 %v543, %v543
      %v576 = vpack.c.bf16 %v544, %v544
      %v577 = vpack.c.bf16 %v545, %v545
      %v578 = vpack.c.bf16 %v546, %v546
      %v579 = vpack.c.bf16 %v547, %v547
      %v580 = vpack.c.bf16 %v548, %v548
      %v581 = vpack.c.bf16 %v549, %v549
      %v582 = vpack.c.bf16 %v550, %v550
      %v583 = vpack.c.bf16 %v551, %v551
      %v584 = vpack.c.bf16 %v552, %v552
      %v585 = vpack.c.bf16 %v553, %v553
      %v586 = vpack.c.bf16 %v554, %v554
      %v587 = vpack.c.bf16 %v555, %v555
      %v588 = vpack.c.bf16 %v556, %v556
      %v589 = vpack.c.bf16 %v557, %v557
      %v590 = vpack.c.bf16 %v558, %v558
      %v591 = vpack.c.bf16 %v559, %v559
      %592 = vst [vmem:[%s223] sm:$0xf] %v560
      %593 = vst [vmem:[%s223 + $0x4] sm:$0xf] %v561
      %594 = vst [vmem:[%s223 + $0x8] sm:$0xf] %v562
      %595 = vst [vmem:[%s223 + $0xc] sm:$0xf] %v563
      %596 = vst [vmem:[%s223 + $0x10] sm:$0xf] %v564
      %597 = vst [vmem:[%s223 + $0x14] sm:$0xf] %v565
      %598 = vst [vmem:[%s223 + $0x18] sm:$0xf] %v566
      %599 = vst [vmem:[%s223 + $0x1c] sm:$0xf] %v567
      %600 = vst [vmem:[%s223 + $0x20] sm:$0xf] %v568
      %601 = vst [vmem:[%s223 + $0x24] sm:$0xf] %v569
      %602 = vst [vmem:[%s223 + $0x28] sm:$0xf] %v570
      %603 = vst [vmem:[%s223 + $0x2c] sm:$0xf] %v571
      %604 = vst [vmem:[%s223 + $0x30] sm:$0xf] %v572
      %605 = vst [vmem:[%s223 + $0x34] sm:$0xf] %v573
      %606 = vst [vmem:[%s223 + $0x38] sm:$0xf] %v574
      %607 = vst [vmem:[%s223 + $0x3c] sm:$0xf] %v575
      %608 = vst [vmem:[%s223 + $0x40] sm:$0xf] %v576
      %609 = vst [vmem:[%s223 + $0x44] sm:$0xf] %v577
      %610 = vst [vmem:[%s223 + $0x48] sm:$0xf] %v578
      %611 = vst [vmem:[%s223 + $0x4c] sm:$0xf] %v579
      %612 = vst [vmem:[%s223 + $0x50] sm:$0xf] %v580
      %613 = vst [vmem:[%s223 + $0x54] sm:$0xf] %v581
      %614 = vst [vmem:[%s223 + $0x58] sm:$0xf] %v582
      %615 = vst [vmem:[%s223 + $0x5c] sm:$0xf] %v583
      %616 = vst [vmem:[%s223 + $0x60] sm:$0xf] %v584
      %617 = vst [vmem:[%s223 + $0x64] sm:$0xf] %v585
      %618 = vst [vmem:[%s223 + $0x68] sm:$0xf] %v586
      %619 = vst [vmem:[%s223 + $0x6c] sm:$0xf] %v587
      %620 = vst [vmem:[%s223 + $0x70] sm:$0xf] %v588
      %621 = vst [vmem:[%s223 + $0x74] sm:$0xf] %v589
      %622 = vst [vmem:[%s223 + $0x78] sm:$0xf] %v590
      %623 = vst [vmem:[%s223 + $0x7c] sm:$0xf] %v591
      %s624 = smul.u32 32, %s18
      %p625 = scmp.lt.s32.totalorder %s624, 63
      %s626 = scalar_select %p625, %s624, 63
      %p627 = scmp.lt.s32.totalorder %s19, 0
      %s628 = scalar_select %p627, %s19, 0
      %s629 = sadd.s32 %s628, %s626
      %s630 = smul.addr %s629, 4
      %s631 = scalar_lea.vmem %s3, %s630
      // Predicated region
      $region33: #{discriminator_unet_forward.10} parent=31 // pred_check
        %p632 = pneg %p124
      $region34: #{discriminator_unet_forward.10} parent=31 // pred_check_branch
        %634 = sbr.rel (%p632) target = $region36
      $region35: #{discriminator_unet_forward.10} parent=31 // pred_region
        %s635 = smul.u32 32, %s18
      $region36: #{discriminator_unet_forward.10} parent=31 // pred_fallthru
        _
    $region32: #{discriminator_unet_forward.10} parent=5 // pred_fallthru
      _
    %p636 = scmp.le.s32.totalorder 2, %s9
    // Predicated region
    $region37: #{discriminator_unet_forward.10} parent=5 // pred_check
      %p637 = pneg %p636
    $region38: #{discriminator_unet_forward.10} parent=5 // pred_check_branch
      %639 = sbr.rel (%p637) target = $region40
    $region39: #{discriminator_unet_forward.10} parent=5 // pred_region
      %s640 = ssub.s32 %s9, 2
      // Predicated region
      $region41: #{discriminator_unet_forward.10} parent=39 // pred_check
        %p641 = pneg %p130
      $region42: #{discriminator_unet_forward.10} parent=39 // pred_check_branch
        %643 = sbr.rel (%p641) target = $region44
      $region43: #{discriminator_unet_forward.10} parent=39 // pred_region
        %s644 = smul.u32 32, %s20
        %p645 = scmp.lt.s32.totalorder %s644, 63
        %s646 = scalar_select %p645, %s644, 63
        %p647 = scmp.lt.s32.totalorder %s21, 0
        %s648 = scalar_select %p647, %s21, 0
        %s649 = sadd.s32 %s648, %s646
        %s650 = smul.addr %s649, 4
        %s651 = scalar_lea.vmem %s3, %s650
      $region44: #{discriminator_unet_forward.10} parent=39 // pred_fallthru
        _
    $region40: #{discriminator_unet_forward.10} parent=5 // pred_fallthru
      _
  $region6: #{discriminator_unet_forward.10} parent=0 // loop_footer
    %s13 = sadd.s32 1, %s9
  $region7: #{discriminator_unet_forward.10} parent=0 // loop_footer_branch
    %8 = sbr.rel target = $region3
  $region8: #{discriminator_unet_forward.10} parent=0 // loop_exit
    _

// kernel: discriminator_unet_forward.11
$region0: #{discriminator_unet_forward.11}
  #allocation0 [shape = 'u32[]', space=smem, size = 0x4, offset = 0x4, fixed_abs, tag = 'smem constant byte address 0x4 - core index']
  #allocation1 [shape = 'u32[72,128]{1,0:T(1,128)}', space=vmem, size = 0x9000, scoped, tag = 'internal scratch']
  %s0 = inlined_call_operand.vmem [shape: bf16[128,256], index: 0, kind: input, shape index: {}]
  %s1 = inlined_call_operand.vmem [shape: bf16[256,128], index: 1, kind: input, shape index: {}]
  %s2 = inlined_call_operand.vmem [shape: bf16[128,128], index: 2, kind: output, shape index: {}]
  %s3 = sld [smem:[#allocation0]]
  $region41: #{discriminator_unet_forward.11} parent=0
    _
  %s5 = ssub.s32 1, %s3
  %s6 = scalar_select 0, %s5, %s3
  loop: start=0, step=1, limit=4
  $region2: #{discriminator_unet_forward.11} parent=0 // loop_pre_header
    _
  $region3: #{discriminator_unet_forward.11} parent=0 // loop_header
    %s8 = sphi 0, %s12
    %p9 = scmp.ge.s32.totalorder %s8, 4
    %s15 = sphi 0, %s27
    %s16 = sphi 0, %s23
    %s17 = sphi 0, %s15
    %s18 = sphi 0, %s16
    %s19 = sphi 0, %s17
    %s20 = sphi 0, %s18
    %s30 = sphi 0, %s32
    %s33 = sphi 0, %s30
    %s34 = sphi 0, %s33
    %s50 = sphi 0, %s34
    %s56 = sphi 0, %s58
    %s59 = sphi 0, %s56
    %s60 = sphi 0, %s59
    %s76 = sphi 0, %s60
    %s84 = sphi 0, %s86
    %s87 = sphi 0, %s84
    %s88 = sphi 0, %s87
    %s104 = sphi 0, %s88
  $region4: #{discriminator_unet_forward.11} parent=0 // loop_header_branch
    %11 = sbr.rel (%p9) target = $region8
  $region5: #{discriminator_unet_forward.11} parent=0 // loop_body
    %s13 = ssub.s32 %s8, 1
    %s14 = ssub.s32 %s8, 2
    %s21 = sadd.s32 1, %s16
    %p22 = scmp.ge.s32.totalorder %s21, 1
    %s23 = scalar_select %p22, 0, %s21
    %s24 = sadd.s32 1, %s15
    %s25 = scalar_select %p22, %s24, %s15
    %p26 = scmp.ge.s32.totalorder %s25, 2
    %s27 = scalar_select %p26, 0, %s25
    %s28 = ssub.s32 %s15, %s27
    %p29 = scmp.eq.s32.totalorder %s28, 0
    %s31 = sadd.s32 %s30, 1
    %s32 = scalar_select %p29, %s30, %s31
    %p35 = pneg %p29
    %p36 = scmp.eq.s32.totalorder %s8, 1
    %p37 = por %p35, %p36
    %p38 = scmp.ne.s32.totalorder %s30, %s33
    %p39 = scmp.eq.s32.totalorder %s8, 0
    %p40 = por %p38, %p39
    %p41 = scmp.ne.s32.totalorder %s30, %s33
    %p42 = scmp.eq.s32.totalorder %s13, 1
    %p43 = por %p41, %p42
    %p44 = scmp.ne.s32.totalorder %s33, %s34
    %p45 = scmp.eq.s32.totalorder %s13, 0
    %p46 = por %p44, %p45
    %p47 = scmp.ne.s32.totalorder %s33, %s34
    %p48 = scmp.eq.s32.totalorder %s14, 1
    %p49 = por %p47, %p48
    %p51 = scmp.ne.s32.totalorder %s34, %s50
    %p52 = scmp.eq.s32.totalorder %s14, 0
    %p53 = por %p51, %p52
    %s54 = ssub.s32 %s16, %s23
    %p55 = scmp.eq.s32.totalorder %s54, 0
    %s57 = sadd.s32 %s56, 1
    %s58 = scalar_select %p55, %s56, %s57
    %p61 = pneg %p55
    %p62 = scmp.eq.s32.totalorder %s8, 1
    %p63 = por %p61, %p62
    %p64 = scmp.ne.s32.totalorder %s56, %s59
    %p65 = scmp.eq.s32.totalorder %s8, 0
    %p66 = por %p64, %p65
    %p67 = scmp.ne.s32.totalorder %s56, %s59
    %p68 = scmp.eq.s32.totalorder %s13, 1
    %p69 = por %p67, %p68
    %p70 = scmp.ne.s32.totalorder %s59, %s60
    %p71 = scmp.eq.s32.totalorder %s13, 0
    %p72 = por %p70, %p71
    %p73 = scmp.ne.s32.totalorder %s59, %s60
    %p74 = scmp.eq.s32.totalorder %s14, 1
    %p75 = por %p73, %p74
    %p77 = scmp.ne.s32.totalorder %s60, %s76
    %p78 = scmp.eq.s32.totalorder %s14, 0
    %p79 = por %p77, %p78
    %s80 = ssub.s32 %s15, %s27
    %s81 = ssub.s32 %s16, %s23
    %s82 = sor.u32 %s80, %s81
    %p83 = scmp.eq.s32.totalorder %s82, 0
    %s85 = sadd.s32 %s84, 1
    %s86 = scalar_select %p83, %s84, %s85
    %p89 = pneg %p83
    %p90 = scmp.eq.s32.totalorder %s8, 1
    %p91 = por %p89, %p90
    %p92 = scmp.ne.s32.totalorder %s84, %s87
    %p93 = scmp.eq.s32.totalorder %s8, 0
    %p94 = por %p92, %p93
    %p95 = scmp.ne.s32.totalorder %s84, %s87
    %p96 = scmp.eq.s32.totalorder %s13, 1
    %p97 = por %p95, %p96
    %p98 = scmp.ne.s32.totalorder %s87, %s88
    %p99 = scmp.eq.s32.totalorder %s13, 0
    %p100 = por %p98, %p99
    %p101 = scmp.ne.s32.totalorder %s87, %s88
    %p102 = scmp.eq.s32.totalorder %s14, 1
    %p103 = por %p101, %p102
    %p105 = scmp.ne.s32.totalorder %s88, %s104
    %p106 = scmp.eq.s32.totalorder %s14, 0
    %p107 = por %p105, %p106
    %p108 = scmp.le.s32.totalorder 1, %s8
    %p109 = scmp.lt.s32.totalorder %s8, 3
    %p110 = pnand %p108, %p109
    %p111 = pneg %p110
    // Predicated region
    $region9: #{discriminator_unet_forward.11} parent=5 // pred_check
      _
    $region10: #{discriminator_unet_forward.11} parent=5 // pred_check_branch
      %113 = sbr.rel (%p110) target = $region12
    $region11: #{discriminator_unet_forward.11} parent=5 // pred_region
      %s114 = ssub.s32 %s8, 1
      // Predicated region
      $region13: #{discriminator_unet_forward.11} parent=11 // pred_check
        %p115 = pneg %p72
      $region14: #{discriminator_unet_forward.11} parent=11 // pred_check_branch
        %117 = sbr.rel (%p115) target = $region16
      $region15: #{discriminator_unet_forward.11} parent=11 // pred_region
        %p118 = scmp.lt.s32.totalorder %s18, 0
        %s119 = scalar_select %p118, %s18, 0
        %s120 = smul.addr %s119, 4
        %s121 = scalar_lea.vmem %s1, %s120
      $region16: #{discriminator_unet_forward.11} parent=11 // pred_fallthru
        _
    $region12: #{discriminator_unet_forward.11} parent=5 // pred_fallthru
      _
    %p122 = scmp.lt.s32.totalorder %s8, 2
    // Predicated region
    $region17: #{discriminator_unet_forward.11} parent=5 // pred_check
      %p123 = pneg %p122
    $region18: #{discriminator_unet_forward.11} parent=5 // pred_check_branch
      %125 = sbr.rel (%p123) target = $region20
    $region19: #{discriminator_unet_forward.11} parent=5 // pred_region
      // Predicated region
      $region21: #{discriminator_unet_forward.11} parent=19 // pred_check
        %p126 = pneg %p40
      $region22: #{discriminator_unet_forward.11} parent=19 // pred_check_branch
        %128 = sbr.rel (%p126) target = $region24
      $region23: #{discriminator_unet_forward.11} parent=19 // pred_region
        %s129 = smul.u32 8, %s15
        %p130 = scmp.lt.s32.totalorder %s129, 15
        %s131 = scalar_select %p130, %s129, 15
        %s132 = smul.addr %s131, 2
        %s133 = smul.addr %s132, 4
        %s134 = scalar_lea.vmem %s0, %s133
        %s135 = smul.u32 8, %s15
      $region24: #{discriminator_unet_forward.11} parent=19 // pred_fallthru
        _
    $region20: #{discriminator_unet_forward.11} parent=5 // pred_fallthru
      _
    %p136 = scmp.le.s32.totalorder 1, %s8
    %p137 = scmp.lt.s32.totalorder %s8, 3
    %p138 = pnand %p136, %p137
    %p139 = pneg %p138
    // Predicated region
    $region25: #{discriminator_unet_forward.11} parent=5 // pred_check
      _
    $region26: #{discriminator_unet_forward.11} parent=5 // pred_check_branch
      %141 = sbr.rel (%p138) target = $region28
    $region27: #{discriminator_unet_forward.11} parent=5 // pred_region
      %s142 = ssub.s32 %s8, 1
      %s143 = smul.u32 8, %s17
      %p144 = scmp.lt.s32.totalorder %s143, 15
      %s145 = scalar_select %p144, %s143, 15
      %s146 = smul.addr %s145, 2
      %s147 = smul.addr %s146, 4
      %s148 = scalar_lea.vmem %s0, %s147
      %p149 = pneg %p46
      %p150 = pneg %p43
      %p151 = scmp.lt.s32.totalorder %s18, 0
      %s152 = scalar_select %p151, %s18, 0
      %s153 = smul.addr %s152, 4
      %s154 = scalar_lea.vmem %s1, %s153
      %p155 = pneg %p72
      %p156 = pneg %p69
      %p157 = pneg %p100
      %p158 = pneg %p97
      %s159 = smul.u32 8, %s17
      %p160 = scmp.lt.s32.totalorder %s159, 15
      %s161 = scalar_select %p160, %s159, 15
      %p162 = scmp.lt.s32.totalorder %s18, 0
      %s163 = scalar_select %p162, %s18, 0
      %s164 = sadd.s32 %s163, %s161
      %s165 = smul.addr %s164, 4
      %s166 = scalar_lea.vmem %s2, %s165
      %s167 = smul.u32 8, %s17
      %p168 = scmp.lt.s32.totalorder %s167, 15
      %s169 = scalar_select %p168, %s167, 15
      %s170 = smul.addr %s169, 2
      %s171 = smul.addr %s170, 4
      %s172 = scalar_lea.vmem %s0, %s171
      %s173 = smul.u32 8, %s17
      %p174 = scmp.lt.s32.totalorder %s18, 0
      %s175 = scalar_select %p174, %s18, 0
      %s176 = smul.addr %s175, 4
      %s177 = scalar_lea.vmem %s1, %s176
      %s178 = smul.u32 8, %s17
      %p179 = scmp.lt.s32.totalorder %s178, 15
      %s180 = scalar_select %p179, %s178, 15
      %p181 = scmp.lt.s32.totalorder %s18, 0
      %s182 = scalar_select %p181, %s18, 0
      %s183 = sadd.s32 %s182, %s180
      %s184 = smul.addr %s183, 4
      %s185 = scalar_lea.vmem %s2, %s184
      %s186 = smul.u32 8, %s17
      %v187 = vld [vmem:[%s172] sm:$0xff]
      %v188 = vld [vmem:[%s172 + $0x8] sm:$0xff]
      %v189 = vld [vmem:[%s172 + $0x10] sm:$0xff]
      %v190 = vld [vmem:[%s172 + $0x18] sm:$0xff]
      %v191 = vld [vmem:[%s172 + $0x20] sm:$0xff]
      %v192 = vld [vmem:[%s172 + $0x28] sm:$0xff]
      %v193 = vld [vmem:[%s172 + $0x30] sm:$0xff]
      %v194 = vld [vmem:[%s172 + $0x38] sm:$0xff]
      %v195 = vld [vmem:[%s177] sm:$0xf]
      %v196 = vld [vmem:[%s177 + $0x4] sm:$0xf]
      %v197 = vld [vmem:[%s177 + $0x8] sm:$0xf]
      %v198 = vld [vmem:[%s177 + $0xc] sm:$0xf]
      %v199 = vld [vmem:[%s177 + $0x10] sm:$0xf]
      %v200 = vld [vmem:[%s177 + $0x14] sm:$0xf]
      %v201 = vld [vmem:[%s177 + $0x18] sm:$0xf]
      %v202 = vld [vmem:[%s177 + $0x1c] sm:$0xf]
      %v203 = vld [vmem:[%s177 + $0x20] sm:$0xf]
      %v204 = vld [vmem:[%s177 + $0x24] sm:$0xf]
      %v205 = vld [vmem:[%s177 + $0x28] sm:$0xf]
      %v206 = vld [vmem:[%s177 + $0x2c] sm:$0xf]
      %v207 = vld [vmem:[%s177 + $0x30] sm:$0xf]
      %v208 = vld [vmem:[%s177 + $0x34] sm:$0xf]
      %v209 = vld [vmem:[%s177 + $0x38] sm:$0xf]
      %v210 = vld [vmem:[%s177 + $0x3c] sm:$0xf]
      %v211 = vld [vmem:[%s177 + $0x40] sm:$0xf]
      %v212 = vld [vmem:[%s177 + $0x44] sm:$0xf]
      %v213 = vld [vmem:[%s177 + $0x48] sm:$0xf]
      %v214 = vld [vmem:[%s177 + $0x4c] sm:$0xf]
      %v215 = vld [vmem:[%s177 + $0x50] sm:$0xf]
      %v216 = vld [vmem:[%s177 + $0x54] sm:$0xf]
      %v217 = vld [vmem:[%s177 + $0x58] sm:$0xf]
      %v218 = vld [vmem:[%s177 + $0x5c] sm:$0xf]
      %v219 = vld [vmem:[%s177 + $0x60] sm:$0xf]
      %v220 = vld [vmem:[%s177 + $0x64] sm:$0xf]
      %v221 = vld [vmem:[%s177 + $0x68] sm:$0xf]
      %v222 = vld [vmem:[%s177 + $0x6c] sm:$0xf]
      %v223 = vld [vmem:[%s177 + $0x70] sm:$0xf]
      %v224 = vld [vmem:[%s177 + $0x74] sm:$0xf]
      %v225 = vld [vmem:[%s177 + $0x78] sm:$0xf]
      %v226 = vld [vmem:[%s177 + $0x7c] sm:$0xf]
      %v235 = vunpack.c.l.b16 %v187
      %v236 = vunpack.c.h.b16 %v187
      %v237 = vunpack.c.l.b16 %v188
      %v238 = vunpack.c.h.b16 %v188
      %v239 = vunpack.c.l.b16 %v189
      %v240 = vunpack.c.h.b16 %v189
      %v241 = vunpack.c.l.b16 %v190
      %v242 = vunpack.c.h.b16 %v190
      %v243 = vunpack.c.l.b16 %v191
      %v244 = vunpack.c.h.b16 %v191
      %v245 = vunpack.c.l.b16 %v192
      %v246 = vunpack.c.h.b16 %v192
      %v247 = vunpack.c.l.b16 %v193
      %v248 = vunpack.c.h.b16 %v193
      %v249 = vunpack.c.l.b16 %v194
      %v250 = vunpack.c.h.b16 %v194
      %v251 = vpack.c.b16 %v237, %v235
      %v252 = vpack.c.b16 %v238, %v236
      %v253 = vpack.c.b16 %v241, %v239
      %v254 = vpack.c.b16 %v242, %v240
      %v255 = vpack.c.b16 %v245, %v243
      %v256 = vpack.c.b16 %v246, %v244
      %v257 = vpack.c.b16 %v249, %v247
      %v258 = vpack.c.b16 %v250, %v248
      %v299 = vunpack.c.l.b16 %v195
      %v300 = vunpack.c.l.b16 %v196
      %v301 = vunpack.c.l.b16 %v197
      %v302 = vunpack.c.l.b16 %v198
      %v303 = vunpack.c.l.b16 %v199
      %v304 = vunpack.c.l.b16 %v200
      %v305 = vunpack.c.l.b16 %v201
      %v306 = vunpack.c.l.b16 %v202
      %v307 = vunpack.c.l.b16 %v203
      %v308 = vunpack.c.l.b16 %v204
      %v309 = vunpack.c.l.b16 %v205
      %v310 = vunpack.c.l.b16 %v206
      %v311 = vunpack.c.l.b16 %v207
      %v312 = vunpack.c.l.b16 %v208
      %v313 = vunpack.c.l.b16 %v209
      %v314 = vunpack.c.l.b16 %v210
      %v315 = vunpack.c.l.b16 %v211
      %v316 = vunpack.c.l.b16 %v212
      %v317 = vunpack.c.l.b16 %v213
      %v318 = vunpack.c.l.b16 %v214
      %v319 = vunpack.c.l.b16 %v215
      %v320 = vunpack.c.l.b16 %v216
      %v321 = vunpack.c.l.b16 %v217
      %v322 = vunpack.c.l.b16 %v218
      %v323 = vunpack.c.l.b16 %v219
      %v324 = vunpack.c.l.b16 %v220
      %v325 = vunpack.c.l.b16 %v221
      %v326 = vunpack.c.l.b16 %v222
      %v327 = vunpack.c.l.b16 %v223
      %v328 = vunpack.c.l.b16 %v224
      %v329 = vunpack.c.l.b16 %v225
      %v330 = vunpack.c.l.b16 %v226
      %v331 = vpack.c.b16 %v300, %v299
      %v332 = vpack.c.b16 %v302, %v301
      %v333 = vpack.c.b16 %v304, %v303
      %v334 = vpack.c.b16 %v306, %v305
      %v335 = vpack.c.b16 %v308, %v307
      %v336 = vpack.c.b16 %v310, %v309
      %v337 = vpack.c.b16 %v312, %v311
      %v338 = vpack.c.b16 %v314, %v313
      %v339 = vpack.c.b16 %v316, %v315
      %v340 = vpack.c.b16 %v318, %v317
      %v341 = vpack.c.b16 %v320, %v319
      %v342 = vpack.c.b16 %v322, %v321
      %v343 = vpack.c.b16 %v324, %v323
      %v344 = vpack.c.b16 %v326, %v325
      %v345 = vpack.c.b16 %v328, %v327
      %v346 = vpack.c.b16 %v330, %v329
      %363 = vmatpush.bf16.msra.mxu0 %v338
      %364 = vmatpush.bf16.msra.mxu0 %v337
      %365 = vmatpush.bf16.msra.mxu0 %v336
      %366 = vmatpush.bf16.msra.mxu0 %v335
      %367 = vmatpush.bf16.msra.mxu0 %v334
      %368 = vmatpush.bf16.msra.mxu0 %v333
      %369 = vmatpush.bf16.msra.mxu0 %v332
      %370 = vmatpush.bf16.msra.mxu0 %v331
      %371 = vmatmul.bf16.gmra.mxu0 %v251
      %v372 = vpop.f32.mrf.mxu0
      %v373 = vadd.f32 0.0, %v372
      %v374 = vpop.f32.mrf.mxu0
      %v375 = vadd.f32 0.0, %v374
      %376 = vmatmul.bf16.gmra.mxu0 %v253
      %v377 = vpop.f32.mrf.mxu0
      %v378 = vadd.f32 0.0, %v377
      %v379 = vpop.f32.mrf.mxu0
      %v380 = vadd.f32 0.0, %v379
      %381 = vmatmul.bf16.gmra.mxu0 %v255
      %v382 = vpop.f32.mrf.mxu0
      %v383 = vadd.f32 0.0, %v382
      %v384 = vpop.f32.mrf.mxu0
      %v385 = vadd.f32 0.0, %v384
      %386 = vmatmul.bf16.gmra.mxu0 %v257
      %v387 = vpop.f32.mrf.mxu0
      %v388 = vadd.f32 0.0, %v387
      %v389 = vpop.f32.mrf.mxu0
      %v390 = vadd.f32 0.0, %v389
      %391 = vdwg.mxu0
      %392 = vmatpush.bf16.msra.mxu0 %v346
      %393 = vmatpush.bf16.msra.mxu0 %v345
      %394 = vmatpush.bf16.msra.mxu0 %v344
      %395 = vmatpush.bf16.msra.mxu0 %v343
      %396 = vmatpush.bf16.msra.mxu0 %v342
      %397 = vmatpush.bf16.msra.mxu0 %v341
      %398 = vmatpush.bf16.msra.mxu0 %v340
      %399 = vmatpush.bf16.msra.mxu0 %v339
      %400 = vmatmul.bf16.gmra.mxu0 %v252
      %v401 = vpop.f32.mrf.mxu0
      %v402 = vadd.f32 %v373, %v401
      %v403 = vpop.f32.mrf.mxu0
      %v404 = vadd.f32 %v375, %v403
      %405 = vmatmul.bf16.gmra.mxu0 %v254
      %v406 = vpop.f32.mrf.mxu0
      %v407 = vadd.f32 %v378, %v406
      %v408 = vpop.f32.mrf.mxu0
      %v409 = vadd.f32 %v380, %v408
      %410 = vmatmul.bf16.gmra.mxu0 %v256
      %v411 = vpop.f32.mrf.mxu0
      %v412 = vadd.f32 %v383, %v411
      %v413 = vpop.f32.mrf.mxu0
      %v414 = vadd.f32 %v385, %v413
      %415 = vmatmul.bf16.gmra.mxu0 %v258
      %v416 = vpop.f32.mrf.mxu0
      %v417 = vadd.f32 %v388, %v416
      %v418 = vpop.f32.mrf.mxu0
      %v419 = vadd.f32 %v390, %v418
      %420 = vdwg.mxu0
      %v421 = vmul.f32 %v402, 0.2
      %v422 = vmul.f32 %v404, 0.2
      %v423 = vmul.f32 %v407, 0.2
      %v424 = vmul.f32 %v409, 0.2
      %v425 = vmul.f32 %v412, 0.2
      %v426 = vmul.f32 %v414, 0.2
      %v427 = vmul.f32 %v417, 0.2
      %v428 = vmul.f32 %v419, 0.2
      %v429 = vmax.f32 %v402, %v421
      %v430 = vmax.f32 %v404, %v422
      %v431 = vmax.f32 %v407, %v423
      %v432 = vmax.f32 %v409, %v424
      %v433 = vmax.f32 %v412, %v425
      %v434 = vmax.f32 %v414, %v426
      %v435 = vmax.f32 %v417, %v427
      %v436 = vmax.f32 %v419, %v428
      %v437 = vpack.c.bf16 %v429, %v429
      %v438 = vpack.c.bf16 %v430, %v430
      %v439 = vpack.c.bf16 %v431, %v431
      %v440 = vpack.c.bf16 %v432, %v432
      %v441 = vpack.c.bf16 %v433, %v433
      %v442 = vpack.c.bf16 %v434, %v434
      %v443 = vpack.c.bf16 %v435, %v435
      %v444 = vpack.c.bf16 %v436, %v436
      %445 = vst [vmem:[%s185] sm:$0xf] %v437
      %446 = vst [vmem:[%s185 + $0x4] sm:$0xf] %v438
      %447 = vst [vmem:[%s185 + $0x8] sm:$0xf] %v439
      %448 = vst [vmem:[%s185 + $0xc] sm:$0xf] %v440
      %449 = vst [vmem:[%s185 + $0x10] sm:$0xf] %v441
      %450 = vst [vmem:[%s185 + $0x14] sm:$0xf] %v442
      %451 = vst [vmem:[%s185 + $0x18] sm:$0xf] %v443
      %452 = vst [vmem:[%s185 + $0x1c] sm:$0xf] %v444
      %s453 = smul.u32 8, %s17
      %p454 = scmp.lt.s32.totalorder %s453, 15
      %s455 = scalar_select %p454, %s453, 15
      %p456 = scmp.lt.s32.totalorder %s18, 0
      %s457 = scalar_select %p456, %s18, 0
      %s458 = sadd.s32 %s457, %s455
      %s459 = smul.addr %s458, 4
      %s460 = scalar_lea.vmem %s2, %s459
      // Predicated region
      $region29: #{discriminator_unet_forward.11} parent=27 // pred_check
        %p461 = pneg %p97
      $region30: #{discriminator_unet_forward.11} parent=27 // pred_check_branch
        %463 = sbr.rel (%p461) target = $region32
      $region31: #{discriminator_unet_forward.11} parent=27 // pred_region
        %s464 = smul.u32 8, %s17
      $region32: #{discriminator_unet_forward.11} parent=27 // pred_fallthru
        _
    $region28: #{discriminator_unet_forward.11} parent=5 // pred_fallthru
      _
    %p465 = scmp.le.s32.totalorder 2, %s8
    // Predicated region
    $region33: #{discriminator_unet_forward.11} parent=5 // pred_check
      %p466 = pneg %p465
    $region34: #{discriminator_unet_forward.11} parent=5 // pred_check_branch
      %468 = sbr.rel (%p466) target = $region36
    $region35: #{discriminator_unet_forward.11} parent=5 // pred_region
      %s469 = ssub.s32 %s8, 2
      // Predicated region
      $region37: #{discriminator_unet_forward.11} parent=35 // pred_check
        %p470 = pneg %p103
      $region38: #{discriminator_unet_forward.11} parent=35 // pred_check_branch
        %472 = sbr.rel (%p470) target = $region40
      $region39: #{discriminator_unet_forward.11} parent=35 // pred_region
        %s473 = smul.u32 8, %s19
        %p474 = scmp.lt.s32.totalorder %s473, 15
        %s475 = scalar_select %p474, %s473, 15
        %p476 = scmp.lt.s32.totalorder %s20, 0
        %s477 = scalar_select %p476, %s20, 0
        %s478 = sadd.s32 %s477, %s475
        %s479 = smul.addr %s478, 4
        %s480 = scalar_lea.vmem %s2, %s479
      $region40: #{discriminator_unet_forward.11} parent=35 // pred_fallthru
        _
    $region36: #{discriminator_unet_forward.11} parent=5 // pred_fallthru
      _
  $region6: #{discriminator_unet_forward.11} parent=0 // loop_footer
    %s12 = sadd.s32 1, %s8
  $region7: #{discriminator_unet_forward.11} parent=0 // loop_footer_branch
    %7 = sbr.rel target = $region3
  $region8: #{discriminator_unet_forward.11} parent=0 // loop_exit
    _

// kernel: discriminator_unet_forward.12
$region0: #{discriminator_unet_forward.12}
  #allocation0 [shape = 'u32[]', space=smem, size = 0x4, offset = 0x4, fixed_abs, tag = 'smem constant byte address 0x4 - core index']
  #allocation1 [shape = 'u32[72,128]{1,0:T(1,128)}', space=vmem, size = 0x9000, scoped, tag = 'internal scratch']
  %s0 = inlined_call_operand.vmem [shape: bf16[32,512], index: 0, kind: input, shape index: {}]
  %s1 = inlined_call_operand.vmem [shape: bf16[512,128], index: 1, kind: input, shape index: {}]
  %s2 = inlined_call_operand.vmem [shape: bf16[32,128], index: 2, kind: output, shape index: {}]
  %s3 = sld [smem:[#allocation0]]
  $region18: #{discriminator_unet_forward.12} parent=0
    _
  %s5 = ssub.s32 1, %s3
  %s6 = scalar_select 0, %s5, %s3
  // Predicated region
  $region2: #{discriminator_unet_forward.12} parent=0 // pred_check
    _
  $region3: #{discriminator_unet_forward.12} parent=0 // pred_check_branch
    %8 = sbr.rel (0) target = $region5
  $region4: #{discriminator_unet_forward.12} parent=0 // pred_region
    _
  $region5: #{discriminator_unet_forward.12} parent=0 // pred_fallthru
    _
  // Predicated region
  $region6: #{discriminator_unet_forward.12} parent=0 // pred_check
    _
  $region7: #{discriminator_unet_forward.12} parent=0 // pred_check_branch
    %10 = sbr.rel (0) target = $region9
  $region8: #{discriminator_unet_forward.12} parent=0 // pred_region
    _
  $region9: #{discriminator_unet_forward.12} parent=0 // pred_fallthru
    _
  %v11 = vld [vmem:[%s0] sm:$0xff]
  %v12 = vld [vmem:[%s0 + $0x8] sm:$0xff]
  %v13 = vld [vmem:[%s0 + $0x10] sm:$0xff]
  %v14 = vld [vmem:[%s0 + $0x18] sm:$0xff]
  %v15 = vld [vmem:[%s0 + $0x20] sm:$0xff]
  %v16 = vld [vmem:[%s0 + $0x28] sm:$0xff]
  %v17 = vld [vmem:[%s0 + $0x30] sm:$0xff]
  %v18 = vld [vmem:[%s0 + $0x38] sm:$0xff]
  %v19 = vld [vmem:[%s1] sm:$0xf]
  %v20 = vld [vmem:[%s1 + $0x4] sm:$0xf]
  %v21 = vld [vmem:[%s1 + $0x8] sm:$0xf]
  %v22 = vld [vmem:[%s1 + $0xc] sm:$0xf]
  %v23 = vld [vmem:[%s1 + $0x10] sm:$0xf]
  %v24 = vld [vmem:[%s1 + $0x14] sm:$0xf]
  %v25 = vld [vmem:[%s1 + $0x18] sm:$0xf]
  %v26 = vld [vmem:[%s1 + $0x1c] sm:$0xf]
  %v27 = vld [vmem:[%s1 + $0x20] sm:$0xf]
  %v28 = vld [vmem:[%s1 + $0x24] sm:$0xf]
  %v29 = vld [vmem:[%s1 + $0x28] sm:$0xf]
  %v30 = vld [vmem:[%s1 + $0x2c] sm:$0xf]
  %v31 = vld [vmem:[%s1 + $0x30] sm:$0xf]
  %v32 = vld [vmem:[%s1 + $0x34] sm:$0xf]
  %v33 = vld [vmem:[%s1 + $0x38] sm:$0xf]
  %v34 = vld [vmem:[%s1 + $0x3c] sm:$0xf]
  %v35 = vld [vmem:[%s1 + $0x40] sm:$0xf]
  %v36 = vld [vmem:[%s1 + $0x44] sm:$0xf]
  %v37 = vld [vmem:[%s1 + $0x48] sm:$0xf]
  %v38 = vld [vmem:[%s1 + $0x4c] sm:$0xf]
  %v39 = vld [vmem:[%s1 + $0x50] sm:$0xf]
  %v40 = vld [vmem:[%s1 + $0x54] sm:$0xf]
  %v41 = vld [vmem:[%s1 + $0x58] sm:$0xf]
  %v42 = vld [vmem:[%s1 + $0x5c] sm:$0xf]
  %v43 = vld [vmem:[%s1 + $0x60] sm:$0xf]
  %v44 = vld [vmem:[%s1 + $0x64] sm:$0xf]
  %v45 = vld [vmem:[%s1 + $0x68] sm:$0xf]
  %v46 = vld [vmem:[%s1 + $0x6c] sm:$0xf]
  %v47 = vld [vmem:[%s1 + $0x70] sm:$0xf]
  %v48 = vld [vmem:[%s1 + $0x74] sm:$0xf]
  %v49 = vld [vmem:[%s1 + $0x78] sm:$0xf]
  %v50 = vld [vmem:[%s1 + $0x7c] sm:$0xf]
  %v51 = vld [vmem:[%s1 + $0x80] sm:$0xf]
  %v52 = vld [vmem:[%s1 + $0x84] sm:$0xf]
  %v53 = vld [vmem:[%s1 + $0x88] sm:$0xf]
  %v54 = vld [vmem:[%s1 + $0x8c] sm:$0xf]
  %v55 = vld [vmem:[%s1 + $0x90] sm:$0xf]
  %v56 = vld [vmem:[%s1 + $0x94] sm:$0xf]
  %v57 = vld [vmem:[%s1 + $0x98] sm:$0xf]
  %v58 = vld [vmem:[%s1 + $0x9c] sm:$0xf]
  %v59 = vld [vmem:[%s1 + $0xa0] sm:$0xf]
  %v60 = vld [vmem:[%s1 + $0xa4] sm:$0xf]
  %v61 = vld [vmem:[%s1 + $0xa8] sm:$0xf]
  %v62 = vld [vmem:[%s1 + $0xac] sm:$0xf]
  %v63 = vld [vmem:[%s1 + $0xb0] sm:$0xf]
  %v64 = vld [vmem:[%s1 + $0xb4] sm:$0xf]
  %v65 = vld [vmem:[%s1 + $0xb8] sm:$0xf]
  %v66 = vld [vmem:[%s1 + $0xbc] sm:$0xf]
  %v67 = vld [vmem:[%s1 + $0xc0] sm:$0xf]
  %v68 = vld [vmem:[%s1 + $0xc4] sm:$0xf]
  %v69 = vld [vmem:[%s1 + $0xc8] sm:$0xf]
  %v70 = vld [vmem:[%s1 + $0xcc] sm:$0xf]
  %v71 = vld [vmem:[%s1 + $0xd0] sm:$0xf]
  %v72 = vld [vmem:[%s1 + $0xd4] sm:$0xf]
  %v73 = vld [vmem:[%s1 + $0xd8] sm:$0xf]
  %v74 = vld [vmem:[%s1 + $0xdc] sm:$0xf]
  %v75 = vld [vmem:[%s1 + $0xe0] sm:$0xf]
  %v76 = vld [vmem:[%s1 + $0xe4] sm:$0xf]
  %v77 = vld [vmem:[%s1 + $0xe8] sm:$0xf]
  %v78 = vld [vmem:[%s1 + $0xec] sm:$0xf]
  %v79 = vld [vmem:[%s1 + $0xf0] sm:$0xf]
  %v80 = vld [vmem:[%s1 + $0xf4] sm:$0xf]
  %v81 = vld [vmem:[%s1 + $0xf8] sm:$0xf]
  %v82 = vld [vmem:[%s1 + $0xfc] sm:$0xf]
  %v91 = vunpack.c.l.b16 %v11
  %v92 = vunpack.c.h.b16 %v11
  %v93 = vunpack.c.l.b16 %v12
  %v94 = vunpack.c.h.b16 %v12
  %v95 = vunpack.c.l.b16 %v13
  %v96 = vunpack.c.h.b16 %v13
  %v97 = vunpack.c.l.b16 %v14
  %v98 = vunpack.c.h.b16 %v14
  %v99 = vunpack.c.l.b16 %v15
  %v100 = vunpack.c.h.b16 %v15
  %v101 = vunpack.c.l.b16 %v16
  %v102 = vunpack.c.h.b16 %v16
  %v103 = vunpack.c.l.b16 %v17
  %v104 = vunpack.c.h.b16 %v17
  %v105 = vunpack.c.l.b16 %v18
  %v106 = vunpack.c.h.b16 %v18
  %v107 = vpack.c.b16 %v95, %v91
  %v108 = vpack.c.b16 %v96, %v92
  %v109 = vpack.c.b16 %v97, %v93
  %v110 = vpack.c.b16 %v98, %v94
  %v111 = vpack.c.b16 %v103, %v99
  %v112 = vpack.c.b16 %v104, %v100
  %v113 = vpack.c.b16 %v105, %v101
  %v114 = vpack.c.b16 %v106, %v102
  %v187 = vunpack.c.l.b16 %v19
  %v188 = vunpack.c.l.b16 %v20
  %v189 = vunpack.c.l.b16 %v21
  %v190 = vunpack.c.l.b16 %v22
  %v191 = vunpack.c.l.b16 %v23
  %v192 = vunpack.c.l.b16 %v24
  %v193 = vunpack.c.l.b16 %v25
  %v194 = vunpack.c.l.b16 %v26
  %v195 = vunpack.c.l.b16 %v27
  %v196 = vunpack.c.l.b16 %v28
  %v197 = vunpack.c.l.b16 %v29
  %v198 = vunpack.c.l.b16 %v30
  %v199 = vunpack.c.l.b16 %v31
  %v200 = vunpack.c.l.b16 %v32
  %v201 = vunpack.c.l.b16 %v33
  %v202 = vunpack.c.l.b16 %v34
  %v203 = vunpack.c.l.b16 %v35
  %v204 = vunpack.c.l.b16 %v36
  %v205 = vunpack.c.l.b16 %v37
  %v206 = vunpack.c.l.b16 %v38
  %v207 = vunpack.c.l.b16 %v39
  %v208 = vunpack.c.l.b16 %v40
  %v209 = vunpack.c.l.b16 %v41
  %v210 = vunpack.c.l.b16 %v42
  %v211 = vunpack.c.l.b16 %v43
  %v212 = vunpack.c.l.b16 %v44
  %v213 = vunpack.c.l.b16 %v45
  %v214 = vunpack.c.l.b16 %v46
  %v215 = vunpack.c.l.b16 %v47
  %v216 = vunpack.c.l.b16 %v48
  %v217 = vunpack.c.l.b16 %v49
  %v218 = vunpack.c.l.b16 %v50
  %v219 = vunpack.c.l.b16 %v51
  %v220 = vunpack.c.l.b16 %v52
  %v221 = vunpack.c.l.b16 %v53
  %v222 = vunpack.c.l.b16 %v54
  %v223 = vunpack.c.l.b16 %v55
  %v224 = vunpack.c.l.b16 %v56
  %v225 = vunpack.c.l.b16 %v57
  %v226 = vunpack.c.l.b16 %v58
  %v227 = vunpack.c.l.b16 %v59
  %v228 = vunpack.c.l.b16 %v60
  %v229 = vunpack.c.l.b16 %v61
  %v230 = vunpack.c.l.b16 %v62
  %v231 = vunpack.c.l.b16 %v63
  %v232 = vunpack.c.l.b16 %v64
  %v233 = vunpack.c.l.b16 %v65
  %v234 = vunpack.c.l.b16 %v66
  %v235 = vunpack.c.l.b16 %v67
  %v236 = vunpack.c.l.b16 %v68
  %v237 = vunpack.c.l.b16 %v69
  %v238 = vunpack.c.l.b16 %v70
  %v239 = vunpack.c.l.b16 %v71
  %v240 = vunpack.c.l.b16 %v72
  %v241 = vunpack.c.l.b16 %v73
  %v242 = vunpack.c.l.b16 %v74
  %v243 = vunpack.c.l.b16 %v75
  %v244 = vunpack.c.l.b16 %v76
  %v245 = vunpack.c.l.b16 %v77
  %v246 = vunpack.c.l.b16 %v78
  %v247 = vunpack.c.l.b16 %v79
  %v248 = vunpack.c.l.b16 %v80
  %v249 = vunpack.c.l.b16 %v81
  %v250 = vunpack.c.l.b16 %v82
  %v251 = vpack.c.b16 %v188, %v187
  %v252 = vpack.c.b16 %v190, %v189
  %v253 = vpack.c.b16 %v192, %v191
  %v254 = vpack.c.b16 %v194, %v193
  %v255 = vpack.c.b16 %v196, %v195
  %v256 = vpack.c.b16 %v198, %v197
  %v257 = vpack.c.b16 %v200, %v199
  %v258 = vpack.c.b16 %v202, %v201
  %v259 = vpack.c.b16 %v204, %v203
  %v260 = vpack.c.b16 %v206, %v205
  %v261 = vpack.c.b16 %v208, %v207
  %v262 = vpack.c.b16 %v210, %v209
  %v263 = vpack.c.b16 %v212, %v211
  %v264 = vpack.c.b16 %v214, %v213
  %v265 = vpack.c.b16 %v216, %v215
  %v266 = vpack.c.b16 %v218, %v217
  %v267 = vpack.c.b16 %v220, %v219
  %v268 = vpack.c.b16 %v222, %v221
  %v269 = vpack.c.b16 %v224, %v223
  %v270 = vpack.c.b16 %v226, %v225
  %v271 = vpack.c.b16 %v228, %v227
  %v272 = vpack.c.b16 %v230, %v229
  %v273 = vpack.c.b16 %v232, %v231
  %v274 = vpack.c.b16 %v234, %v233
  %v275 = vpack.c.b16 %v236, %v235
  %v276 = vpack.c.b16 %v238, %v237
  %v277 = vpack.c.b16 %v240, %v239
  %v278 = vpack.c.b16 %v242, %v241
  %v279 = vpack.c.b16 %v244, %v243
  %v280 = vpack.c.b16 %v246, %v245
  %v281 = vpack.c.b16 %v248, %v247
  %v282 = vpack.c.b16 %v250, %v249
  %315 = vmatpush.bf16.msra.mxu0 %v258
  %316 = vmatpush.bf16.msra.mxu0 %v257
  %317 = vmatpush.bf16.msra.mxu0 %v256
  %318 = vmatpush.bf16.msra.mxu0 %v255
  %319 = vmatpush.bf16.msra.mxu0 %v254
  %320 = vmatpush.bf16.msra.mxu0 %v253
  %321 = vmatpush.bf16.msra.mxu0 %v252
  %322 = vmatpush.bf16.msra.mxu0 %v251
  %323 = vmatmul.bf16.gmra.mxu0 %v107
  %v324 = vpop.f32.mrf.mxu0
  %v325 = vadd.f32 0.0, %v324
  %v326 = vpop.f32.mrf.mxu0
  %v327 = vadd.f32 0.0, %v326
  %328 = vmatmul.bf16.gmra.mxu0 %v111
  %v329 = vpop.f32.mrf.mxu0
  %v330 = vadd.f32 0.0, %v329
  %v331 = vpop.f32.mrf.mxu0
  %v332 = vadd.f32 0.0, %v331
  %333 = vdwg.mxu0
  %334 = vmatpush.bf16.msra.mxu0 %v266
  %335 = vmatpush.bf16.msra.mxu0 %v265
  %336 = vmatpush.bf16.msra.mxu0 %v264
  %337 = vmatpush.bf16.msra.mxu0 %v263
  %338 = vmatpush.bf16.msra.mxu0 %v262
  %339 = vmatpush.bf16.msra.mxu0 %v261
  %340 = vmatpush.bf16.msra.mxu0 %v260
  %341 = vmatpush.bf16.msra.mxu0 %v259
  %342 = vmatmul.bf16.gmra.mxu0 %v108
  %v343 = vpop.f32.mrf.mxu0
  %v344 = vadd.f32 %v325, %v343
  %v345 = vpop.f32.mrf.mxu0
  %v346 = vadd.f32 %v327, %v345
  %347 = vmatmul.bf16.gmra.mxu0 %v112
  %v348 = vpop.f32.mrf.mxu0
  %v349 = vadd.f32 %v330, %v348
  %v350 = vpop.f32.mrf.mxu0
  %v351 = vadd.f32 %v332, %v350
  %352 = vdwg.mxu0
  %353 = vmatpush.bf16.msra.mxu0 %v274
  %354 = vmatpush.bf16.msra.mxu0 %v273
  %355 = vmatpush.bf16.msra.mxu0 %v272
  %356 = vmatpush.bf16.msra.mxu0 %v271
  %357 = vmatpush.bf16.msra.mxu0 %v270
  %358 = vmatpush.bf16.msra.mxu0 %v269
  %359 = vmatpush.bf16.msra.mxu0 %v268
  %360 = vmatpush.bf16.msra.mxu0 %v267
  %361 = vmatmul.bf16.gmra.mxu0 %v109
  %v362 = vpop.f32.mrf.mxu0
  %v363 = vadd.f32 %v344, %v362
  %v364 = vpop.f32.mrf.mxu0
  %v365 = vadd.f32 %v346, %v364
  %366 = vmatmul.bf16.gmra.mxu0 %v113
  %v367 = vpop.f32.mrf.mxu0
  %v368 = vadd.f32 %v349, %v367
  %v369 = vpop.f32.mrf.mxu0
  %v370 = vadd.f32 %v351, %v369
  %371 = vdwg.mxu0
  %372 = vmatpush.bf16.msra.mxu0 %v282
  %373 = vmatpush.bf16.msra.mxu0 %v281
  %374 = vmatpush.bf16.msra.mxu0 %v280
  %375 = vmatpush.bf16.msra.mxu0 %v279
  %376 = vmatpush.bf16.msra.mxu0 %v278
  %377 = vmatpush.bf16.msra.mxu0 %v277
  %378 = vmatpush.bf16.msra.mxu0 %v276
  %379 = vmatpush.bf16.msra.mxu0 %v275
  %380 = vmatmul.bf16.gmra.mxu0 %v110
  %v381 = vpop.f32.mrf.mxu0
  %v382 = vadd.f32 %v363, %v381
  %v383 = vpop.f32.mrf.mxu0
  %v384 = vadd.f32 %v365, %v383
  %385 = vmatmul.bf16.gmra.mxu0 %v114
  %v386 = vpop.f32.mrf.mxu0
  %v387 = vadd.f32 %v368, %v386
  %v388 = vpop.f32.mrf.mxu0
  %v389 = vadd.f32 %v370, %v388
  %390 = vdwg.mxu0
  %v391 = vmul.f32 %v382, 0.2
  %v392 = vmul.f32 %v384, 0.2
  %v393 = vmul.f32 %v387, 0.2
  %v394 = vmul.f32 %v389, 0.2
  %v395 = vmax.f32 %v382, %v391
  %v396 = vmax.f32 %v384, %v392
  %v397 = vmax.f32 %v387, %v393
  %v398 = vmax.f32 %v389, %v394
  %v399 = vpack.c.bf16 %v395, %v395
  %v400 = vpack.c.bf16 %v396, %v396
  %v401 = vpack.c.bf16 %v397, %v397
  %v402 = vpack.c.bf16 %v398, %v398
  %403 = vst [vmem:[%s2] sm:$0xf] %v399
  %404 = vst [vmem:[%s2 + $0x4] sm:$0xf] %v400
  %405 = vst [vmem:[%s2 + $0x8] sm:$0xf] %v401
  %406 = vst [vmem:[%s2 + $0xc] sm:$0xf] %v402
  // Predicated region
  $region10: #{discriminator_unet_forward.12} parent=0 // pred_check
    _
  $region11: #{discriminator_unet_forward.12} parent=0 // pred_check_branch
    %408 = sbr.rel (0) target = $region13
  $region12: #{discriminator_unet_forward.12} parent=0 // pred_region
    _
  $region13: #{discriminator_unet_forward.12} parent=0 // pred_fallthru
    _
  // Predicated region
  $region14: #{discriminator_unet_forward.12} parent=0 // pred_check
    _
  $region15: #{discriminator_unet_forward.12} parent=0 // pred_check_branch
    %410 = sbr.rel (0) target = $region17
  $region16: #{discriminator_unet_forward.12} parent=0 // pred_region
    _
  $region17: #{discriminator_unet_forward.12} parent=0 // pred_fallthru
    _

// kernel: discriminator_unet_forward.13
$region0: #{discriminator_unet_forward.13}
  #allocation0 [shape = 'u32[]', space=smem, size = 0x4, offset = 0x4, fixed_abs, tag = 'smem constant byte address 0x4 - core index']
  #allocation1 [shape = 'u32[72,128]{1,0:T(1,128)}', space=vmem, size = 0x9000, scoped, tag = 'internal scratch']
  %s0 = inlined_call_operand.vmem [shape: bf16[8,1024], index: 0, kind: input, shape index: {}]
  %s1 = inlined_call_operand.vmem [shape: bf16[1024,128], index: 1, kind: input, shape index: {}]
  %s2 = inlined_call_operand.vmem [shape: bf16[8,128], index: 2, kind: output, shape index: {}]
  %s3 = sld [smem:[#allocation0]]
  $region18: #{discriminator_unet_forward.13} parent=0
    _
  %s5 = ssub.s32 1, %s3
  %s6 = scalar_select 0, %s5, %s3
  // Predicated region
  $region2: #{discriminator_unet_forward.13} parent=0 // pred_check
    _
  $region3: #{discriminator_unet_forward.13} parent=0 // pred_check_branch
    %8 = sbr.rel (0) target = $region5
  $region4: #{discriminator_unet_forward.13} parent=0 // pred_region
    _
  $region5: #{discriminator_unet_forward.13} parent=0 // pred_fallthru
    _
  // Predicated region
  $region6: #{discriminator_unet_forward.13} parent=0 // pred_check
    _
  $region7: #{discriminator_unet_forward.13} parent=0 // pred_check_branch
    %10 = sbr.rel (0) target = $region9
  $region8: #{discriminator_unet_forward.13} parent=0 // pred_region
    _
  $region9: #{discriminator_unet_forward.13} parent=0 // pred_fallthru
    _
  %v11 = vld [vmem:[%s0] sm:$0xff]
  %v12 = vld [vmem:[%s0 + $0x8] sm:$0xff]
  %v13 = vld [vmem:[%s0 + $0x10] sm:$0xff]
  %v14 = vld [vmem:[%s0 + $0x18] sm:$0xff]
  %v15 = vld [vmem:[%s1] sm:$0xf]
  %v16 = vld [vmem:[%s1 + $0x4] sm:$0xf]
  %v17 = vld [vmem:[%s1 + $0x8] sm:$0xf]
  %v18 = vld [vmem:[%s1 + $0xc] sm:$0xf]
  %v19 = vld [vmem:[%s1 + $0x10] sm:$0xf]
  %v20 = vld [vmem:[%s1 + $0x14] sm:$0xf]
  %v21 = vld [vmem:[%s1 + $0x18] sm:$0xf]
  %v22 = vld [vmem:[%s1 + $0x1c] sm:$0xf]
  %v23 = vld [vmem:[%s1 + $0x20] sm:$0xf]
  %v24 = vld [vmem:[%s1 + $0x24] sm:$0xf]
  %v25 = vld [vmem:[%s1 + $0x28] sm:$0xf]
  %v26 = vld [vmem:[%s1 + $0x2c] sm:$0xf]
  %v27 = vld [vmem:[%s1 + $0x30] sm:$0xf]
  %v28 = vld [vmem:[%s1 + $0x34] sm:$0xf]
  %v29 = vld [vmem:[%s1 + $0x38] sm:$0xf]
  %v30 = vld [vmem:[%s1 + $0x3c] sm:$0xf]
  %v31 = vld [vmem:[%s1 + $0x40] sm:$0xf]
  %v32 = vld [vmem:[%s1 + $0x44] sm:$0xf]
  %v33 = vld [vmem:[%s1 + $0x48] sm:$0xf]
  %v34 = vld [vmem:[%s1 + $0x4c] sm:$0xf]
  %v35 = vld [vmem:[%s1 + $0x50] sm:$0xf]
  %v36 = vld [vmem:[%s1 + $0x54] sm:$0xf]
  %v37 = vld [vmem:[%s1 + $0x58] sm:$0xf]
  %v38 = vld [vmem:[%s1 + $0x5c] sm:$0xf]
  %v39 = vld [vmem:[%s1 + $0x60] sm:$0xf]
  %v40 = vld [vmem:[%s1 + $0x64] sm:$0xf]
  %v41 = vld [vmem:[%s1 + $0x68] sm:$0xf]
  %v42 = vld [vmem:[%s1 + $0x6c] sm:$0xf]
  %v43 = vld [vmem:[%s1 + $0x70] sm:$0xf]
  %v44 = vld [vmem:[%s1 + $0x74] sm:$0xf]
  %v45 = vld [vmem:[%s1 + $0x78] sm:$0xf]
  %v46 = vld [vmem:[%s1 + $0x7c] sm:$0xf]
  %v47 = vld [vmem:[%s1 + $0x80] sm:$0xf]
  %v48 = vld [vmem:[%s1 + $0x84] sm:$0xf]
  %v49 = vld [vmem:[%s1 + $0x88] sm:$0xf]
  %v50 = vld [vmem:[%s1 + $0x8c] sm:$0xf]
  %v51 = vld [vmem:[%s1 + $0x90] sm:$0xf]
  %v52 = vld [vmem:[%s1 + $0x94] sm:$0xf]
  %v53 = vld [vmem:[%s1 + $0x98] sm:$0xf]
  %v54 = vld [vmem:[%s1 + $0x9c] sm:$0xf]
  %v55 = vld [vmem:[%s1 + $0xa0] sm:$0xf]
  %v56 = vld [vmem:[%s1 + $0xa4] sm:$0xf]
  %v57 = vld [vmem:[%s1 + $0xa8] sm:$0xf]
  %v58 = vld [vmem:[%s1 + $0xac] sm:$0xf]
  %v59 = vld [vmem:[%s1 + $0xb0] sm:$0xf]
  %v60 = vld [vmem:[%s1 + $0xb4] sm:$0xf]
  %v61 = vld [vmem:[%s1 + $0xb8] sm:$0xf]
  %v62 = vld [vmem:[%s1 + $0xbc] sm:$0xf]
  %v63 = vld [vmem:[%s1 + $0xc0] sm:$0xf]
  %v64 = vld [vmem:[%s1 + $0xc4] sm:$0xf]
  %v65 = vld [vmem:[%s1 + $0xc8] sm:$0xf]
  %v66 = vld [vmem:[%s1 + $0xcc] sm:$0xf]
  %v67 = vld [vmem:[%s1 + $0xd0] sm:$0xf]
  %v68 = vld [vmem:[%s1 + $0xd4] sm:$0xf]
  %v69 = vld [vmem:[%s1 + $0xd8] sm:$0xf]
  %v70 = vld [vmem:[%s1 + $0xdc] sm:$0xf]
  %v71 = vld [vmem:[%s1 + $0xe0] sm:$0xf]
  %v72 = vld [vmem:[%s1 + $0xe4] sm:$0xf]
  %v73 = vld [vmem:[%s1 + $0xe8] sm:$0xf]
  %v74 = vld [vmem:[%s1 + $0xec] sm:$0xf]
  %v75 = vld [vmem:[%s1 + $0xf0] sm:$0xf]
  %v76 = vld [vmem:[%s1 + $0xf4] sm:$0xf]
  %v77 = vld [vmem:[%s1 + $0xf8] sm:$0xf]
  %v78 = vld [vmem:[%s1 + $0xfc] sm:$0xf]
  %v79 = vld [vmem:[%s1 + $0x100] sm:$0xf]
  %v80 = vld [vmem:[%s1 + $0x104] sm:$0xf]
  %v81 = vld [vmem:[%s1 + $0x108] sm:$0xf]
  %v82 = vld [vmem:[%s1 + $0x10c] sm:$0xf]
  %v83 = vld [vmem:[%s1 + $0x110] sm:$0xf]
  %v84 = vld [vmem:[%s1 + $0x114] sm:$0xf]
  %v85 = vld [vmem:[%s1 + $0x118] sm:$0xf]
  %v86 = vld [vmem:[%s1 + $0x11c] sm:$0xf]
  %v87 = vld [vmem:[%s1 + $0x120] sm:$0xf]
  %v88 = vld [vmem:[%s1 + $0x124] sm:$0xf]
  %v89 = vld [vmem:[%s1 + $0x128] sm:$0xf]
  %v90 = vld [vmem:[%s1 + $0x12c] sm:$0xf]
  %v91 = vld [vmem:[%s1 + $0x130] sm:$0xf]
  %v92 = vld [vmem:[%s1 + $0x134] sm:$0xf]
  %v93 = vld [vmem:[%s1 + $0x138] sm:$0xf]
  %v94 = vld [vmem:[%s1 + $0x13c] sm:$0xf]
  %v95 = vld [vmem:[%s1 + $0x140] sm:$0xf]
  %v96 = vld [vmem:[%s1 + $0x144] sm:$0xf]
  %v97 = vld [vmem:[%s1 + $0x148] sm:$0xf]
  %v98 = vld [vmem:[%s1 + $0x14c] sm:$0xf]
  %v99 = vld [vmem:[%s1 + $0x150] sm:$0xf]
  %v100 = vld [vmem:[%s1 + $0x154] sm:$0xf]
  %v101 = vld [vmem:[%s1 + $0x158] sm:$0xf]
  %v102 = vld [vmem:[%s1 + $0x15c] sm:$0xf]
  %v103 = vld [vmem:[%s1 + $0x160] sm:$0xf]
  %v104 = vld [vmem:[%s1 + $0x164] sm:$0xf]
  %v105 = vld [vmem:[%s1 + $0x168] sm:$0xf]
  %v106 = vld [vmem:[%s1 + $0x16c] sm:$0xf]
  %v107 = vld [vmem:[%s1 + $0x170] sm:$0xf]
  %v108 = vld [vmem:[%s1 + $0x174] sm:$0xf]
  %v109 = vld [vmem:[%s1 + $0x178] sm:$0xf]
  %v110 = vld [vmem:[%s1 + $0x17c] sm:$0xf]
  %v111 = vld [vmem:[%s1 + $0x180] sm:$0xf]
  %v112 = vld [vmem:[%s1 + $0x184] sm:$0xf]
  %v113 = vld [vmem:[%s1 + $0x188] sm:$0xf]
  %v114 = vld [vmem:[%s1 + $0x18c] sm:$0xf]
  %v115 = vld [vmem:[%s1 + $0x190] sm:$0xf]
  %v116 = vld [vmem:[%s1 + $0x194] sm:$0xf]
  %v117 = vld [vmem:[%s1 + $0x198] sm:$0xf]
  %v118 = vld [vmem:[%s1 + $0x19c] sm:$0xf]
  %v119 = vld [vmem:[%s1 + $0x1a0] sm:$0xf]
  %v120 = vld [vmem:[%s1 + $0x1a4] sm:$0xf]
  %v121 = vld [vmem:[%s1 + $0x1a8] sm:$0xf]
  %v122 = vld [vmem:[%s1 + $0x1ac] sm:$0xf]
  %v123 = vld [vmem:[%s1 + $0x1b0] sm:$0xf]
  %v124 = vld [vmem:[%s1 + $0x1b4] sm:$0xf]
  %v125 = vld [vmem:[%s1 + $0x1b8] sm:$0xf]
  %v126 = vld [vmem:[%s1 + $0x1bc] sm:$0xf]
  %v127 = vld [vmem:[%s1 + $0x1c0] sm:$0xf]
  %v128 = vld [vmem:[%s1 + $0x1c4] sm:$0xf]
  %v129 = vld [vmem:[%s1 + $0x1c8] sm:$0xf]
  %v130 = vld [vmem:[%s1 + $0x1cc] sm:$0xf]
  %v131 = vld [vmem:[%s1 + $0x1d0] sm:$0xf]
  %v132 = vld [vmem:[%s1 + $0x1d4] sm:$0xf]
  %v133 = vld [vmem:[%s1 + $0x1d8] sm:$0xf]
  %v134 = vld [vmem:[%s1 + $0x1dc] sm:$0xf]
  %v135 = vld [vmem:[%s1 + $0x1e0] sm:$0xf]
  %v136 = vld [vmem:[%s1 + $0x1e4] sm:$0xf]
  %v137 = vld [vmem:[%s1 + $0x1e8] sm:$0xf]
  %v138 = vld [vmem:[%s1 + $0x1ec] sm:$0xf]
  %v139 = vld [vmem:[%s1 + $0x1f0] sm:$0xf]
  %v140 = vld [vmem:[%s1 + $0x1f4] sm:$0xf]
  %v141 = vld [vmem:[%s1 + $0x1f8] sm:$0xf]
  %v142 = vld [vmem:[%s1 + $0x1fc] sm:$0xf]
  %v147 = vunpack.c.l.b16 %v11
  %v148 = vunpack.c.h.b16 %v11
  %v149 = vunpack.c.l.b16 %v12
  %v150 = vunpack.c.h.b16 %v12
  %v151 = vunpack.c.l.b16 %v13
  %v152 = vunpack.c.h.b16 %v13
  %v153 = vunpack.c.l.b16 %v14
  %v154 = vunpack.c.h.b16 %v14
  %v155 = vpack.c.b16 %v147, %v147
  %v156 = vpack.c.b16 %v148, %v148
  %v157 = vpack.c.b16 %v149, %v149
  %v158 = vpack.c.b16 %v150, %v150
  %v159 = vpack.c.b16 %v151, %v151
  %v160 = vpack.c.b16 %v152, %v152
  %v161 = vpack.c.b16 %v153, %v153
  %v162 = vpack.c.b16 %v154, %v154
  %v299 = vunpack.c.l.b16 %v15
  %v300 = vunpack.c.l.b16 %v16
  %v301 = vunpack.c.l.b16 %v17
  %v302 = vunpack.c.l.b16 %v18
  %v303 = vunpack.c.l.b16 %v19
  %v304 = vunpack.c.l.b16 %v20
  %v305 = vunpack.c.l.b16 %v21
  %v306 = vunpack.c.l.b16 %v22
  %v307 = vunpack.c.l.b16 %v23
  %v308 = vunpack.c.l.b16 %v24
  %v309 = vunpack.c.l.b16 %v25
  %v310 = vunpack.c.l.b16 %v26
  %v311 = vunpack.c.l.b16 %v27
  %v312 = vunpack.c.l.b16 %v28
  %v313 = vunpack.c.l.b16 %v29
  %v314 = vunpack.c.l.b16 %v30
  %v315 = vunpack.c.l.b16 %v31
  %v316 = vunpack.c.l.b16 %v32
  %v317 = vunpack.c.l.b16 %v33
  %v318 = vunpack.c.l.b16 %v34
  %v319 = vunpack.c.l.b16 %v35
  %v320 = vunpack.c.l.b16 %v36
  %v321 = vunpack.c.l.b16 %v37
  %v322 = vunpack.c.l.b16 %v38
  %v323 = vunpack.c.l.b16 %v39
  %v324 = vunpack.c.l.b16 %v40
  %v325 = vunpack.c.l.b16 %v41
  %v326 = vunpack.c.l.b16 %v42
  %v327 = vunpack.c.l.b16 %v43
  %v328 = vunpack.c.l.b16 %v44
  %v329 = vunpack.c.l.b16 %v45
  %v330 = vunpack.c.l.b16 %v46
  %v331 = vunpack.c.l.b16 %v47
  %v332 = vunpack.c.l.b16 %v48
  %v333 = vunpack.c.l.b16 %v49
  %v334 = vunpack.c.l.b16 %v50
  %v335 = vunpack.c.l.b16 %v51
  %v336 = vunpack.c.l.b16 %v52
  %v337 = vunpack.c.l.b16 %v53
  %v338 = vunpack.c.l.b16 %v54
  %v339 = vunpack.c.l.b16 %v55
  %v340 = vunpack.c.l.b16 %v56
  %v341 = vunpack.c.l.b16 %v57
  %v342 = vunpack.c.l.b16 %v58
  %v343 = vunpack.c.l.b16 %v59
  %v344 = vunpack.c.l.b16 %v60
  %v345 = vunpack.c.l.b16 %v61
  %v346 = vunpack.c.l.b16 %v62
  %v347 = vunpack.c.l.b16 %v63
  %v348 = vunpack.c.l.b16 %v64
  %v349 = vunpack.c.l.b16 %v65
  %v350 = vunpack.c.l.b16 %v66
  %v351 = vunpack.c.l.b16 %v67
  %v352 = vunpack.c.l.b16 %v68
  %v353 = vunpack.c.l.b16 %v69
  %v354 = vunpack.c.l.b16 %v70
  %v355 = vunpack.c.l.b16 %v71
  %v356 = vunpack.c.l.b16 %v72
  %v357 = vunpack.c.l.b16 %v73
  %v358 = vunpack.c.l.b16 %v74
  %v359 = vunpack.c.l.b16 %v75
  %v360 = vunpack.c.l.b16 %v76
  %v361 = vunpack.c.l.b16 %v77
  %v362 = vunpack.c.l.b16 %v78
  %v363 = vunpack.c.l.b16 %v79
  %v364 = vunpack.c.l.b16 %v80
  %v365 = vunpack.c.l.b16 %v81
  %v366 = vunpack.c.l.b16 %v82
  %v367 = vunpack.c.l.b16 %v83
  %v368 = vunpack.c.l.b16 %v84
  %v369 = vunpack.c.l.b16 %v85
  %v370 = vunpack.c.l.b16 %v86
  %v371 = vunpack.c.l.b16 %v87
  %v372 = vunpack.c.l.b16 %v88
  %v373 = vunpack.c.l.b16 %v89
  %v374 = vunpack.c.l.b16 %v90
  %v375 = vunpack.c.l.b16 %v91
  %v376 = vunpack.c.l.b16 %v92
  %v377 = vunpack.c.l.b16 %v93
  %v378 = vunpack.c.l.b16 %v94
  %v379 = vunpack.c.l.b16 %v95
  %v380 = vunpack.c.l.b16 %v96
  %v381 = vunpack.c.l.b16 %v97
  %v382 = vunpack.c.l.b16 %v98
  %v383 = vunpack.c.l.b16 %v99
  %v384 = vunpack.c.l.b16 %v100
  %v385 = vunpack.c.l.b16 %v101
  %v386 = vunpack.c.l.b16 %v102
  %v387 = vunpack.c.l.b16 %v103
  %v388 = vunpack.c.l.b16 %v104
  %v389 = vunpack.c.l.b16 %v105
  %v390 = vunpack.c.l.b16 %v106
  %v391 = vunpack.c.l.b16 %v107
  %v392 = vunpack.c.l.b16 %v108
  %v393 = vunpack.c.l.b16 %v109
  %v394 = vunpack.c.l.b16 %v110
  %v395 = vunpack.c.l.b16 %v111
  %v396 = vunpack.c.l.b16 %v112
  %v397 = vunpack.c.l.b16 %v113
  %v398 = vunpack.c.l.b16 %v114
  %v399 = vunpack.c.l.b16 %v115
  %v400 = vunpack.c.l.b16 %v116
  %v401 = vunpack.c.l.b16 %v117
  %v402 = vunpack.c.l.b16 %v118
  %v403 = vunpack.c.l.b16 %v119
  %v404 = vunpack.c.l.b16 %v120
  %v405 = vunpack.c.l.b16 %v121
  %v406 = vunpack.c.l.b16 %v122
  %v407 = vunpack.c.l.b16 %v123
  %v408 = vunpack.c.l.b16 %v124
  %v409 = vunpack.c.l.b16 %v125
  %v410 = vunpack.c.l.b16 %v126
  %v411 = vunpack.c.l.b16 %v127
  %v412 = vunpack.c.l.b16 %v128
  %v413 = vunpack.c.l.b16 %v129
  %v414 = vunpack.c.l.b16 %v130
  %v415 = vunpack.c.l.b16 %v131
  %v416 = vunpack.c.l.b16 %v132
  %v417 = vunpack.c.l.b16 %v133
  %v418 = vunpack.c.l.b16 %v134
  %v419 = vunpack.c.l.b16 %v135
  %v420 = vunpack.c.l.b16 %v136
  %v421 = vunpack.c.l.b16 %v137
  %v422 = vunpack.c.l.b16 %v138
  %v423 = vunpack.c.l.b16 %v139
  %v424 = vunpack.c.l.b16 %v140
  %v425 = vunpack.c.l.b16 %v141
  %v426 = vunpack.c.l.b16 %v142
  %v427 = vpack.c.b16 %v300, %v299
  %v428 = vpack.c.b16 %v302, %v301
  %v429 = vpack.c.b16 %v304, %v303
  %v430 = vpack.c.b16 %v306, %v305
  %v431 = vpack.c.b16 %v308, %v307
  %v432 = vpack.c.b16 %v310, %v309
  %v433 = vpack.c.b16 %v312, %v311
  %v434 = vpack.c.b16 %v314, %v313
  %v435 = vpack.c.b16 %v316, %v315
  %v436 = vpack.c.b16 %v318, %v317
  %v437 = vpack.c.b16 %v320, %v319
  %v438 = vpack.c.b16 %v322, %v321
  %v439 = vpack.c.b16 %v324, %v323
  %v440 = vpack.c.b16 %v326, %v325
  %v441 = vpack.c.b16 %v328, %v327
  %v442 = vpack.c.b16 %v330, %v329
  %v443 = vpack.c.b16 %v332, %v331
  %v444 = vpack.c.b16 %v334, %v333
  %v445 = vpack.c.b16 %v336, %v335
  %v446 = vpack.c.b16 %v338, %v337
  %v447 = vpack.c.b16 %v340, %v339
  %v448 = vpack.c.b16 %v342, %v341
  %v449 = vpack.c.b16 %v344, %v343
  %v450 = vpack.c.b16 %v346, %v345
  %v451 = vpack.c.b16 %v348, %v347
  %v452 = vpack.c.b16 %v350, %v349
  %v453 = vpack.c.b16 %v352, %v351
  %v454 = vpack.c.b16 %v354, %v353
  %v455 = vpack.c.b16 %v356, %v355
  %v456 = vpack.c.b16 %v358, %v357
  %v457 = vpack.c.b16 %v360, %v359
  %v458 = vpack.c.b16 %v362, %v361
  %v459 = vpack.c.b16 %v364, %v363
  %v460 = vpack.c.b16 %v366, %v365
  %v461 = vpack.c.b16 %v368, %v367
  %v462 = vpack.c.b16 %v370, %v369
  %v463 = vpack.c.b16 %v372, %v371
  %v464 = vpack.c.b16 %v374, %v373
  %v465 = vpack.c.b16 %v376, %v375
  %v466 = vpack.c.b16 %v378, %v377
  %v467 = vpack.c.b16 %v380, %v379
  %v468 = vpack.c.b16 %v382, %v381
  %v469 = vpack.c.b16 %v384, %v383
  %v470 = vpack.c.b16 %v386, %v385
  %v471 = vpack.c.b16 %v388, %v387
  %v472 = vpack.c.b16 %v390, %v389
  %v473 = vpack.c.b16 %v392, %v391
  %v474 = vpack.c.b16 %v394, %v393
  %v475 = vpack.c.b16 %v396, %v395
  %v476 = vpack.c.b16 %v398, %v397
  %v477 = vpack.c.b16 %v400, %v399
  %v478 = vpack.c.b16 %v402, %v401
  %v479 = vpack.c.b16 %v404, %v403
  %v480 = vpack.c.b16 %v406, %v405
  %v481 = vpack.c.b16 %v408, %v407
  %v482 = vpack.c.b16 %v410, %v409
  %v483 = vpack.c.b16 %v412, %v411
  %v484 = vpack.c.b16 %v414, %v413
  %v485 = vpack.c.b16 %v416, %v415
  %v486 = vpack.c.b16 %v418, %v417
  %v487 = vpack.c.b16 %v420, %v419
  %v488 = vpack.c.b16 %v422, %v421
  %v489 = vpack.c.b16 %v424, %v423
  %v490 = vpack.c.b16 %v426, %v425
  %555 = vmatpush.bf16.msra.mxu0 %v434
  %556 = vmatpush.bf16.msra.mxu0 %v433
  %557 = vmatpush.bf16.msra.mxu0 %v432
  %558 = vmatpush.bf16.msra.mxu0 %v431
  %559 = vmatpush.bf16.msra.mxu0 %v430
  %560 = vmatpush.bf16.msra.mxu0 %v429
  %561 = vmatpush.bf16.msra.mxu0 %v428
  %562 = vmatpush.bf16.msra.mxu0 %v427
  %563 = vmatmul.bf16.gmra.mxu0 %v155
  %v564 = vpop.f32.mrf.mxu0
  %v565 = vadd.f32 0.0, %v564
  %v566 = vpop.f32.mrf.mxu0
  %567 = vdwg.mxu0
  %568 = vmatpush.bf16.msra.mxu0 %v442
  %569 = vmatpush.bf16.msra.mxu0 %v441
  %570 = vmatpush.bf16.msra.mxu0 %v440
  %571 = vmatpush.bf16.msra.mxu0 %v439
  %572 = vmatpush.bf16.msra.mxu0 %v438
  %573 = vmatpush.bf16.msra.mxu0 %v437
  %574 = vmatpush.bf16.msra.mxu0 %v436
  %575 = vmatpush.bf16.msra.mxu0 %v435
  %576 = vmatmul.bf16.gmra.mxu0 %v156
  %v577 = vpop.f32.mrf.mxu0
  %v578 = vadd.f32 %v565, %v577
  %v579 = vpop.f32.mrf.mxu0
  %580 = vdwg.mxu0
  %581 = vmatpush.bf16.msra.mxu0 %v450
  %582 = vmatpush.bf16.msra.mxu0 %v449
  %583 = vmatpush.bf16.msra.mxu0 %v448
  %584 = vmatpush.bf16.msra.mxu0 %v447
  %585 = vmatpush.bf16.msra.mxu0 %v446
  %586 = vmatpush.bf16.msra.mxu0 %v445
  %587 = vmatpush.bf16.msra.mxu0 %v444
  %588 = vmatpush.bf16.msra.mxu0 %v443
  %589 = vmatmul.bf16.gmra.mxu0 %v157
  %v590 = vpop.f32.mrf.mxu0
  %v591 = vadd.f32 %v578, %v590
  %v592 = vpop.f32.mrf.mxu0
  %593 = vdwg.mxu0
  %594 = vmatpush.bf16.msra.mxu0 %v458
  %595 = vmatpush.bf16.msra.mxu0 %v457
  %596 = vmatpush.bf16.msra.mxu0 %v456
  %597 = vmatpush.bf16.msra.mxu0 %v455
  %598 = vmatpush.bf16.msra.mxu0 %v454
  %599 = vmatpush.bf16.msra.mxu0 %v453
  %600 = vmatpush.bf16.msra.mxu0 %v452
  %601 = vmatpush.bf16.msra.mxu0 %v451
  %602 = vmatmul.bf16.gmra.mxu0 %v158
  %v603 = vpop.f32.mrf.mxu0
  %v604 = vadd.f32 %v591, %v603
  %v605 = vpop.f32.mrf.mxu0
  %606 = vdwg.mxu0
  %607 = vmatpush.bf16.msra.mxu0 %v466
  %608 = vmatpush.bf16.msra.mxu0 %v465
  %609 = vmatpush.bf16.msra.mxu0 %v464
  %610 = vmatpush.bf16.msra.mxu0 %v463
  %611 = vmatpush.bf16.msra.mxu0 %v462
  %612 = vmatpush.bf16.msra.mxu0 %v461
  %613 = vmatpush.bf16.msra.mxu0 %v460
  %614 = vmatpush.bf16.msra.mxu0 %v459
  %615 = vmatmul.bf16.gmra.mxu0 %v159
  %v616 = vpop.f32.mrf.mxu0
  %v617 = vadd.f32 %v604, %v616
  %v618 = vpop.f32.mrf.mxu0
  %619 = vdwg.mxu0
  %620 = vmatpush.bf16.msra.mxu0 %v474
  %621 = vmatpush.bf16.msra.mxu0 %v473
  %622 = vmatpush.bf16.msra.mxu0 %v472
  %623 = vmatpush.bf16.msra.mxu0 %v471
  %624 = vmatpush.bf16.msra.mxu0 %v470
  %625 = vmatpush.bf16.msra.mxu0 %v469
  %626 = vmatpush.bf16.msra.mxu0 %v468
  %627 = vmatpush.bf16.msra.mxu0 %v467
  %628 = vmatmul.bf16.gmra.mxu0 %v160
  %v629 = vpop.f32.mrf.mxu0
  %v630 = vadd.f32 %v617, %v629
  %v631 = vpop.f32.mrf.mxu0
  %632 = vdwg.mxu0
  %633 = vmatpush.bf16.msra.mxu0 %v482
  %634 = vmatpush.bf16.msra.mxu0 %v481
  %635 = vmatpush.bf16.msra.mxu0 %v480
  %636 = vmatpush.bf16.msra.mxu0 %v479
  %637 = vmatpush.bf16.msra.mxu0 %v478
  %638 = vmatpush.bf16.msra.mxu0 %v477
  %639 = vmatpush.bf16.msra.mxu0 %v476
  %640 = vmatpush.bf16.msra.mxu0 %v475
  %641 = vmatmul.bf16.gmra.mxu0 %v161
  %v642 = vpop.f32.mrf.mxu0
  %v643 = vadd.f32 %v630, %v642
  %v644 = vpop.f32.mrf.mxu0
  %645 = vdwg.mxu0
  %646 = vmatpush.bf16.msra.mxu0 %v490
  %647 = vmatpush.bf16.msra.mxu0 %v489
  %648 = vmatpush.bf16.msra.mxu0 %v488
  %649 = vmatpush.bf16.msra.mxu0 %v487
  %650 = vmatpush.bf16.msra.mxu0 %v486
  %651 = vmatpush.bf16.msra.mxu0 %v485
  %652 = vmatpush.bf16.msra.mxu0 %v484
  %653 = vmatpush.bf16.msra.mxu0 %v483
  %654 = vmatmul.bf16.gmra.mxu0 %v162
  %v655 = vpop.f32.mrf.mxu0
  %v656 = vadd.f32 %v643, %v655
  %v657 = vpop.f32.mrf.mxu0
  %658 = vdwg.mxu0
  %v659 = vmul.f32 %v656, 0.2
  %v660 = vmax.f32 %v656, %v659
  %v661 = vpack.c.bf16 %v660, %v660
  %662 = vst [vmem:[%s2] sm:$0xf] %v661
  // Predicated region
  $region10: #{discriminator_unet_forward.13} parent=0 // pred_check
    _
  $region11: #{discriminator_unet_forward.13} parent=0 // pred_check_branch
    %664 = sbr.rel (0) target = $region13
  $region12: #{discriminator_unet_forward.13} parent=0 // pred_region
    _
  $region13: #{discriminator_unet_forward.13} parent=0 // pred_fallthru
    _
  // Predicated region
  $region14: #{discriminator_unet_forward.13} parent=0 // pred_check
    _
  $region15: #{discriminator_unet_forward.13} parent=0 // pred_check_branch
    %666 = sbr.rel (0) target = $region17
  $region16: #{discriminator_unet_forward.13} parent=0 // pred_region
    _
  $region17: #{discriminator_unet_forward.13} parent=0 // pred_fallthru
    _

// kernel: discriminator_unet_forward.14
$region0: #{discriminator_unet_forward.14}
  #allocation0 [shape = 'u32[]', space=smem, size = 0x4, offset = 0x4, fixed_abs, tag = 'smem constant byte address 0x4 - core index']
  #allocation1 [shape = 'u32[72,128]{1,0:T(1,128)}', space=vmem, size = 0x9000, scoped, tag = 'internal scratch']
  %s0 = inlined_call_operand.vmem [shape: bf16[32,1152], index: 0, kind: input, shape index: {}]
  %s1 = inlined_call_operand.vmem [shape: bf16[1152,128], index: 1, kind: input, shape index: {}]
  %s2 = inlined_call_operand.vmem [shape: bf16[32,128], index: 2, kind: input, shape index: {}]
  %s3 = inlined_call_operand.vmem [shape: bf16[32,128], index: 3, kind: output, shape index: {}]
  %s4 = sld [smem:[#allocation0]]
  $region22: #{discriminator_unet_forward.14} parent=0
    _
  %s6 = ssub.s32 1, %s4
  %s7 = scalar_select 0, %s6, %s4
  // Predicated region
  $region2: #{discriminator_unet_forward.14} parent=0 // pred_check
    _
  $region3: #{discriminator_unet_forward.14} parent=0 // pred_check_branch
    %9 = sbr.rel (0) target = $region5
  $region4: #{discriminator_unet_forward.14} parent=0 // pred_region
    _
  $region5: #{discriminator_unet_forward.14} parent=0 // pred_fallthru
    _
  // Predicated region
  $region6: #{discriminator_unet_forward.14} parent=0 // pred_check
    _
  $region7: #{discriminator_unet_forward.14} parent=0 // pred_check_branch
    %11 = sbr.rel (0) target = $region9
  $region8: #{discriminator_unet_forward.14} parent=0 // pred_region
    _
  $region9: #{discriminator_unet_forward.14} parent=0 // pred_fallthru
    _
  // Predicated region
  $region10: #{discriminator_unet_forward.14} parent=0 // pred_check
    _
  $region11: #{discriminator_unet_forward.14} parent=0 // pred_check_branch
    %13 = sbr.rel (0) target = $region13
  $region12: #{discriminator_unet_forward.14} parent=0 // pred_region
    _
  $region13: #{discriminator_unet_forward.14} parent=0 // pred_fallthru
    _
  %v14 = vld [vmem:[%s0] sm:$0xff]
  %v15 = vld [vmem:[%s0 + $0x8] sm:$0xff]
  %v16 = vld [vmem:[%s0 + $0x10] sm:$0xff]
  %v17 = vld [vmem:[%s0 + $0x18] sm:$0xff]
  %v18 = vld [vmem:[%s0 + $0x20] sm:$0xf]
  %v19 = vld [vmem:[%s0 + $0x24] sm:$0xff]
  %v20 = vld [vmem:[%s0 + $0x2c] sm:$0xff]
  %v21 = vld [vmem:[%s0 + $0x34] sm:$0xff]
  %v22 = vld [vmem:[%s0 + $0x3c] sm:$0xff]
  %v23 = vld [vmem:[%s0 + $0x44] sm:$0xf]
  %v24 = vld [vmem:[%s0 + $0x48] sm:$0xff]
  %v25 = vld [vmem:[%s0 + $0x50] sm:$0xff]
  %v26 = vld [vmem:[%s0 + $0x58] sm:$0xff]
  %v27 = vld [vmem:[%s0 + $0x60] sm:$0xff]
  %v28 = vld [vmem:[%s0 + $0x68] sm:$0xf]
  %v29 = vld [vmem:[%s0 + $0x6c] sm:$0xff]
  %v30 = vld [vmem:[%s0 + $0x74] sm:$0xff]
  %v31 = vld [vmem:[%s0 + $0x7c] sm:$0xff]
  %v32 = vld [vmem:[%s0 + $0x84] sm:$0xff]
  %v33 = vld [vmem:[%s0 + $0x8c] sm:$0xf]
  %v34 = vld [vmem:[%s1] sm:$0xf]
  %v35 = vld [vmem:[%s1 + $0x4] sm:$0xf]
  %v36 = vld [vmem:[%s1 + $0x8] sm:$0xf]
  %v37 = vld [vmem:[%s1 + $0xc] sm:$0xf]
  %v38 = vld [vmem:[%s1 + $0x10] sm:$0xf]
  %v39 = vld [vmem:[%s1 + $0x14] sm:$0xf]
  %v40 = vld [vmem:[%s1 + $0x18] sm:$0xf]
  %v41 = vld [vmem:[%s1 + $0x1c] sm:$0xf]
  %v42 = vld [vmem:[%s1 + $0x20] sm:$0xf]
  %v43 = vld [vmem:[%s1 + $0x24] sm:$0xf]
  %v44 = vld [vmem:[%s1 + $0x28] sm:$0xf]
  %v45 = vld [vmem:[%s1 + $0x2c] sm:$0xf]
  %v46 = vld [vmem:[%s1 + $0x30] sm:$0xf]
  %v47 = vld [vmem:[%s1 + $0x34] sm:$0xf]
  %v48 = vld [vmem:[%s1 + $0x38] sm:$0xf]
  %v49 = vld [vmem:[%s1 + $0x3c] sm:$0xf]
  %v50 = vld [vmem:[%s1 + $0x40] sm:$0xf]
  %v51 = vld [vmem:[%s1 + $0x44] sm:$0xf]
  %v52 = vld [vmem:[%s1 + $0x48] sm:$0xf]
  %v53 = vld [vmem:[%s1 + $0x4c] sm:$0xf]
  %v54 = vld [vmem:[%s1 + $0x50] sm:$0xf]
  %v55 = vld [vmem:[%s1 + $0x54] sm:$0xf]
  %v56 = vld [vmem:[%s1 + $0x58] sm:$0xf]
  %v57 = vld [vmem:[%s1 + $0x5c] sm:$0xf]
  %v58 = vld [vmem:[%s1 + $0x60] sm:$0xf]
  %v59 = vld [vmem:[%s1 + $0x64] sm:$0xf]
  %v60 = vld [vmem:[%s1 + $0x68] sm:$0xf]
  %v61 = vld [vmem:[%s1 + $0x6c] sm:$0xf]
  %v62 = vld [vmem:[%s1 + $0x70] sm:$0xf]
  %v63 = vld [vmem:[%s1 + $0x74] sm:$0xf]
  %v64 = vld [vmem:[%s1 + $0x78] sm:$0xf]
  %v65 = vld [vmem:[%s1 + $0x7c] sm:$0xf]
  %v66 = vld [vmem:[%s1 + $0x80] sm:$0xf]
  %v67 = vld [vmem:[%s1 + $0x84] sm:$0xf]
  %v68 = vld [vmem:[%s1 + $0x88] sm:$0xf]
  %v69 = vld [vmem:[%s1 + $0x8c] sm:$0xf]
  %v70 = vld [vmem:[%s1 + $0x90] sm:$0xf]
  %v71 = vld [vmem:[%s1 + $0x94] sm:$0xf]
  %v72 = vld [vmem:[%s1 + $0x98] sm:$0xf]
  %v73 = vld [vmem:[%s1 + $0x9c] sm:$0xf]
  %v74 = vld [vmem:[%s1 + $0xa0] sm:$0xf]
  %v75 = vld [vmem:[%s1 + $0xa4] sm:$0xf]
  %v76 = vld [vmem:[%s1 + $0xa8] sm:$0xf]
  %v77 = vld [vmem:[%s1 + $0xac] sm:$0xf]
  %v78 = vld [vmem:[%s1 + $0xb0] sm:$0xf]
  %v79 = vld [vmem:[%s1 + $0xb4] sm:$0xf]
  %v80 = vld [vmem:[%s1 + $0xb8] sm:$0xf]
  %v81 = vld [vmem:[%s1 + $0xbc] sm:$0xf]
  %v82 = vld [vmem:[%s1 + $0xc0] sm:$0xf]
  %v83 = vld [vmem:[%s1 + $0xc4] sm:$0xf]
  %v84 = vld [vmem:[%s1 + $0xc8] sm:$0xf]
  %v85 = vld [vmem:[%s1 + $0xcc] sm:$0xf]
  %v86 = vld [vmem:[%s1 + $0xd0] sm:$0xf]
  %v87 = vld [vmem:[%s1 + $0xd4] sm:$0xf]
  %v88 = vld [vmem:[%s1 + $0xd8] sm:$0xf]
  %v89 = vld [vmem:[%s1 + $0xdc] sm:$0xf]
  %v90 = vld [vmem:[%s1 + $0xe0] sm:$0xf]
  %v91 = vld [vmem:[%s1 + $0xe4] sm:$0xf]
  %v92 = vld [vmem:[%s1 + $0xe8] sm:$0xf]
  %v93 = vld [vmem:[%s1 + $0xec] sm:$0xf]
  %v94 = vld [vmem:[%s1 + $0xf0] sm:$0xf]
  %v95 = vld [vmem:[%s1 + $0xf4] sm:$0xf]
  %v96 = vld [vmem:[%s1 + $0xf8] sm:$0xf]
  %v97 = vld [vmem:[%s1 + $0xfc] sm:$0xf]
  %v98 = vld [vmem:[%s1 + $0x100] sm:$0xf]
  %v99 = vld [vmem:[%s1 + $0x104] sm:$0xf]
  %v100 = vld [vmem:[%s1 + $0x108] sm:$0xf]
  %v101 = vld [vmem:[%s1 + $0x10c] sm:$0xf]
  %v102 = vld [vmem:[%s1 + $0x110] sm:$0xf]
  %v103 = vld [vmem:[%s1 + $0x114] sm:$0xf]
  %v104 = vld [vmem:[%s1 + $0x118] sm:$0xf]
  %v105 = vld [vmem:[%s1 + $0x11c] sm:$0xf]
  %v106 = vld [vmem:[%s1 + $0x120] sm:$0xf]
  %v107 = vld [vmem:[%s1 + $0x124] sm:$0xf]
  %v108 = vld [vmem:[%s1 + $0x128] sm:$0xf]
  %v109 = vld [vmem:[%s1 + $0x12c] sm:$0xf]
  %v110 = vld [vmem:[%s1 + $0x130] sm:$0xf]
  %v111 = vld [vmem:[%s1 + $0x134] sm:$0xf]
  %v112 = vld [vmem:[%s1 + $0x138] sm:$0xf]
  %v113 = vld [vmem:[%s1 + $0x13c] sm:$0xf]
  %v114 = vld [vmem:[%s1 + $0x140] sm:$0xf]
  %v115 = vld [vmem:[%s1 + $0x144] sm:$0xf]
  %v116 = vld [vmem:[%s1 + $0x148] sm:$0xf]
  %v117 = vld [vmem:[%s1 + $0x14c] sm:$0xf]
  %v118 = vld [vmem:[%s1 + $0x150] sm:$0xf]
  %v119 = vld [vmem:[%s1 + $0x154] sm:$0xf]
  %v120 = vld [vmem:[%s1 + $0x158] sm:$0xf]
  %v121 = vld [vmem:[%s1 + $0x15c] sm:$0xf]
  %v122 = vld [vmem:[%s1 + $0x160] sm:$0xf]
  %v123 = vld [vmem:[%s1 + $0x164] sm:$0xf]
  %v124 = vld [vmem:[%s1 + $0x168] sm:$0xf]
  %v125 = vld [vmem:[%s1 + $0x16c] sm:$0xf]
  %v126 = vld [vmem:[%s1 + $0x170] sm:$0xf]
  %v127 = vld [vmem:[%s1 + $0x174] sm:$0xf]
  %v128 = vld [vmem:[%s1 + $0x178] sm:$0xf]
  %v129 = vld [vmem:[%s1 + $0x17c] sm:$0xf]
  %v130 = vld [vmem:[%s1 + $0x180] sm:$0xf]
  %v131 = vld [vmem:[%s1 + $0x184] sm:$0xf]
  %v132 = vld [vmem:[%s1 + $0x188] sm:$0xf]
  %v133 = vld [vmem:[%s1 + $0x18c] sm:$0xf]
  %v134 = vld [vmem:[%s1 + $0x190] sm:$0xf]
  %v135 = vld [vmem:[%s1 + $0x194] sm:$0xf]
  %v136 = vld [vmem:[%s1 + $0x198] sm:$0xf]
  %v137 = vld [vmem:[%s1 + $0x19c] sm:$0xf]
  %v138 = vld [vmem:[%s1 + $0x1a0] sm:$0xf]
  %v139 = vld [vmem:[%s1 + $0x1a4] sm:$0xf]
  %v140 = vld [vmem:[%s1 + $0x1a8] sm:$0xf]
  %v141 = vld [vmem:[%s1 + $0x1ac] sm:$0xf]
  %v142 = vld [vmem:[%s1 + $0x1b0] sm:$0xf]
  %v143 = vld [vmem:[%s1 + $0x1b4] sm:$0xf]
  %v144 = vld [vmem:[%s1 + $0x1b8] sm:$0xf]
  %v145 = vld [vmem:[%s1 + $0x1bc] sm:$0xf]
  %v146 = vld [vmem:[%s1 + $0x1c0] sm:$0xf]
  %v147 = vld [vmem:[%s1 + $0x1c4] sm:$0xf]
  %v148 = vld [vmem:[%s1 + $0x1c8] sm:$0xf]
  %v149 = vld [vmem:[%s1 + $0x1cc] sm:$0xf]
  %v150 = vld [vmem:[%s1 + $0x1d0] sm:$0xf]
  %v151 = vld [vmem:[%s1 + $0x1d4] sm:$0xf]
  %v152 = vld [vmem:[%s1 + $0x1d8] sm:$0xf]
  %v153 = vld [vmem:[%s1 + $0x1dc] sm:$0xf]
  %v154 = vld [vmem:[%s1 + $0x1e0] sm:$0xf]
  %v155 = vld [vmem:[%s1 + $0x1e4] sm:$0xf]
  %v156 = vld [vmem:[%s1 + $0x1e8] sm:$0xf]
  %v157 = vld [vmem:[%s1 + $0x1ec] sm:$0xf]
  %v158 = vld [vmem:[%s1 + $0x1f0] sm:$0xf]
  %v159 = vld [vmem:[%s1 + $0x1f4] sm:$0xf]
  %v160 = vld [vmem:[%s1 + $0x1f8] sm:$0xf]
  %v161 = vld [vmem:[%s1 + $0x1fc] sm:$0xf]
  %v162 = vld [vmem:[%s1 + $0x200] sm:$0xf]
  %v163 = vld [vmem:[%s1 + $0x204] sm:$0xf]
  %v164 = vld [vmem:[%s1 + $0x208] sm:$0xf]
  %v165 = vld [vmem:[%s1 + $0x20c] sm:$0xf]
  %v166 = vld [vmem:[%s1 + $0x210] sm:$0xf]
  %v167 = vld [vmem:[%s1 + $0x214] sm:$0xf]
  %v168 = vld [vmem:[%s1 + $0x218] sm:$0xf]
  %v169 = vld [vmem:[%s1 + $0x21c] sm:$0xf]
  %v170 = vld [vmem:[%s1 + $0x220] sm:$0xf]
  %v171 = vld [vmem:[%s1 + $0x224] sm:$0xf]
  %v172 = vld [vmem:[%s1 + $0x228] sm:$0xf]
  %v173 = vld [vmem:[%s1 + $0x22c] sm:$0xf]
  %v174 = vld [vmem:[%s1 + $0x230] sm:$0xf]
  %v175 = vld [vmem:[%s1 + $0x234] sm:$0xf]
  %v176 = vld [vmem:[%s1 + $0x238] sm:$0xf]
  %v177 = vld [vmem:[%s1 + $0x23c] sm:$0xf]
  %v198 = vunpack.c.l.b16 %v14
  %v199 = vunpack.c.h.b16 %v14
  %v200 = vunpack.c.l.b16 %v15
  %v201 = vunpack.c.h.b16 %v15
  %v202 = vunpack.c.l.b16 %v16
  %v203 = vunpack.c.h.b16 %v16
  %v204 = vunpack.c.l.b16 %v17
  %v205 = vunpack.c.h.b16 %v17
  %v206 = vunpack.c.l.b16 %v18
  %v207 = vunpack.c.l.b16 %v19
  %v208 = vunpack.c.h.b16 %v19
  %v209 = vunpack.c.l.b16 %v20
  %v210 = vunpack.c.h.b16 %v20
  %v211 = vunpack.c.l.b16 %v21
  %v212 = vunpack.c.h.b16 %v21
  %v213 = vunpack.c.l.b16 %v22
  %v214 = vunpack.c.h.b16 %v22
  %v215 = vunpack.c.l.b16 %v23
  %v216 = vunpack.c.l.b16 %v24
  %v217 = vunpack.c.h.b16 %v24
  %v218 = vunpack.c.l.b16 %v25
  %v219 = vunpack.c.h.b16 %v25
  %v220 = vunpack.c.l.b16 %v26
  %v221 = vunpack.c.h.b16 %v26
  %v222 = vunpack.c.l.b16 %v27
  %v223 = vunpack.c.h.b16 %v27
  %v224 = vunpack.c.l.b16 %v28
  %v225 = vunpack.c.l.b16 %v29
  %v226 = vunpack.c.h.b16 %v29
  %v227 = vunpack.c.l.b16 %v30
  %v228 = vunpack.c.h.b16 %v30
  %v229 = vunpack.c.l.b16 %v31
  %v230 = vunpack.c.h.b16 %v31
  %v231 = vunpack.c.l.b16 %v32
  %v232 = vunpack.c.h.b16 %v32
  %v233 = vunpack.c.l.b16 %v33
  %v234 = vpack.c.b16 %v207, %v198
  %v235 = vpack.c.b16 %v208, %v199
  %v236 = vpack.c.b16 %v209, %v200
  %v237 = vpack.c.b16 %v210, %v201
  %v238 = vpack.c.b16 %v211, %v202
  %v239 = vpack.c.b16 %v212, %v203
  %v240 = vpack.c.b16 %v213, %v204
  %v241 = vpack.c.b16 %v214, %v205
  %v242 = vpack.c.b16 %v215, %v206
  %v243 = vpack.c.b16 %v225, %v216
  %v244 = vpack.c.b16 %v226, %v217
  %v245 = vpack.c.b16 %v227, %v218
  %v246 = vpack.c.b16 %v228, %v219
  %v247 = vpack.c.b16 %v229, %v220
  %v248 = vpack.c.b16 %v230, %v221
  %v249 = vpack.c.b16 %v231, %v222
  %v250 = vpack.c.b16 %v232, %v223
  %v251 = vpack.c.b16 %v233, %v224
  %v414 = vunpack.c.l.b16 %v34
  %v415 = vunpack.c.l.b16 %v35
  %v416 = vunpack.c.l.b16 %v36
  %v417 = vunpack.c.l.b16 %v37
  %v418 = vunpack.c.l.b16 %v38
  %v419 = vunpack.c.l.b16 %v39
  %v420 = vunpack.c.l.b16 %v40
  %v421 = vunpack.c.l.b16 %v41
  %v422 = vunpack.c.l.b16 %v42
  %v423 = vunpack.c.l.b16 %v43
  %v424 = vunpack.c.l.b16 %v44
  %v425 = vunpack.c.l.b16 %v45
  %v426 = vunpack.c.l.b16 %v46
  %v427 = vunpack.c.l.b16 %v47
  %v428 = vunpack.c.l.b16 %v48
  %v429 = vunpack.c.l.b16 %v49
  %v430 = vunpack.c.l.b16 %v50
  %v431 = vunpack.c.l.b16 %v51
  %v432 = vunpack.c.l.b16 %v52
  %v433 = vunpack.c.l.b16 %v53
  %v434 = vunpack.c.l.b16 %v54
  %v435 = vunpack.c.l.b16 %v55
  %v436 = vunpack.c.l.b16 %v56
  %v437 = vunpack.c.l.b16 %v57
  %v438 = vunpack.c.l.b16 %v58
  %v439 = vunpack.c.l.b16 %v59
  %v440 = vunpack.c.l.b16 %v60
  %v441 = vunpack.c.l.b16 %v61
  %v442 = vunpack.c.l.b16 %v62
  %v443 = vunpack.c.l.b16 %v63
  %v444 = vunpack.c.l.b16 %v64
  %v445 = vunpack.c.l.b16 %v65
  %v446 = vunpack.c.l.b16 %v66
  %v447 = vunpack.c.l.b16 %v67
  %v448 = vunpack.c.l.b16 %v68
  %v449 = vunpack.c.l.b16 %v69
  %v450 = vunpack.c.l.b16 %v70
  %v451 = vunpack.c.l.b16 %v71
  %v452 = vunpack.c.l.b16 %v72
  %v453 = vunpack.c.l.b16 %v73
  %v454 = vunpack.c.l.b16 %v74
  %v455 = vunpack.c.l.b16 %v75
  %v456 = vunpack.c.l.b16 %v76
  %v457 = vunpack.c.l.b16 %v77
  %v458 = vunpack.c.l.b16 %v78
  %v459 = vunpack.c.l.b16 %v79
  %v460 = vunpack.c.l.b16 %v80
  %v461 = vunpack.c.l.b16 %v81
  %v462 = vunpack.c.l.b16 %v82
  %v463 = vunpack.c.l.b16 %v83
  %v464 = vunpack.c.l.b16 %v84
  %v465 = vunpack.c.l.b16 %v85
  %v466 = vunpack.c.l.b16 %v86
  %v467 = vunpack.c.l.b16 %v87
  %v468 = vunpack.c.l.b16 %v88
  %v469 = vunpack.c.l.b16 %v89
  %v470 = vunpack.c.l.b16 %v90
  %v471 = vunpack.c.l.b16 %v91
  %v472 = vunpack.c.l.b16 %v92
  %v473 = vunpack.c.l.b16 %v93
  %v474 = vunpack.c.l.b16 %v94
  %v475 = vunpack.c.l.b16 %v95
  %v476 = vunpack.c.l.b16 %v96
  %v477 = vunpack.c.l.b16 %v97
  %v478 = vunpack.c.l.b16 %v98
  %v479 = vunpack.c.l.b16 %v99
  %v480 = vunpack.c.l.b16 %v100
  %v481 = vunpack.c.l.b16 %v101
  %v482 = vunpack.c.l.b16 %v102
  %v483 = vunpack.c.l.b16 %v103
  %v484 = vunpack.c.l.b16 %v104
  %v485 = vunpack.c.l.b16 %v105
  %v486 = vunpack.c.l.b16 %v106
  %v487 = vunpack.c.l.b16 %v107
  %v488 = vunpack.c.l.b16 %v108
  %v489 = vunpack.c.l.b16 %v109
  %v490 = vunpack.c.l.b16 %v110
  %v491 = vunpack.c.l.b16 %v111
  %v492 = vunpack.c.l.b16 %v112
  %v493 = vunpack.c.l.b16 %v113
  %v494 = vunpack.c.l.b16 %v114
  %v495 = vunpack.c.l.b16 %v115
  %v496 = vunpack.c.l.b16 %v116
  %v497 = vunpack.c.l.b16 %v117
  %v498 = vunpack.c.l.b16 %v118
  %v499 = vunpack.c.l.b16 %v119
  %v500 = vunpack.c.l.b16 %v120
  %v501 = vunpack.c.l.b16 %v121
  %v502 = vunpack.c.l.b16 %v122
  %v503 = vunpack.c.l.b16 %v123
  %v504 = vunpack.c.l.b16 %v124
  %v505 = vunpack.c.l.b16 %v125
  %v506 = vunpack.c.l.b16 %v126
  %v507 = vunpack.c.l.b16 %v127
  %v508 = vunpack.c.l.b16 %v128
  %v509 = vunpack.c.l.b16 %v129
  %v510 = vunpack.c.l.b16 %v130
  %v511 = vunpack.c.l.b16 %v131
  %v512 = vunpack.c.l.b16 %v132
  %v513 = vunpack.c.l.b16 %v133
  %v514 = vunpack.c.l.b16 %v134
  %v515 = vunpack.c.l.b16 %v135
  %v516 = vunpack.c.l.b16 %v136
  %v517 = vunpack.c.l.b16 %v137
  %v518 = vunpack.c.l.b16 %v138
  %v519 = vunpack.c.l.b16 %v139
  %v520 = vunpack.c.l.b16 %v140
  %v521 = vunpack.c.l.b16 %v141
  %v522 = vunpack.c.l.b16 %v142
  %v523 = vunpack.c.l.b16 %v143
  %v524 = vunpack.c.l.b16 %v144
  %v525 = vunpack.c.l.b16 %v145
  %v526 = vunpack.c.l.b16 %v146
  %v527 = vunpack.c.l.b16 %v147
  %v528 = vunpack.c.l.b16 %v148
  %v529 = vunpack.c.l.b16 %v149
  %v530 = vunpack.c.l.b16 %v150
  %v531 = vunpack.c.l.b16 %v151
  %v532 = vunpack.c.l.b16 %v152
  %v533 = vunpack.c.l.b16 %v153
  %v534 = vunpack.c.l.b16 %v154
  %v535 = vunpack.c.l.b16 %v155
  %v536 = vunpack.c.l.b16 %v156
  %v537 = vunpack.c.l.b16 %v157
  %v538 = vunpack.c.l.b16 %v158
  %v539 = vunpack.c.l.b16 %v159
  %v540 = vunpack.c.l.b16 %v160
  %v541 = vunpack.c.l.b16 %v161
  %v542 = vunpack.c.l.b16 %v162
  %v543 = vunpack.c.l.b16 %v163
  %v544 = vunpack.c.l.b16 %v164
  %v545 = vunpack.c.l.b16 %v165
  %v546 = vunpack.c.l.b16 %v166
  %v547 = vunpack.c.l.b16 %v167
  %v548 = vunpack.c.l.b16 %v168
  %v549 = vunpack.c.l.b16 %v169
  %v550 = vunpack.c.l.b16 %v170
  %v551 = vunpack.c.l.b16 %v171
  %v552 = vunpack.c.l.b16 %v172
  %v553 = vunpack.c.l.b16 %v173
  %v554 = vunpack.c.l.b16 %v174
  %v555 = vunpack.c.l.b16 %v175
  %v556 = vunpack.c.l.b16 %v176
  %v557 = vunpack.c.l.b16 %v177
  %v558 = vpack.c.b16 %v415, %v414
  %v559 = vpack.c.b16 %v417, %v416
  %v560 = vpack.c.b16 %v419, %v418
  %v561 = vpack.c.b16 %v421, %v420
  %v562 = vpack.c.b16 %v423, %v422
  %v563 = vpack.c.b16 %v425, %v424
  %v564 = vpack.c.b16 %v427, %v426
  %v565 = vpack.c.b16 %v429, %v428
  %v566 = vpack.c.b16 %v431, %v430
  %v567 = vpack.c.b16 %v433, %v432
  %v568 = vpack.c.b16 %v435, %v434
  %v569 = vpack.c.b16 %v437, %v436
  %v570 = vpack.c.b16 %v439, %v438
  %v571 = vpack.c.b16 %v441, %v440
  %v572 = vpack.c.b16 %v443, %v442
  %v573 = vpack.c.b16 %v445, %v444
  %v574 = vpack.c.b16 %v447, %v446
  %v575 = vpack.c.b16 %v449, %v448
  %v576 = vpack.c.b16 %v451, %v450
  %v577 = vpack.c.b16 %v453, %v452
  %v578 = vpack.c.b16 %v455, %v454
  %v579 = vpack.c.b16 %v457, %v456
  %v580 = vpack.c.b16 %v459, %v458
  %v581 = vpack.c.b16 %v461, %v460
  %v582 = vpack.c.b16 %v463, %v462
  %v583 = vpack.c.b16 %v465, %v464
  %v584 = vpack.c.b16 %v467, %v466
  %v585 = vpack.c.b16 %v469, %v468
  %v586 = vpack.c.b16 %v471, %v470
  %v587 = vpack.c.b16 %v473, %v472
  %v588 = vpack.c.b16 %v475, %v474
  %v589 = vpack.c.b16 %v477, %v476
  %v590 = vpack.c.b16 %v479, %v478
  %v591 = vpack.c.b16 %v481, %v480
  %v592 = vpack.c.b16 %v483, %v482
  %v593 = vpack.c.b16 %v485, %v484
  %v594 = vpack.c.b16 %v487, %v486
  %v595 = vpack.c.b16 %v489, %v488
  %v596 = vpack.c.b16 %v491, %v490
  %v597 = vpack.c.b16 %v493, %v492
  %v598 = vpack.c.b16 %v495, %v494
  %v599 = vpack.c.b16 %v497, %v496
  %v600 = vpack.c.b16 %v499, %v498
  %v601 = vpack.c.b16 %v501, %v500
  %v602 = vpack.c.b16 %v503, %v502
  %v603 = vpack.c.b16 %v505, %v504
  %v604 = vpack.c.b16 %v507, %v506
  %v605 = vpack.c.b16 %v509, %v508
  %v606 = vpack.c.b16 %v511, %v510
  %v607 = vpack.c.b16 %v513, %v512
  %v608 = vpack.c.b16 %v515, %v514
  %v609 = vpack.c.b16 %v517, %v516
  %v610 = vpack.c.b16 %v519, %v518
  %v611 = vpack.c.b16 %v521, %v520
  %v612 = vpack.c.b16 %v523, %v522
  %v613 = vpack.c.b16 %v525, %v524
  %v614 = vpack.c.b16 %v527, %v526
  %v615 = vpack.c.b16 %v529, %v528
  %v616 = vpack.c.b16 %v531, %v530
  %v617 = vpack.c.b16 %v533, %v532
  %v618 = vpack.c.b16 %v535, %v534
  %v619 = vpack.c.b16 %v537, %v536
  %v620 = vpack.c.b16 %v539, %v538
  %v621 = vpack.c.b16 %v541, %v540
  %v622 = vpack.c.b16 %v543, %v542
  %v623 = vpack.c.b16 %v545, %v544
  %v624 = vpack.c.b16 %v547, %v546
  %v625 = vpack.c.b16 %v549, %v548
  %v626 = vpack.c.b16 %v551, %v550
  %v627 = vpack.c.b16 %v553, %v552
  %v628 = vpack.c.b16 %v555, %v554
  %v629 = vpack.c.b16 %v557, %v556
  %702 = vmatpush.bf16.msra.mxu0 %v565
  %703 = vmatpush.bf16.msra.mxu0 %v564
  %704 = vmatpush.bf16.msra.mxu0 %v563
  %705 = vmatpush.bf16.msra.mxu0 %v562
  %706 = vmatpush.bf16.msra.mxu0 %v561
  %707 = vmatpush.bf16.msra.mxu0 %v560
  %708 = vmatpush.bf16.msra.mxu0 %v559
  %709 = vmatpush.bf16.msra.mxu0 %v558
  %710 = vmatmul.bf16.gmra.mxu0 %v234
  %v711 = vpop.f32.mrf.mxu0
  %v712 = vadd.f32 0.0, %v711
  %v713 = vpop.f32.mrf.mxu0
  %v714 = vadd.f32 0.0, %v713
  %715 = vmatmul.bf16.gmra.mxu0 %v243
  %v716 = vpop.f32.mrf.mxu0
  %v717 = vadd.f32 0.0, %v716
  %v718 = vpop.f32.mrf.mxu0
  %v719 = vadd.f32 0.0, %v718
  %720 = vdwg.mxu0
  %721 = vmatpush.bf16.msra.mxu0 %v573
  %722 = vmatpush.bf16.msra.mxu0 %v572
  %723 = vmatpush.bf16.msra.mxu0 %v571
  %724 = vmatpush.bf16.msra.mxu0 %v570
  %725 = vmatpush.bf16.msra.mxu0 %v569
  %726 = vmatpush.bf16.msra.mxu0 %v568
  %727 = vmatpush.bf16.msra.mxu0 %v567
  %728 = vmatpush.bf16.msra.mxu0 %v566
  %729 = vmatmul.bf16.gmra.mxu0 %v235
  %v730 = vpop.f32.mrf.mxu0
  %v731 = vadd.f32 %v712, %v730
  %v732 = vpop.f32.mrf.mxu0
  %v733 = vadd.f32 %v714, %v732
  %734 = vmatmul.bf16.gmra.mxu0 %v244
  %v735 = vpop.f32.mrf.mxu0
  %v736 = vadd.f32 %v717, %v735
  %v737 = vpop.f32.mrf.mxu0
  %v738 = vadd.f32 %v719, %v737
  %739 = vdwg.mxu0
  %740 = vmatpush.bf16.msra.mxu0 %v581
  %741 = vmatpush.bf16.msra.mxu0 %v580
  %742 = vmatpush.bf16.msra.mxu0 %v579
  %743 = vmatpush.bf16.msra.mxu0 %v578
  %744 = vmatpush.bf16.msra.mxu0 %v577
  %745 = vmatpush.bf16.msra.mxu0 %v576
  %746 = vmatpush.bf16.msra.mxu0 %v575
  %747 = vmatpush.bf16.msra.mxu0 %v574
  %748 = vmatmul.bf16.gmra.mxu0 %v236
  %v749 = vpop.f32.mrf.mxu0
  %v750 = vadd.f32 %v731, %v749
  %v751 = vpop.f32.mrf.mxu0
  %v752 = vadd.f32 %v733, %v751
  %753 = vmatmul.bf16.gmra.mxu0 %v245
  %v754 = vpop.f32.mrf.mxu0
  %v755 = vadd.f32 %v736, %v754
  %v756 = vpop.f32.mrf.mxu0
  %v757 = vadd.f32 %v738, %v756
  %758 = vdwg.mxu0
  %759 = vmatpush.bf16.msra.mxu0 %v589
  %760 = vmatpush.bf16.msra.mxu0 %v588
  %761 = vmatpush.bf16.msra.mxu0 %v587
  %762 = vmatpush.bf16.msra.mxu0 %v586
  %763 = vmatpush.bf16.msra.mxu0 %v585
  %764 = vmatpush.bf16.msra.mxu0 %v584
  %765 = vmatpush.bf16.msra.mxu0 %v583
  %766 = vmatpush.bf16.msra.mxu0 %v582
  %767 = vmatmul.bf16.gmra.mxu0 %v237
  %v768 = vpop.f32.mrf.mxu0
  %v769 = vadd.f32 %v750, %v768
  %v770 = vpop.f32.mrf.mxu0
  %v771 = vadd.f32 %v752, %v770
  %772 = vmatmul.bf16.gmra.mxu0 %v246
  %v773 = vpop.f32.mrf.mxu0
  %v774 = vadd.f32 %v755, %v773
  %v775 = vpop.f32.mrf.mxu0
  %v776 = vadd.f32 %v757, %v775
  %777 = vdwg.mxu0
  %778 = vmatpush.bf16.msra.mxu0 %v597
  %779 = vmatpush.bf16.msra.mxu0 %v596
  %780 = vmatpush.bf16.msra.mxu0 %v595
  %781 = vmatpush.bf16.msra.mxu0 %v594
  %782 = vmatpush.bf16.msra.mxu0 %v593
  %783 = vmatpush.bf16.msra.mxu0 %v592
  %784 = vmatpush.bf16.msra.mxu0 %v591
  %785 = vmatpush.bf16.msra.mxu0 %v590
  %786 = vmatmul.bf16.gmra.mxu0 %v238
  %v787 = vpop.f32.mrf.mxu0
  %v788 = vadd.f32 %v769, %v787
  %v789 = vpop.f32.mrf.mxu0
  %v790 = vadd.f32 %v771, %v789
  %791 = vmatmul.bf16.gmra.mxu0 %v247
  %v792 = vpop.f32.mrf.mxu0
  %v793 = vadd.f32 %v774, %v792
  %v794 = vpop.f32.mrf.mxu0
  %v795 = vadd.f32 %v776, %v794
  %796 = vdwg.mxu0
  %797 = vmatpush.bf16.msra.mxu0 %v605
  %798 = vmatpush.bf16.msra.mxu0 %v604
  %799 = vmatpush.bf16.msra.mxu0 %v603
  %800 = vmatpush.bf16.msra.mxu0 %v602
  %801 = vmatpush.bf16.msra.mxu0 %v601
  %802 = vmatpush.bf16.msra.mxu0 %v600
  %803 = vmatpush.bf16.msra.mxu0 %v599
  %804 = vmatpush.bf16.msra.mxu0 %v598
  %805 = vmatmul.bf16.gmra.mxu0 %v239
  %v806 = vpop.f32.mrf.mxu0
  %v807 = vadd.f32 %v788, %v806
  %v808 = vpop.f32.mrf.mxu0
  %v809 = vadd.f32 %v790, %v808
  %810 = vmatmul.bf16.gmra.mxu0 %v248
  %v811 = vpop.f32.mrf.mxu0
  %v812 = vadd.f32 %v793, %v811
  %v813 = vpop.f32.mrf.mxu0
  %v814 = vadd.f32 %v795, %v813
  %815 = vdwg.mxu0
  %816 = vmatpush.bf16.msra.mxu0 %v613
  %817 = vmatpush.bf16.msra.mxu0 %v612
  %818 = vmatpush.bf16.msra.mxu0 %v611
  %819 = vmatpush.bf16.msra.mxu0 %v610
  %820 = vmatpush.bf16.msra.mxu0 %v609
  %821 = vmatpush.bf16.msra.mxu0 %v608
  %822 = vmatpush.bf16.msra.mxu0 %v607
  %823 = vmatpush.bf16.msra.mxu0 %v606
  %824 = vmatmul.bf16.gmra.mxu0 %v240
  %v825 = vpop.f32.mrf.mxu0
  %v826 = vadd.f32 %v807, %v825
  %v827 = vpop.f32.mrf.mxu0
  %v828 = vadd.f32 %v809, %v827
  %829 = vmatmul.bf16.gmra.mxu0 %v249
  %v830 = vpop.f32.mrf.mxu0
  %v831 = vadd.f32 %v812, %v830
  %v832 = vpop.f32.mrf.mxu0
  %v833 = vadd.f32 %v814, %v832
  %834 = vdwg.mxu0
  %835 = vmatpush.bf16.msra.mxu0 %v621
  %836 = vmatpush.bf16.msra.mxu0 %v620
  %837 = vmatpush.bf16.msra.mxu0 %v619
  %838 = vmatpush.bf16.msra.mxu0 %v618
  %839 = vmatpush.bf16.msra.mxu0 %v617
  %840 = vmatpush.bf16.msra.mxu0 %v616
  %841 = vmatpush.bf16.msra.mxu0 %v615
  %842 = vmatpush.bf16.msra.mxu0 %v614
  %843 = vmatmul.bf16.gmra.mxu0 %v241
  %v844 = vpop.f32.mrf.mxu0
  %v845 = vadd.f32 %v826, %v844
  %v846 = vpop.f32.mrf.mxu0
  %v847 = vadd.f32 %v828, %v846
  %848 = vmatmul.bf16.gmra.mxu0 %v250
  %v849 = vpop.f32.mrf.mxu0
  %v850 = vadd.f32 %v831, %v849
  %v851 = vpop.f32.mrf.mxu0
  %v852 = vadd.f32 %v833, %v851
  %853 = vdwg.mxu0
  %854 = vmatpush.bf16.msra.mxu0 %v629
  %855 = vmatpush.bf16.msra.mxu0 %v628
  %856 = vmatpush.bf16.msra.mxu0 %v627
  %857 = vmatpush.bf16.msra.mxu0 %v626
  %858 = vmatpush.bf16.msra.mxu0 %v625
  %859 = vmatpush.bf16.msra.mxu0 %v624
  %860 = vmatpush.bf16.msra.mxu0 %v623
  %861 = vmatpush.bf16.msra.mxu0 %v622
  %862 = vmatmul.bf16.gmra.mxu0 %v242
  %v863 = vpop.f32.mrf.mxu0
  %v864 = vadd.f32 %v845, %v863
  %v865 = vpop.f32.mrf.mxu0
  %v866 = vadd.f32 %v847, %v865
  %867 = vmatmul.bf16.gmra.mxu0 %v251
  %v868 = vpop.f32.mrf.mxu0
  %v869 = vadd.f32 %v850, %v868
  %v870 = vpop.f32.mrf.mxu0
  %v871 = vadd.f32 %v852, %v870
  %872 = vdwg.mxu0
  %v873 = vmul.f32 %v864, 0.2
  %v874 = vmul.f32 %v866, 0.2
  %v875 = vmul.f32 %v869, 0.2
  %v876 = vmul.f32 %v871, 0.2
  %v877 = vmax.f32 %v864, %v873
  %v878 = vmax.f32 %v866, %v874
  %v879 = vmax.f32 %v869, %v875
  %v880 = vmax.f32 %v871, %v876
  %v881 = vld [vmem:[%s2] sm:$0xf]
  %v882 = vld [vmem:[%s2 + $0x4] sm:$0xf]
  %v883 = vld [vmem:[%s2 + $0x8] sm:$0xf]
  %v884 = vld [vmem:[%s2 + $0xc] sm:$0xf]
  %v885 = vunpack.c.l.bf16 %v881
  %v886 = vunpack.c.l.bf16 %v882
  %v887 = vunpack.c.l.bf16 %v883
  %v888 = vunpack.c.l.bf16 %v884
  %v889 = vadd.f32 %v877, %v885
  %v890 = vadd.f32 %v878, %v886
  %v891 = vadd.f32 %v879, %v887
  %v892 = vadd.f32 %v880, %v888
  %v893 = vpack.c.bf16 %v889, %v889
  %v894 = vpack.c.bf16 %v890, %v890
  %v895 = vpack.c.bf16 %v891, %v891
  %v896 = vpack.c.bf16 %v892, %v892
  %897 = vst [vmem:[%s3] sm:$0xf] %v893
  %898 = vst [vmem:[%s3 + $0x4] sm:$0xf] %v894
  %899 = vst [vmem:[%s3 + $0x8] sm:$0xf] %v895
  %900 = vst [vmem:[%s3 + $0xc] sm:$0xf] %v896
  // Predicated region
  $region14: #{discriminator_unet_forward.14} parent=0 // pred_check
    _
  $region15: #{discriminator_unet_forward.14} parent=0 // pred_check_branch
    %902 = sbr.rel (0) target = $region17
  $region16: #{discriminator_unet_forward.14} parent=0 // pred_region
    _
  $region17: #{discriminator_unet_forward.14} parent=0 // pred_fallthru
    _
  // Predicated region
  $region18: #{discriminator_unet_forward.14} parent=0 // pred_check
    _
  $region19: #{discriminator_unet_forward.14} parent=0 // pred_check_branch
    %904 = sbr.rel (0) target = $region21
  $region20: #{discriminator_unet_forward.14} parent=0 // pred_region
    _
  $region21: #{discriminator_unet_forward.14} parent=0 // pred_fallthru
    _

// kernel: discriminator_unet_forward.15
$region0: #{discriminator_unet_forward.15}
  #allocation0 [shape = 'u32[]', space=smem, size = 0x4, offset = 0x4, fixed_abs, tag = 'smem constant byte address 0x4 - core index']
  #allocation1 [shape = 'u32[72,128]{1,0:T(1,128)}', space=vmem, size = 0x9000, scoped, tag = 'internal scratch']
  %s0 = inlined_call_operand.vmem [shape: bf16[128,576], index: 0, kind: input, shape index: {}]
  %s1 = inlined_call_operand.vmem [shape: bf16[576,128], index: 1, kind: input, shape index: {}]
  %s2 = inlined_call_operand.vmem [shape: bf16[128,128], index: 2, kind: input, shape index: {}]
  %s3 = inlined_call_operand.vmem [shape: bf16[128,128], index: 3, kind: output, shape index: {}]
  %s4 = sld [smem:[#allocation0]]
  $region45: #{discriminator_unet_forward.15} parent=0
    _
  %s6 = ssub.s32 1, %s4
  %s7 = scalar_select 0, %s6, %s4
  loop: start=0, step=1, limit=4
  $region2: #{discriminator_unet_forward.15} parent=0 // loop_pre_header
    _
  $region3: #{discriminator_unet_forward.15} parent=0 // loop_header
    %s9 = sphi 0, %s13
    %p10 = scmp.ge.s32.totalorder %s9, 4
    %s16 = sphi 0, %s28
    %s17 = sphi 0, %s24
    %s18 = sphi 0, %s16
    %s19 = sphi 0, %s17
    %s20 = sphi 0, %s18
    %s21 = sphi 0, %s19
    %s31 = sphi 0, %s33
    %s34 = sphi 0, %s31
    %s35 = sphi 0, %s34
    %s51 = sphi 0, %s35
    %s57 = sphi 0, %s59
    %s60 = sphi 0, %s57
    %s61 = sphi 0, %s60
    %s77 = sphi 0, %s61
    %s85 = sphi 0, %s87
    %s88 = sphi 0, %s85
    %s89 = sphi 0, %s88
    %s105 = sphi 0, %s89
    %s113 = sphi 0, %s115
    %s116 = sphi 0, %s113
    %s117 = sphi 0, %s116
    %s133 = sphi 0, %s117
  $region4: #{discriminator_unet_forward.15} parent=0 // loop_header_branch
    %12 = sbr.rel (%p10) target = $region8
  $region5: #{discriminator_unet_forward.15} parent=0 // loop_body
    %s14 = ssub.s32 %s9, 1
    %s15 = ssub.s32 %s9, 2
    %s22 = sadd.s32 1, %s17
    %p23 = scmp.ge.s32.totalorder %s22, 1
    %s24 = scalar_select %p23, 0, %s22
    %s25 = sadd.s32 1, %s16
    %s26 = scalar_select %p23, %s25, %s16
    %p27 = scmp.ge.s32.totalorder %s26, 2
    %s28 = scalar_select %p27, 0, %s26
    %s29 = ssub.s32 %s16, %s28
    %p30 = scmp.eq.s32.totalorder %s29, 0
    %s32 = sadd.s32 %s31, 1
    %s33 = scalar_select %p30, %s31, %s32
    %p36 = pneg %p30
    %p37 = scmp.eq.s32.totalorder %s9, 1
    %p38 = por %p36, %p37
    %p39 = scmp.ne.s32.totalorder %s31, %s34
    %p40 = scmp.eq.s32.totalorder %s9, 0
    %p41 = por %p39, %p40
    %p42 = scmp.ne.s32.totalorder %s31, %s34
    %p43 = scmp.eq.s32.totalorder %s14, 1
    %p44 = por %p42, %p43
    %p45 = scmp.ne.s32.totalorder %s34, %s35
    %p46 = scmp.eq.s32.totalorder %s14, 0
    %p47 = por %p45, %p46
    %p48 = scmp.ne.s32.totalorder %s34, %s35
    %p49 = scmp.eq.s32.totalorder %s15, 1
    %p50 = por %p48, %p49
    %p52 = scmp.ne.s32.totalorder %s35, %s51
    %p53 = scmp.eq.s32.totalorder %s15, 0
    %p54 = por %p52, %p53
    %s55 = ssub.s32 %s17, %s24
    %p56 = scmp.eq.s32.totalorder %s55, 0
    %s58 = sadd.s32 %s57, 1
    %s59 = scalar_select %p56, %s57, %s58
    %p62 = pneg %p56
    %p63 = scmp.eq.s32.totalorder %s9, 1
    %p64 = por %p62, %p63
    %p65 = scmp.ne.s32.totalorder %s57, %s60
    %p66 = scmp.eq.s32.totalorder %s9, 0
    %p67 = por %p65, %p66
    %p68 = scmp.ne.s32.totalorder %s57, %s60
    %p69 = scmp.eq.s32.totalorder %s14, 1
    %p70 = por %p68, %p69
    %p71 = scmp.ne.s32.totalorder %s60, %s61
    %p72 = scmp.eq.s32.totalorder %s14, 0
    %p73 = por %p71, %p72
    %p74 = scmp.ne.s32.totalorder %s60, %s61
    %p75 = scmp.eq.s32.totalorder %s15, 1
    %p76 = por %p74, %p75
    %p78 = scmp.ne.s32.totalorder %s61, %s77
    %p79 = scmp.eq.s32.totalorder %s15, 0
    %p80 = por %p78, %p79
    %s81 = ssub.s32 %s16, %s28
    %s82 = ssub.s32 %s17, %s24
    %s83 = sor.u32 %s81, %s82
    %p84 = scmp.eq.s32.totalorder %s83, 0
    %s86 = sadd.s32 %s85, 1
    %s87 = scalar_select %p84, %s85, %s86
    %p90 = pneg %p84
    %p91 = scmp.eq.s32.totalorder %s9, 1
    %p92 = por %p90, %p91
    %p93 = scmp.ne.s32.totalorder %s85, %s88
    %p94 = scmp.eq.s32.totalorder %s9, 0
    %p95 = por %p93, %p94
    %p96 = scmp.ne.s32.totalorder %s85, %s88
    %p97 = scmp.eq.s32.totalorder %s14, 1
    %p98 = por %p96, %p97
    %p99 = scmp.ne.s32.totalorder %s88, %s89
    %p100 = scmp.eq.s32.totalorder %s14, 0
    %p101 = por %p99, %p100
    %p102 = scmp.ne.s32.totalorder %s88, %s89
    %p103 = scmp.eq.s32.totalorder %s15, 1
    %p104 = por %p102, %p103
    %p106 = scmp.ne.s32.totalorder %s89, %s105
    %p107 = scmp.eq.s32.totalorder %s15, 0
    %p108 = por %p106, %p107
    %s109 = ssub.s32 %s16, %s28
    %s110 = ssub.s32 %s17, %s24
    %s111 = sor.u32 %s109, %s110
    %p112 = scmp.eq.s32.totalorder %s111, 0
    %s114 = sadd.s32 %s113, 1
    %s115 = scalar_select %p112, %s113, %s114
    %p118 = pneg %p112
    %p119 = scmp.eq.s32.totalorder %s9, 1
    %p120 = por %p118, %p119
    %p121 = scmp.ne.s32.totalorder %s113, %s116
    %p122 = scmp.eq.s32.totalorder %s9, 0
    %p123 = por %p121, %p122
    %p124 = scmp.ne.s32.totalorder %s113, %s116
    %p125 = scmp.eq.s32.totalorder %s14, 1
    %p126 = por %p124, %p125
    %p127 = scmp.ne.s32.totalorder %s116, %s117
    %p128 = scmp.eq.s32.totalorder %s14, 0
    %p129 = por %p127, %p128
    %p130 = scmp.ne.s32.totalorder %s116, %s117
    %p131 = scmp.eq.s32.totalorder %s15, 1
    %p132 = por %p130, %p131
    %p134 = scmp.ne.s32.totalorder %s117, %s133
    %p135 = scmp.eq.s32.totalorder %s15, 0
    %p136 = por %p134, %p135
    %p137 = scmp.le.s32.totalorder 1, %s9
    %p138 = scmp.lt.s32.totalorder %s9, 3
    %p139 = pnand %p137, %p138
    %p140 = pneg %p139
    // Predicated region
    $region9: #{discriminator_unet_forward.15} parent=5 // pred_check
      _
    $region10: #{discriminator_unet_forward.15} parent=5 // pred_check_branch
      %142 = sbr.rel (%p139) target = $region12
    $region11: #{discriminator_unet_forward.15} parent=5 // pred_region
      %s143 = ssub.s32 %s9, 1
      // Predicated region
      $region13: #{discriminator_unet_forward.15} parent=11 // pred_check
        %p144 = pneg %p73
      $region14: #{discriminator_unet_forward.15} parent=11 // pred_check_branch
        %146 = sbr.rel (%p144) target = $region16
      $region15: #{discriminator_unet_forward.15} parent=11 // pred_region
        %p147 = scmp.lt.s32.totalorder %s19, 0
        %s148 = scalar_select %p147, %s19, 0
        %s149 = smul.addr %s148, 4
        %s150 = scalar_lea.vmem %s1, %s149
      $region16: #{discriminator_unet_forward.15} parent=11 // pred_fallthru
        _
    $region12: #{discriminator_unet_forward.15} parent=5 // pred_fallthru
      _
    %p151 = scmp.lt.s32.totalorder %s9, 2
    // Predicated region
    $region17: #{discriminator_unet_forward.15} parent=5 // pred_check
      %p152 = pneg %p151
    $region18: #{discriminator_unet_forward.15} parent=5 // pred_check_branch
      %154 = sbr.rel (%p152) target = $region20
    $region19: #{discriminator_unet_forward.15} parent=5 // pred_region
      // Predicated region
      $region21: #{discriminator_unet_forward.15} parent=19 // pred_check
        %p155 = pneg %p41
      $region22: #{discriminator_unet_forward.15} parent=19 // pred_check_branch
        %157 = sbr.rel (%p155) target = $region24
      $region23: #{discriminator_unet_forward.15} parent=19 // pred_region
        %s158 = smul.u32 8, %s16
        %p159 = scmp.lt.s32.totalorder %s158, 15
        %s160 = scalar_select %p159, %s158, 15
        %s161 = smul.addr %s160, 5
        %s162 = smul.addr %s161, 4
        %s163 = scalar_lea.vmem %s0, %s162
        %s164 = smul.u32 8, %s16
      $region24: #{discriminator_unet_forward.15} parent=19 // pred_fallthru
        _
      // Predicated region
      $region25: #{discriminator_unet_forward.15} parent=19 // pred_check
        %p165 = pneg %p95
      $region26: #{discriminator_unet_forward.15} parent=19 // pred_check_branch
        %167 = sbr.rel (%p165) target = $region28
      $region27: #{discriminator_unet_forward.15} parent=19 // pred_region
        %s168 = smul.u32 8, %s16
        %p169 = scmp.lt.s32.totalorder %s168, 15
        %s170 = scalar_select %p169, %s168, 15
        %p171 = scmp.lt.s32.totalorder %s17, 0
        %s172 = scalar_select %p171, %s17, 0
        %s173 = sadd.s32 %s172, %s170
        %s174 = smul.addr %s173, 4
        %s175 = scalar_lea.vmem %s2, %s174
        %s176 = smul.u32 8, %s16
      $region28: #{discriminator_unet_forward.15} parent=19 // pred_fallthru
        _
    $region20: #{discriminator_unet_forward.15} parent=5 // pred_fallthru
      _
    %p177 = scmp.le.s32.totalorder 1, %s9
    %p178 = scmp.lt.s32.totalorder %s9, 3
    %p179 = pnand %p177, %p178
    %p180 = pneg %p179
    // Predicated region
    $region29: #{discriminator_unet_forward.15} parent=5 // pred_check
      _
    $region30: #{discriminator_unet_forward.15} parent=5 // pred_check_branch
      %182 = sbr.rel (%p179) target = $region32
    $region31: #{discriminator_unet_forward.15} parent=5 // pred_region
      %s183 = ssub.s32 %s9, 1
      %s184 = smul.u32 8, %s18
      %p185 = scmp.lt.s32.totalorder %s184, 15
      %s186 = scalar_select %p185, %s184, 15
      %s187 = smul.addr %s186, 5
      %s188 = smul.addr %s187, 4
      %s189 = scalar_lea.vmem %s0, %s188
      %p190 = pneg %p47
      %p191 = pneg %p44
      %p192 = scmp.lt.s32.totalorder %s19, 0
      %s193 = scalar_select %p192, %s19, 0
      %s194 = smul.addr %s193, 4
      %s195 = scalar_lea.vmem %s1, %s194
      %p196 = pneg %p73
      %p197 = pneg %p70
      %s198 = smul.u32 8, %s18
      %p199 = scmp.lt.s32.totalorder %s198, 15
      %s200 = scalar_select %p199, %s198, 15
      %p201 = scmp.lt.s32.totalorder %s19, 0
      %s202 = scalar_select %p201, %s19, 0
      %s203 = sadd.s32 %s202, %s200
      %s204 = smul.addr %s203, 4
      %s205 = scalar_lea.vmem %s2, %s204
      %p206 = pneg %p101
      %p207 = pneg %p98
      %p208 = pneg %p129
      %p209 = pneg %p126
      %s210 = smul.u32 8, %s18
      %p211 = scmp.lt.s32.totalorder %s210, 15
      %s212 = scalar_select %p211, %s210, 15
      %p213 = scmp.lt.s32.totalorder %s19, 0
      %s214 = scalar_select %p213, %s19, 0
      %s215 = sadd.s32 %s214, %s212
      %s216 = smul.addr %s215, 4
      %s217 = scalar_lea.vmem %s3, %s216
      %s218 = smul.u32 8, %s18
      %p219 = scmp.lt.s32.totalorder %s218, 15
      %s220 = scalar_select %p219, %s218, 15
      %s221 = smul.addr %s220, 5
      %s222 = smul.addr %s221, 4
      %s223 = scalar_lea.vmem %s0, %s222
      %s224 = smul.u32 8, %s18
      %p225 = scmp.lt.s32.totalorder %s19, 0
      %s226 = scalar_select %p225, %s19, 0
      %s227 = smul.addr %s226, 4
      %s228 = scalar_lea.vmem %s1, %s227
      %s229 = smul.u32 8, %s18
      %p230 = scmp.lt.s32.totalorder %s229, 15
      %s231 = scalar_select %p230, %s229, 15
      %p232 = scmp.lt.s32.totalorder %s19, 0
      %s233 = scalar_select %p232, %s19, 0
      %s234 = sadd.s32 %s233, %s231
      %s235 = smul.addr %s234, 4
      %s236 = scalar_lea.vmem %s2, %s235
      %s237 = smul.u32 8, %s18
      %s238 = smul.u32 8, %s18
      %p239 = scmp.lt.s32.totalorder %s238, 15
      %s240 = scalar_select %p239, %s238, 15
      %p241 = scmp.lt.s32.totalorder %s19, 0
      %s242 = scalar_select %p241, %s19, 0
      %s243 = sadd.s32 %s242, %s240
      %s244 = smul.addr %s243, 4
      %s245 = scalar_lea.vmem %s3, %s244
      %s246 = smul.u32 8, %s18
      %v248 = vld [vmem:[%s223] sm:$0xff]
      %v249 = vld [vmem:[%s223 + $0x8] sm:$0xff]
      %v250 = vld [vmem:[%s223 + $0x10] sm:$0xf]
      %v251 = vld [vmem:[%s223 + $0x14] sm:$0xff]
      %v252 = vld [vmem:[%s223 + $0x1c] sm:$0xff]
      %v253 = vld [vmem:[%s223 + $0x24] sm:$0xf]
      %v254 = vld [vmem:[%s223 + $0x28] sm:$0xff]
      %v255 = vld [vmem:[%s223 + $0x30] sm:$0xff]
      %v256 = vld [vmem:[%s223 + $0x38] sm:$0xf]
      %v257 = vld [vmem:[%s223 + $0x3c] sm:$0xff]
      %v258 = vld [vmem:[%s223 + $0x44] sm:$0xff]
      %v259 = vld [vmem:[%s223 + $0x4c] sm:$0xf]
      %v260 = vld [vmem:[%s223 + $0x50] sm:$0xff]
      %v261 = vld [vmem:[%s223 + $0x58] sm:$0xff]
      %v262 = vld [vmem:[%s223 + $0x60] sm:$0xf]
      %v263 = vld [vmem:[%s223 + $0x64] sm:$0xff]
      %v264 = vld [vmem:[%s223 + $0x6c] sm:$0xff]
      %v265 = vld [vmem:[%s223 + $0x74] sm:$0xf]
      %v266 = vld [vmem:[%s223 + $0x78] sm:$0xff]
      %v267 = vld [vmem:[%s223 + $0x80] sm:$0xff]
      %v268 = vld [vmem:[%s223 + $0x88] sm:$0xf]
      %v269 = vld [vmem:[%s223 + $0x8c] sm:$0xff]
      %v270 = vld [vmem:[%s223 + $0x94] sm:$0xff]
      %v271 = vld [vmem:[%s223 + $0x9c] sm:$0xf]
      %v272 = vld [vmem:[%s228] sm:$0xf]
      %v273 = vld [vmem:[%s228 + $0x4] sm:$0xf]
      %v274 = vld [vmem:[%s228 + $0x8] sm:$0xf]
      %v275 = vld [vmem:[%s228 + $0xc] sm:$0xf]
      %v276 = vld [vmem:[%s228 + $0x10] sm:$0xf]
      %v277 = vld [vmem:[%s228 + $0x14] sm:$0xf]
      %v278 = vld [vmem:[%s228 + $0x18] sm:$0xf]
      %v279 = vld [vmem:[%s228 + $0x1c] sm:$0xf]
      %v280 = vld [vmem:[%s228 + $0x20] sm:$0xf]
      %v281 = vld [vmem:[%s228 + $0x24] sm:$0xf]
      %v282 = vld [vmem:[%s228 + $0x28] sm:$0xf]
      %v283 = vld [vmem:[%s228 + $0x2c] sm:$0xf]
      %v284 = vld [vmem:[%s228 + $0x30] sm:$0xf]
      %v285 = vld [vmem:[%s228 + $0x34] sm:$0xf]
      %v286 = vld [vmem:[%s228 + $0x38] sm:$0xf]
      %v287 = vld [vmem:[%s228 + $0x3c] sm:$0xf]
      %v288 = vld [vmem:[%s228 + $0x40] sm:$0xf]
      %v289 = vld [vmem:[%s228 + $0x44] sm:$0xf]
      %v290 = vld [vmem:[%s228 + $0x48] sm:$0xf]
      %v291 = vld [vmem:[%s228 + $0x4c] sm:$0xf]
      %v292 = vld [vmem:[%s228 + $0x50] sm:$0xf]
      %v293 = vld [vmem:[%s228 + $0x54] sm:$0xf]
      %v294 = vld [vmem:[%s228 + $0x58] sm:$0xf]
      %v295 = vld [vmem:[%s228 + $0x5c] sm:$0xf]
      %v296 = vld [vmem:[%s228 + $0x60] sm:$0xf]
      %v297 = vld [vmem:[%s228 + $0x64] sm:$0xf]
      %v298 = vld [vmem:[%s228 + $0x68] sm:$0xf]
      %v299 = vld [vmem:[%s228 + $0x6c] sm:$0xf]
      %v300 = vld [vmem:[%s228 + $0x70] sm:$0xf]
      %v301 = vld [vmem:[%s228 + $0x74] sm:$0xf]
      %v302 = vld [vmem:[%s228 + $0x78] sm:$0xf]
      %v303 = vld [vmem:[%s228 + $0x7c] sm:$0xf]
      %v304 = vld [vmem:[%s228 + $0x80] sm:$0xf]
      %v305 = vld [vmem:[%s228 + $0x84] sm:$0xf]
      %v306 = vld [vmem:[%s228 + $0x88] sm:$0xf]
      %v307 = vld [vmem:[%s228 + $0x8c] sm:$0xf]
      %v308 = vld [vmem:[%s228 + $0x90] sm:$0xf]
      %v309 = vld [vmem:[%s228 + $0x94] sm:$0xf]
      %v310 = vld [vmem:[%s228 + $0x98] sm:$0xf]
      %v311 = vld [vmem:[%s228 + $0x9c] sm:$0xf]
      %v312 = vld [vmem:[%s228 + $0xa0] sm:$0xf]
      %v313 = vld [vmem:[%s228 + $0xa4] sm:$0xf]
      %v314 = vld [vmem:[%s228 + $0xa8] sm:$0xf]
      %v315 = vld [vmem:[%s228 + $0xac] sm:$0xf]
      %v316 = vld [vmem:[%s228 + $0xb0] sm:$0xf]
      %v317 = vld [vmem:[%s228 + $0xb4] sm:$0xf]
      %v318 = vld [vmem:[%s228 + $0xb8] sm:$0xf]
      %v319 = vld [vmem:[%s228 + $0xbc] sm:$0xf]
      %v320 = vld [vmem:[%s228 + $0xc0] sm:$0xf]
      %v321 = vld [vmem:[%s228 + $0xc4] sm:$0xf]
      %v322 = vld [vmem:[%s228 + $0xc8] sm:$0xf]
      %v323 = vld [vmem:[%s228 + $0xcc] sm:$0xf]
      %v324 = vld [vmem:[%s228 + $0xd0] sm:$0xf]
      %v325 = vld [vmem:[%s228 + $0xd4] sm:$0xf]
      %v326 = vld [vmem:[%s228 + $0xd8] sm:$0xf]
      %v327 = vld [vmem:[%s228 + $0xdc] sm:$0xf]
      %v328 = vld [vmem:[%s228 + $0xe0] sm:$0xf]
      %v329 = vld [vmem:[%s228 + $0xe4] sm:$0xf]
      %v330 = vld [vmem:[%s228 + $0xe8] sm:$0xf]
      %v331 = vld [vmem:[%s228 + $0xec] sm:$0xf]
      %v332 = vld [vmem:[%s228 + $0xf0] sm:$0xf]
      %v333 = vld [vmem:[%s228 + $0xf4] sm:$0xf]
      %v334 = vld [vmem:[%s228 + $0xf8] sm:$0xf]
      %v335 = vld [vmem:[%s228 + $0xfc] sm:$0xf]
      %v336 = vld [vmem:[%s228 + $0x100] sm:$0xf]
      %v337 = vld [vmem:[%s228 + $0x104] sm:$0xf]
      %v338 = vld [vmem:[%s228 + $0x108] sm:$0xf]
      %v339 = vld [vmem:[%s228 + $0x10c] sm:$0xf]
      %v340 = vld [vmem:[%s228 + $0x110] sm:$0xf]
      %v341 = vld [vmem:[%s228 + $0x114] sm:$0xf]
      %v342 = vld [vmem:[%s228 + $0x118] sm:$0xf]
      %v343 = vld [vmem:[%s228 + $0x11c] sm:$0xf]
      %v368 = vunpack.c.l.b16 %v248
      %v369 = vunpack.c.h.b16 %v248
      %v370 = vunpack.c.l.b16 %v249
      %v371 = vunpack.c.h.b16 %v249
      %v372 = vunpack.c.l.b16 %v250
      %v373 = vunpack.c.l.b16 %v251
      %v374 = vunpack.c.h.b16 %v251
      %v375 = vunpack.c.l.b16 %v252
      %v376 = vunpack.c.h.b16 %v252
      %v377 = vunpack.c.l.b16 %v253
      %v378 = vunpack.c.l.b16 %v254
      %v379 = vunpack.c.h.b16 %v254
      %v380 = vunpack.c.l.b16 %v255
      %v381 = vunpack.c.h.b16 %v255
      %v382 = vunpack.c.l.b16 %v256
      %v383 = vunpack.c.l.b16 %v257
      %v384 = vunpack.c.h.b16 %v257
      %v385 = vunpack.c.l.b16 %v258
      %v386 = vunpack.c.h.b16 %v258
      %v387 = vunpack.c.l.b16 %v259
      %v388 = vunpack.c.l.b16 %v260
      %v389 = vunpack.c.h.b16 %v260
      %v390 = vunpack.c.l.b16 %v261
      %v391 = vunpack.c.h.b16 %v261
      %v392 = vunpack.c.l.b16 %v262
      %v393 = vunpack.c.l.b16 %v263
      %v394 = vunpack.c.h.b16 %v263
      %v395 = vunpack.c.l.b16 %v264
      %v396 = vunpack.c.h.b16 %v264
      %v397 = vunpack.c.l.b16 %v265
      %v398 = vunpack.c.l.b16 %v266
      %v399 = vunpack.c.h.b16 %v266
      %v400 = vunpack.c.l.b16 %v267
      %v401 = vunpack.c.h.b16 %v267
      %v402 = vunpack.c.l.b16 %v268
      %v403 = vunpack.c.l.b16 %v269
      %v404 = vunpack.c.h.b16 %v269
      %v405 = vunpack.c.l.b16 %v270
      %v406 = vunpack.c.h.b16 %v270
      %v407 = vunpack.c.l.b16 %v271
      %v408 = vpack.c.b16 %v373, %v368
      %v409 = vpack.c.b16 %v374, %v369
      %v410 = vpack.c.b16 %v375, %v370
      %v411 = vpack.c.b16 %v376, %v371
      %v412 = vpack.c.b16 %v377, %v372
      %v413 = vpack.c.b16 %v383, %v378
      %v414 = vpack.c.b16 %v384, %v379
      %v415 = vpack.c.b16 %v385, %v380
      %v416 = vpack.c.b16 %v386, %v381
      %v417 = vpack.c.b16 %v387, %v382
      %v418 = vpack.c.b16 %v393, %v388
      %v419 = vpack.c.b16 %v394, %v389
      %v420 = vpack.c.b16 %v395, %v390
      %v421 = vpack.c.b16 %v396, %v391
      %v422 = vpack.c.b16 %v397, %v392
      %v423 = vpack.c.b16 %v403, %v398
      %v424 = vpack.c.b16 %v404, %v399
      %v425 = vpack.c.b16 %v405, %v400
      %v426 = vpack.c.b16 %v406, %v401
      %v427 = vpack.c.b16 %v407, %v402
      %v516 = vunpack.c.l.b16 %v272
      %v517 = vunpack.c.l.b16 %v273
      %v518 = vunpack.c.l.b16 %v274
      %v519 = vunpack.c.l.b16 %v275
      %v520 = vunpack.c.l.b16 %v276
      %v521 = vunpack.c.l.b16 %v277
      %v522 = vunpack.c.l.b16 %v278
      %v523 = vunpack.c.l.b16 %v279
      %v524 = vunpack.c.l.b16 %v280
      %v525 = vunpack.c.l.b16 %v281
      %v526 = vunpack.c.l.b16 %v282
      %v527 = vunpack.c.l.b16 %v283
      %v528 = vunpack.c.l.b16 %v284
      %v529 = vunpack.c.l.b16 %v285
      %v530 = vunpack.c.l.b16 %v286
      %v531 = vunpack.c.l.b16 %v287
      %v532 = vunpack.c.l.b16 %v288
      %v533 = vunpack.c.l.b16 %v289
      %v534 = vunpack.c.l.b16 %v290
      %v535 = vunpack.c.l.b16 %v291
      %v536 = vunpack.c.l.b16 %v292
      %v537 = vunpack.c.l.b16 %v293
      %v538 = vunpack.c.l.b16 %v294
      %v539 = vunpack.c.l.b16 %v295
      %v540 = vunpack.c.l.b16 %v296
      %v541 = vunpack.c.l.b16 %v297
      %v542 = vunpack.c.l.b16 %v298
      %v543 = vunpack.c.l.b16 %v299
      %v544 = vunpack.c.l.b16 %v300
      %v545 = vunpack.c.l.b16 %v301
      %v546 = vunpack.c.l.b16 %v302
      %v547 = vunpack.c.l.b16 %v303
      %v548 = vunpack.c.l.b16 %v304
      %v549 = vunpack.c.l.b16 %v305
      %v550 = vunpack.c.l.b16 %v306
      %v551 = vunpack.c.l.b16 %v307
      %v552 = vunpack.c.l.b16 %v308
      %v553 = vunpack.c.l.b16 %v309
      %v554 = vunpack.c.l.b16 %v310
      %v555 = vunpack.c.l.b16 %v311
      %v556 = vunpack.c.l.b16 %v312
      %v557 = vunpack.c.l.b16 %v313
      %v558 = vunpack.c.l.b16 %v314
      %v559 = vunpack.c.l.b16 %v315
      %v560 = vunpack.c.l.b16 %v316
      %v561 = vunpack.c.l.b16 %v317
      %v562 = vunpack.c.l.b16 %v318
      %v563 = vunpack.c.l.b16 %v319
      %v564 = vunpack.c.l.b16 %v320
      %v565 = vunpack.c.l.b16 %v321
      %v566 = vunpack.c.l.b16 %v322
      %v567 = vunpack.c.l.b16 %v323
      %v568 = vunpack.c.l.b16 %v324
      %v569 = vunpack.c.l.b16 %v325
      %v570 = vunpack.c.l.b16 %v326
      %v571 = vunpack.c.l.b16 %v327
      %v572 = vunpack.c.l.b16 %v328
      %v573 = vunpack.c.l.b16 %v329
      %v574 = vunpack.c.l.b16 %v330
      %v575 = vunpack.c.l.b16 %v331
      %v576 = vunpack.c.l.b16 %v332
      %v577 = vunpack.c.l.b16 %v333
      %v578 = vunpack.c.l.b16 %v334
      %v579 = vunpack.c.l.b16 %v335
      %v580 = vunpack.c.l.b16 %v336
      %v581 = vunpack.c.l.b16 %v337
      %v582 = vunpack.c.l.b16 %v338
      %v583 = vunpack.c.l.b16 %v339
      %v584 = vunpack.c.l.b16 %v340
      %v585 = vunpack.c.l.b16 %v341
      %v586 = vunpack.c.l.b16 %v342
      %v587 = vunpack.c.l.b16 %v343
      %v588 = vpack.c.b16 %v517, %v516
      %v589 = vpack.c.b16 %v519, %v518
      %v590 = vpack.c.b16 %v521, %v520
      %v591 = vpack.c.b16 %v523, %v522
      %v592 = vpack.c.b16 %v525, %v524
      %v593 = vpack.c.b16 %v527, %v526
      %v594 = vpack.c.b16 %v529, %v528
      %v595 = vpack.c.b16 %v531, %v530
      %v596 = vpack.c.b16 %v533, %v532
      %v597 = vpack.c.b16 %v535, %v534
      %v598 = vpack.c.b16 %v537, %v536
      %v599 = vpack.c.b16 %v539, %v538
      %v600 = vpack.c.b16 %v541, %v540
      %v601 = vpack.c.b16 %v543, %v542
      %v602 = vpack.c.b16 %v545, %v544
      %v603 = vpack.c.b16 %v547, %v546
      %v604 = vpack.c.b16 %v549, %v548
      %v605 = vpack.c.b16 %v551, %v550
      %v606 = vpack.c.b16 %v553, %v552
      %v607 = vpack.c.b16 %v555, %v554
      %v608 = vpack.c.b16 %v557, %v556
      %v609 = vpack.c.b16 %v559, %v558
      %v610 = vpack.c.b16 %v561, %v560
      %v611 = vpack.c.b16 %v563, %v562
      %v612 = vpack.c.b16 %v565, %v564
      %v613 = vpack.c.b16 %v567, %v566
      %v614 = vpack.c.b16 %v569, %v568
      %v615 = vpack.c.b16 %v571, %v570
      %v616 = vpack.c.b16 %v573, %v572
      %v617 = vpack.c.b16 %v575, %v574
      %v618 = vpack.c.b16 %v577, %v576
      %v619 = vpack.c.b16 %v579, %v578
      %v620 = vpack.c.b16 %v581, %v580
      %v621 = vpack.c.b16 %v583, %v582
      %v622 = vpack.c.b16 %v585, %v584
      %v623 = vpack.c.b16 %v587, %v586
      %vm660 = vcmask 523264
      %v662 = vsel %vm660, %v412, 0
      %v665 = vsel %vm660, %v417, 0
      %v668 = vsel %vm660, %v422, 0
      %v671 = vsel %vm660, %v427, 0
      %673 = vmatpush.bf16.msra.mxu0 %v595
      %674 = vmatpush.bf16.msra.mxu0 %v594
      %675 = vmatpush.bf16.msra.mxu0 %v593
      %676 = vmatpush.bf16.msra.mxu0 %v592
      %677 = vmatpush.bf16.msra.mxu0 %v591
      %678 = vmatpush.bf16.msra.mxu0 %v590
      %679 = vmatpush.bf16.msra.mxu0 %v589
      %680 = vmatpush.bf16.msra.mxu0 %v588
      %681 = vmatmul.bf16.gmra.mxu0 %v408
      %v682 = vpop.f32.mrf.mxu0
      %v683 = vadd.f32 0.0, %v682
      %v684 = vpop.f32.mrf.mxu0
      %v685 = vadd.f32 0.0, %v684
      %686 = vmatmul.bf16.gmra.mxu0 %v413
      %v687 = vpop.f32.mrf.mxu0
      %v688 = vadd.f32 0.0, %v687
      %v689 = vpop.f32.mrf.mxu0
      %v690 = vadd.f32 0.0, %v689
      %691 = vmatmul.bf16.gmra.mxu0 %v418
      %v692 = vpop.f32.mrf.mxu0
      %v693 = vadd.f32 0.0, %v692
      %v694 = vpop.f32.mrf.mxu0
      %v695 = vadd.f32 0.0, %v694
      %696 = vmatmul.bf16.gmra.mxu0 %v423
      %v697 = vpop.f32.mrf.mxu0
      %v698 = vadd.f32 0.0, %v697
      %v699 = vpop.f32.mrf.mxu0
      %v700 = vadd.f32 0.0, %v699
      %701 = vdwg.mxu0
      %702 = vmatpush.bf16.msra.mxu0 %v603
      %703 = vmatpush.bf16.msra.mxu0 %v602
      %704 = vmatpush.bf16.msra.mxu0 %v601
      %705 = vmatpush.bf16.msra.mxu0 %v600
      %706 = vmatpush.bf16.msra.mxu0 %v599
      %707 = vmatpush.bf16.msra.mxu0 %v598
      %708 = vmatpush.bf16.msra.mxu0 %v597
      %709 = vmatpush.bf16.msra.mxu0 %v596
      %710 = vmatmul.bf16.gmra.mxu0 %v409
      %v711 = vpop.f32.mrf.mxu0
      %v712 = vadd.f32 %v683, %v711
      %v713 = vpop.f32.mrf.mxu0
      %v714 = vadd.f32 %v685, %v713
      %715 = vmatmul.bf16.gmra.mxu0 %v414
      %v716 = vpop.f32.mrf.mxu0
      %v717 = vadd.f32 %v688, %v716
      %v718 = vpop.f32.mrf.mxu0
      %v719 = vadd.f32 %v690, %v718
      %720 = vmatmul.bf16.gmra.mxu0 %v419
      %v721 = vpop.f32.mrf.mxu0
      %v722 = vadd.f32 %v693, %v721
      %v723 = vpop.f32.mrf.mxu0
      %v724 = vadd.f32 %v695, %v723
      %725 = vmatmul.bf16.gmra.mxu0 %v424
      %v726 = vpop.f32.mrf.mxu0
      %v727 = vadd.f32 %v698, %v726
      %v728 = vpop.f32.mrf.mxu0
      %v729 = vadd.f32 %v700, %v728
      %730 = vdwg.mxu0
      %731 = vmatpush.bf16.msra.mxu0 %v611
      %732 = vmatpush.bf16.msra.mxu0 %v610
      %733 = vmatpush.bf16.msra.mxu0 %v609
      %734 = vmatpush.bf16.msra.mxu0 %v608
      %735 = vmatpush.bf16.msra.mxu0 %v607
      %736 = vmatpush.bf16.msra.mxu0 %v606
      %737 = vmatpush.bf16.msra.mxu0 %v605
      %738 = vmatpush.bf16.msra.mxu0 %v604
      %739 = vmatmul.bf16.gmra.mxu0 %v410
      %v740 = vpop.f32.mrf.mxu0
      %v741 = vadd.f32 %v712, %v740
      %v742 = vpop.f32.mrf.mxu0
      %v743 = vadd.f32 %v714, %v742
      %744 = vmatmul.bf16.gmra.mxu0 %v415
      %v745 = vpop.f32.mrf.mxu0
      %v746 = vadd.f32 %v717, %v745
      %v747 = vpop.f32.mrf.mxu0
      %v748 = vadd.f32 %v719, %v747
      %749 = vmatmul.bf16.gmra.mxu0 %v420
      %v750 = vpop.f32.mrf.mxu0
      %v751 = vadd.f32 %v722, %v750
      %v752 = vpop.f32.mrf.mxu0
      %v753 = vadd.f32 %v724, %v752
      %754 = vmatmul.bf16.gmra.mxu0 %v425
      %v755 = vpop.f32.mrf.mxu0
      %v756 = vadd.f32 %v727, %v755
      %v757 = vpop.f32.mrf.mxu0
      %v758 = vadd.f32 %v729, %v757
      %759 = vdwg.mxu0
      %760 = vmatpush.bf16.msra.mxu0 %v619
      %761 = vmatpush.bf16.msra.mxu0 %v618
      %762 = vmatpush.bf16.msra.mxu0 %v617
      %763 = vmatpush.bf16.msra.mxu0 %v616
      %764 = vmatpush.bf16.msra.mxu0 %v615
      %765 = vmatpush.bf16.msra.mxu0 %v614
      %766 = vmatpush.bf16.msra.mxu0 %v613
      %767 = vmatpush.bf16.msra.mxu0 %v612
      %768 = vmatmul.bf16.gmra.mxu0 %v411
      %v769 = vpop.f32.mrf.mxu0
      %v770 = vadd.f32 %v741, %v769
      %v771 = vpop.f32.mrf.mxu0
      %v772 = vadd.f32 %v743, %v771
      %773 = vmatmul.bf16.gmra.mxu0 %v416
      %v774 = vpop.f32.mrf.mxu0
      %v775 = vadd.f32 %v746, %v774
      %v776 = vpop.f32.mrf.mxu0
      %v777 = vadd.f32 %v748, %v776
      %778 = vmatmul.bf16.gmra.mxu0 %v421
      %v779 = vpop.f32.mrf.mxu0
      %v780 = vadd.f32 %v751, %v779
      %v781 = vpop.f32.mrf.mxu0
      %v782 = vadd.f32 %v753, %v781
      %783 = vmatmul.bf16.gmra.mxu0 %v426
      %v784 = vpop.f32.mrf.mxu0
      %v785 = vadd.f32 %v756, %v784
      %v786 = vpop.f32.mrf.mxu0
      %v787 = vadd.f32 %v758, %v786
      %788 = vdwg.mxu0
      %789 = vmatpush.bf16.msra.mxu0 0
      %790 = vmatpush.bf16.msra.mxu0 0
      %791 = vmatpush.bf16.msra.mxu0 0
      %792 = vmatpush.bf16.msra.mxu0 0
      %793 = vmatpush.bf16.msra.mxu0 %v623
      %794 = vmatpush.bf16.msra.mxu0 %v622
      %795 = vmatpush.bf16.msra.mxu0 %v621
      %796 = vmatpush.bf16.msra.mxu0 %v620
      %797 = vmatmul.bf16.gmra.mxu0 %v662
      %v798 = vpop.f32.mrf.mxu0
      %v799 = vadd.f32 %v770, %v798
      %v800 = vpop.f32.mrf.mxu0
      %v801 = vadd.f32 %v772, %v800
      %802 = vmatmul.bf16.gmra.mxu0 %v665
      %v803 = vpop.f32.mrf.mxu0
      %v804 = vadd.f32 %v775, %v803
      %v805 = vpop.f32.mrf.mxu0
      %v806 = vadd.f32 %v777, %v805
      %807 = vmatmul.bf16.gmra.mxu0 %v668
      %v808 = vpop.f32.mrf.mxu0
      %v809 = vadd.f32 %v780, %v808
      %v810 = vpop.f32.mrf.mxu0
      %v811 = vadd.f32 %v782, %v810
      %812 = vmatmul.bf16.gmra.mxu0 %v671
      %v813 = vpop.f32.mrf.mxu0
      %v814 = vadd.f32 %v785, %v813
      %v815 = vpop.f32.mrf.mxu0
      %v816 = vadd.f32 %v787, %v815
      %817 = vdwg.mxu0
      %v818 = vmul.f32 %v799, 0.2
      %v819 = vmul.f32 %v801, 0.2
      %v820 = vmul.f32 %v804, 0.2
      %v821 = vmul.f32 %v806, 0.2
      %v822 = vmul.f32 %v809, 0.2
      %v823 = vmul.f32 %v811, 0.2
      %v824 = vmul.f32 %v814, 0.2
      %v825 = vmul.f32 %v816, 0.2
      %v826 = vmax.f32 %v799, %v818
      %v827 = vmax.f32 %v801, %v819
      %v828 = vmax.f32 %v804, %v820
      %v829 = vmax.f32 %v806, %v821
      %v830 = vmax.f32 %v809, %v822
      %v831 = vmax.f32 %v811, %v823
      %v832 = vmax.f32 %v814, %v824
      %v833 = vmax.f32 %v816, %v825
      %v834 = vld [vmem:[%s236] sm:$0xf]
      %v835 = vld [vmem:[%s236 + $0x4] sm:$0xf]
      %v836 = vld [vmem:[%s236 + $0x8] sm:$0xf]
      %v837 = vld [vmem:[%s236 + $0xc] sm:$0xf]
      %v838 = vld [vmem:[%s236 + $0x10] sm:$0xf]
      %v839 = vld [vmem:[%s236 + $0x14] sm:$0xf]
      %v840 = vld [vmem:[%s236 + $0x18] sm:$0xf]
      %v841 = vld [vmem:[%s236 + $0x1c] sm:$0xf]
      %v842 = vunpack.c.l.bf16 %v834
      %v843 = vunpack.c.l.bf16 %v835
      %v844 = vunpack.c.l.bf16 %v836
      %v845 = vunpack.c.l.bf16 %v837
      %v846 = vunpack.c.l.bf16 %v838
      %v847 = vunpack.c.l.bf16 %v839
      %v848 = vunpack.c.l.bf16 %v840
      %v849 = vunpack.c.l.bf16 %v841
      %v850 = vadd.f32 %v826, %v842
      %v851 = vadd.f32 %v827, %v843
      %v852 = vadd.f32 %v828, %v844
      %v853 = vadd.f32 %v829, %v845
      %v854 = vadd.f32 %v830, %v846
      %v855 = vadd.f32 %v831, %v847
      %v856 = vadd.f32 %v832, %v848
      %v857 = vadd.f32 %v833, %v849
      %v858 = vpack.c.bf16 %v850, %v850
      %v859 = vpack.c.bf16 %v851, %v851
      %v860 = vpack.c.bf16 %v852, %v852
      %v861 = vpack.c.bf16 %v853, %v853
      %v862 = vpack.c.bf16 %v854, %v854
      %v863 = vpack.c.bf16 %v855, %v855
      %v864 = vpack.c.bf16 %v856, %v856
      %v865 = vpack.c.bf16 %v857, %v857
      %866 = vst [vmem:[%s245] sm:$0xf] %v858
      %867 = vst [vmem:[%s245 + $0x4] sm:$0xf] %v859
      %868 = vst [vmem:[%s245 + $0x8] sm:$0xf] %v860
      %869 = vst [vmem:[%s245 + $0xc] sm:$0xf] %v861
      %870 = vst [vmem:[%s245 + $0x10] sm:$0xf] %v862
      %871 = vst [vmem:[%s245 + $0x14] sm:$0xf] %v863
      %872 = vst [vmem:[%s245 + $0x18] sm:$0xf] %v864
      %873 = vst [vmem:[%s245 + $0x1c] sm:$0xf] %v865
      %s874 = smul.u32 8, %s18
      %p875 = scmp.lt.s32.totalorder %s874, 15
      %s876 = scalar_select %p875, %s874, 15
      %p877 = scmp.lt.s32.totalorder %s19, 0
      %s878 = scalar_select %p877, %s19, 0
      %s879 = sadd.s32 %s878, %s876
      %s880 = smul.addr %s879, 4
      %s881 = scalar_lea.vmem %s3, %s880
      // Predicated region
      $region33: #{discriminator_unet_forward.15} parent=31 // pred_check
        %p882 = pneg %p126
      $region34: #{discriminator_unet_forward.15} parent=31 // pred_check_branch
        %884 = sbr.rel (%p882) target = $region36
      $region35: #{discriminator_unet_forward.15} parent=31 // pred_region
        %s885 = smul.u32 8, %s18
      $region36: #{discriminator_unet_forward.15} parent=31 // pred_fallthru
        _
    $region32: #{discriminator_unet_forward.15} parent=5 // pred_fallthru
      _
    %p886 = scmp.le.s32.totalorder 2, %s9
    // Predicated region
    $region37: #{discriminator_unet_forward.15} parent=5 // pred_check
      %p887 = pneg %p886
    $region38: #{discriminator_unet_forward.15} parent=5 // pred_check_branch
      %889 = sbr.rel (%p887) target = $region40
    $region39: #{discriminator_unet_forward.15} parent=5 // pred_region
      %s890 = ssub.s32 %s9, 2
      // Predicated region
      $region41: #{discriminator_unet_forward.15} parent=39 // pred_check
        %p891 = pneg %p132
      $region42: #{discriminator_unet_forward.15} parent=39 // pred_check_branch
        %893 = sbr.rel (%p891) target = $region44
      $region43: #{discriminator_unet_forward.15} parent=39 // pred_region
        %s894 = smul.u32 8, %s20
        %p895 = scmp.lt.s32.totalorder %s894, 15
        %s896 = scalar_select %p895, %s894, 15
        %p897 = scmp.lt.s32.totalorder %s21, 0
        %s898 = scalar_select %p897, %s21, 0
        %s899 = sadd.s32 %s898, %s896
        %s900 = smul.addr %s899, 4
        %s901 = scalar_lea.vmem %s3, %s900
      $region44: #{discriminator_unet_forward.15} parent=39 // pred_fallthru
        _
    $region40: #{discriminator_unet_forward.15} parent=5 // pred_fallthru
      _
  $region6: #{discriminator_unet_forward.15} parent=0 // loop_footer
    %s13 = sadd.s32 1, %s9
  $region7: #{discriminator_unet_forward.15} parent=0 // loop_footer_branch
    %8 = sbr.rel target = $region3
  $region8: #{discriminator_unet_forward.15} parent=0 // loop_exit
    _

// kernel: discriminator_unet_forward.16
$region0: #{discriminator_unet_forward.16}
  #allocation0 [shape = 'u32[]', space=smem, size = 0x4, offset = 0x4, fixed_abs, tag = 'smem constant byte address 0x4 - core index']
  #allocation1 [shape = 'u32[72,128]{1,0:T(1,128)}', space=vmem, size = 0x9000, scoped, tag = 'internal scratch']
  %s0 = inlined_call_operand.vmem [shape: bf16[512,288], index: 0, kind: input, shape index: {}]
  %s1 = inlined_call_operand.vmem [shape: bf16[288,128], index: 1, kind: input, shape index: {}]
  %s2 = inlined_call_operand.vmem [shape: bf16[512,128], index: 2, kind: input, shape index: {}]
  %s3 = inlined_call_operand.vmem [shape: bf16[512,128], index: 3, kind: output, shape index: {}]
  %s4 = sld [smem:[#allocation0]]
  $region45: #{discriminator_unet_forward.16} parent=0
    _
  %s6 = ssub.s32 1, %s4
  %s7 = scalar_select 0, %s6, %s4
  loop: start=0, step=1, limit=4
  $region2: #{discriminator_unet_forward.16} parent=0 // loop_pre_header
    _
  $region3: #{discriminator_unet_forward.16} parent=0 // loop_header
    %s9 = sphi 0, %s13
    %p10 = scmp.ge.s32.totalorder %s9, 4
    %s16 = sphi 0, %s28
    %s17 = sphi 0, %s24
    %s18 = sphi 0, %s16
    %s19 = sphi 0, %s17
    %s20 = sphi 0, %s18
    %s21 = sphi 0, %s19
    %s31 = sphi 0, %s33
    %s34 = sphi 0, %s31
    %s35 = sphi 0, %s34
    %s51 = sphi 0, %s35
    %s57 = sphi 0, %s59
    %s60 = sphi 0, %s57
    %s61 = sphi 0, %s60
    %s77 = sphi 0, %s61
    %s85 = sphi 0, %s87
    %s88 = sphi 0, %s85
    %s89 = sphi 0, %s88
    %s105 = sphi 0, %s89
    %s113 = sphi 0, %s115
    %s116 = sphi 0, %s113
    %s117 = sphi 0, %s116
    %s133 = sphi 0, %s117
  $region4: #{discriminator_unet_forward.16} parent=0 // loop_header_branch
    %12 = sbr.rel (%p10) target = $region8
  $region5: #{discriminator_unet_forward.16} parent=0 // loop_body
    %s14 = ssub.s32 %s9, 1
    %s15 = ssub.s32 %s9, 2
    %s22 = sadd.s32 1, %s17
    %p23 = scmp.ge.s32.totalorder %s22, 1
    %s24 = scalar_select %p23, 0, %s22
    %s25 = sadd.s32 1, %s16
    %s26 = scalar_select %p23, %s25, %s16
    %p27 = scmp.ge.s32.totalorder %s26, 2
    %s28 = scalar_select %p27, 0, %s26
    %s29 = ssub.s32 %s16, %s28
    %p30 = scmp.eq.s32.totalorder %s29, 0
    %s32 = sadd.s32 %s31, 1
    %s33 = scalar_select %p30, %s31, %s32
    %p36 = pneg %p30
    %p37 = scmp.eq.s32.totalorder %s9, 1
    %p38 = por %p36, %p37
    %p39 = scmp.ne.s32.totalorder %s31, %s34
    %p40 = scmp.eq.s32.totalorder %s9, 0
    %p41 = por %p39, %p40
    %p42 = scmp.ne.s32.totalorder %s31, %s34
    %p43 = scmp.eq.s32.totalorder %s14, 1
    %p44 = por %p42, %p43
    %p45 = scmp.ne.s32.totalorder %s34, %s35
    %p46 = scmp.eq.s32.totalorder %s14, 0
    %p47 = por %p45, %p46
    %p48 = scmp.ne.s32.totalorder %s34, %s35
    %p49 = scmp.eq.s32.totalorder %s15, 1
    %p50 = por %p48, %p49
    %p52 = scmp.ne.s32.totalorder %s35, %s51
    %p53 = scmp.eq.s32.totalorder %s15, 0
    %p54 = por %p52, %p53
    %s55 = ssub.s32 %s17, %s24
    %p56 = scmp.eq.s32.totalorder %s55, 0
    %s58 = sadd.s32 %s57, 1
    %s59 = scalar_select %p56, %s57, %s58
    %p62 = pneg %p56
    %p63 = scmp.eq.s32.totalorder %s9, 1
    %p64 = por %p62, %p63
    %p65 = scmp.ne.s32.totalorder %s57, %s60
    %p66 = scmp.eq.s32.totalorder %s9, 0
    %p67 = por %p65, %p66
    %p68 = scmp.ne.s32.totalorder %s57, %s60
    %p69 = scmp.eq.s32.totalorder %s14, 1
    %p70 = por %p68, %p69
    %p71 = scmp.ne.s32.totalorder %s60, %s61
    %p72 = scmp.eq.s32.totalorder %s14, 0
    %p73 = por %p71, %p72
    %p74 = scmp.ne.s32.totalorder %s60, %s61
    %p75 = scmp.eq.s32.totalorder %s15, 1
    %p76 = por %p74, %p75
    %p78 = scmp.ne.s32.totalorder %s61, %s77
    %p79 = scmp.eq.s32.totalorder %s15, 0
    %p80 = por %p78, %p79
    %s81 = ssub.s32 %s16, %s28
    %s82 = ssub.s32 %s17, %s24
    %s83 = sor.u32 %s81, %s82
    %p84 = scmp.eq.s32.totalorder %s83, 0
    %s86 = sadd.s32 %s85, 1
    %s87 = scalar_select %p84, %s85, %s86
    %p90 = pneg %p84
    %p91 = scmp.eq.s32.totalorder %s9, 1
    %p92 = por %p90, %p91
    %p93 = scmp.ne.s32.totalorder %s85, %s88
    %p94 = scmp.eq.s32.totalorder %s9, 0
    %p95 = por %p93, %p94
    %p96 = scmp.ne.s32.totalorder %s85, %s88
    %p97 = scmp.eq.s32.totalorder %s14, 1
    %p98 = por %p96, %p97
    %p99 = scmp.ne.s32.totalorder %s88, %s89
    %p100 = scmp.eq.s32.totalorder %s14, 0
    %p101 = por %p99, %p100
    %p102 = scmp.ne.s32.totalorder %s88, %s89
    %p103 = scmp.eq.s32.totalorder %s15, 1
    %p104 = por %p102, %p103
    %p106 = scmp.ne.s32.totalorder %s89, %s105
    %p107 = scmp.eq.s32.totalorder %s15, 0
    %p108 = por %p106, %p107
    %s109 = ssub.s32 %s16, %s28
    %s110 = ssub.s32 %s17, %s24
    %s111 = sor.u32 %s109, %s110
    %p112 = scmp.eq.s32.totalorder %s111, 0
    %s114 = sadd.s32 %s113, 1
    %s115 = scalar_select %p112, %s113, %s114
    %p118 = pneg %p112
    %p119 = scmp.eq.s32.totalorder %s9, 1
    %p120 = por %p118, %p119
    %p121 = scmp.ne.s32.totalorder %s113, %s116
    %p122 = scmp.eq.s32.totalorder %s9, 0
    %p123 = por %p121, %p122
    %p124 = scmp.ne.s32.totalorder %s113, %s116
    %p125 = scmp.eq.s32.totalorder %s14, 1
    %p126 = por %p124, %p125
    %p127 = scmp.ne.s32.totalorder %s116, %s117
    %p128 = scmp.eq.s32.totalorder %s14, 0
    %p129 = por %p127, %p128
    %p130 = scmp.ne.s32.totalorder %s116, %s117
    %p131 = scmp.eq.s32.totalorder %s15, 1
    %p132 = por %p130, %p131
    %p134 = scmp.ne.s32.totalorder %s117, %s133
    %p135 = scmp.eq.s32.totalorder %s15, 0
    %p136 = por %p134, %p135
    %p137 = scmp.le.s32.totalorder 1, %s9
    %p138 = scmp.lt.s32.totalorder %s9, 3
    %p139 = pnand %p137, %p138
    %p140 = pneg %p139
    // Predicated region
    $region9: #{discriminator_unet_forward.16} parent=5 // pred_check
      _
    $region10: #{discriminator_unet_forward.16} parent=5 // pred_check_branch
      %142 = sbr.rel (%p139) target = $region12
    $region11: #{discriminator_unet_forward.16} parent=5 // pred_region
      %s143 = ssub.s32 %s9, 1
      // Predicated region
      $region13: #{discriminator_unet_forward.16} parent=11 // pred_check
        %p144 = pneg %p73
      $region14: #{discriminator_unet_forward.16} parent=11 // pred_check_branch
        %146 = sbr.rel (%p144) target = $region16
      $region15: #{discriminator_unet_forward.16} parent=11 // pred_region
        %p147 = scmp.lt.s32.totalorder %s19, 0
        %s148 = scalar_select %p147, %s19, 0
        %s149 = smul.addr %s148, 4
        %s150 = scalar_lea.vmem %s1, %s149
      $region16: #{discriminator_unet_forward.16} parent=11 // pred_fallthru
        _
    $region12: #{discriminator_unet_forward.16} parent=5 // pred_fallthru
      _
    %p151 = scmp.lt.s32.totalorder %s9, 2
    // Predicated region
    $region17: #{discriminator_unet_forward.16} parent=5 // pred_check
      %p152 = pneg %p151
    $region18: #{discriminator_unet_forward.16} parent=5 // pred_check_branch
      %154 = sbr.rel (%p152) target = $region20
    $region19: #{discriminator_unet_forward.16} parent=5 // pred_region
      // Predicated region
      $region21: #{discriminator_unet_forward.16} parent=19 // pred_check
        %p155 = pneg %p41
      $region22: #{discriminator_unet_forward.16} parent=19 // pred_check_branch
        %157 = sbr.rel (%p155) target = $region24
      $region23: #{discriminator_unet_forward.16} parent=19 // pred_region
        %s158 = smul.u32 32, %s16
        %p159 = scmp.lt.s32.totalorder %s158, 63
        %s160 = scalar_select %p159, %s158, 63
        %s161 = smul.addr %s160, 3
        %s162 = smul.addr %s161, 4
        %s163 = scalar_lea.vmem %s0, %s162
        %s164 = smul.u32 32, %s16
      $region24: #{discriminator_unet_forward.16} parent=19 // pred_fallthru
        _
      // Predicated region
      $region25: #{discriminator_unet_forward.16} parent=19 // pred_check
        %p165 = pneg %p95
      $region26: #{discriminator_unet_forward.16} parent=19 // pred_check_branch
        %167 = sbr.rel (%p165) target = $region28
      $region27: #{discriminator_unet_forward.16} parent=19 // pred_region
        %s168 = smul.u32 32, %s16
        %p169 = scmp.lt.s32.totalorder %s168, 63
        %s170 = scalar_select %p169, %s168, 63
        %p171 = scmp.lt.s32.totalorder %s17, 0
        %s172 = scalar_select %p171, %s17, 0
        %s173 = sadd.s32 %s172, %s170
        %s174 = smul.addr %s173, 4
        %s175 = scalar_lea.vmem %s2, %s174
        %s176 = smul.u32 32, %s16
      $region28: #{discriminator_unet_forward.16} parent=19 // pred_fallthru
        _
    $region20: #{discriminator_unet_forward.16} parent=5 // pred_fallthru
      _
    %p177 = scmp.le.s32.totalorder 1, %s9
    %p178 = scmp.lt.s32.totalorder %s9, 3
    %p179 = pnand %p177, %p178
    %p180 = pneg %p179
    // Predicated region
    $region29: #{discriminator_unet_forward.16} parent=5 // pred_check
      _
    $region30: #{discriminator_unet_forward.16} parent=5 // pred_check_branch
      %182 = sbr.rel (%p179) target = $region32
    $region31: #{discriminator_unet_forward.16} parent=5 // pred_region
      %s183 = ssub.s32 %s9, 1
      %s184 = smul.u32 32, %s18
      %p185 = scmp.lt.s32.totalorder %s184, 63
      %s186 = scalar_select %p185, %s184, 63
      %s187 = smul.addr %s186, 3
      %s188 = smul.addr %s187, 4
      %s189 = scalar_lea.vmem %s0, %s188
      %p190 = pneg %p47
      %p191 = pneg %p44
      %p192 = scmp.lt.s32.totalorder %s19, 0
      %s193 = scalar_select %p192, %s19, 0
      %s194 = smul.addr %s193, 4
      %s195 = scalar_lea.vmem %s1, %s194
      %p196 = pneg %p73
      %p197 = pneg %p70
      %s198 = smul.u32 32, %s18
      %p199 = scmp.lt.s32.totalorder %s198, 63
      %s200 = scalar_select %p199, %s198, 63
      %p201 = scmp.lt.s32.totalorder %s19, 0
      %s202 = scalar_select %p201, %s19, 0
      %s203 = sadd.s32 %s202, %s200
      %s204 = smul.addr %s203, 4
      %s205 = scalar_lea.vmem %s2, %s204
      %p206 = pneg %p101
      %p207 = pneg %p98
      %p208 = pneg %p129
      %p209 = pneg %p126
      %s210 = smul.u32 32, %s18
      %p211 = scmp.lt.s32.totalorder %s210, 63
      %s212 = scalar_select %p211, %s210, 63
      %p213 = scmp.lt.s32.totalorder %s19, 0
      %s214 = scalar_select %p213, %s19, 0
      %s215 = sadd.s32 %s214, %s212
      %s216 = smul.addr %s215, 4
      %s217 = scalar_lea.vmem %s3, %s216
      %s218 = smul.u32 32, %s18
      %p219 = scmp.lt.s32.totalorder %s218, 63
      %s220 = scalar_select %p219, %s218, 63
      %s221 = smul.addr %s220, 3
      %s222 = smul.addr %s221, 4
      %s223 = scalar_lea.vmem %s0, %s222
      %s224 = smul.u32 32, %s18
      %p225 = scmp.lt.s32.totalorder %s19, 0
      %s226 = scalar_select %p225, %s19, 0
      %s227 = smul.addr %s226, 4
      %s228 = scalar_lea.vmem %s1, %s227
      %s229 = smul.u32 32, %s18
      %p230 = scmp.lt.s32.totalorder %s229, 63
      %s231 = scalar_select %p230, %s229, 63
      %p232 = scmp.lt.s32.totalorder %s19, 0
      %s233 = scalar_select %p232, %s19, 0
      %s234 = sadd.s32 %s233, %s231
      %s235 = smul.addr %s234, 4
      %s236 = scalar_lea.vmem %s2, %s235
      %s237 = smul.u32 32, %s18
      %s238 = smul.u32 32, %s18
      %p239 = scmp.lt.s32.totalorder %s238, 63
      %s240 = scalar_select %p239, %s238, 63
      %p241 = scmp.lt.s32.totalorder %s19, 0
      %s242 = scalar_select %p241, %s19, 0
      %s243 = sadd.s32 %s242, %s240
      %s244 = smul.addr %s243, 4
      %s245 = scalar_lea.vmem %s3, %s244
      %s246 = smul.u32 32, %s18
      %v248 = vld [vmem:[%s223] sm:$0xff]
      %v249 = vld [vmem:[%s223 + $0x8] sm:$0xf]
      %v250 = vld [vmem:[%s223 + $0xc] sm:$0xff]
      %v251 = vld [vmem:[%s223 + $0x14] sm:$0xf]
      %v252 = vld [vmem:[%s223 + $0x18] sm:$0xff]
      %v253 = vld [vmem:[%s223 + $0x20] sm:$0xf]
      %v254 = vld [vmem:[%s223 + $0x24] sm:$0xff]
      %v255 = vld [vmem:[%s223 + $0x2c] sm:$0xf]
      %v256 = vld [vmem:[%s223 + $0x30] sm:$0xff]
      %v257 = vld [vmem:[%s223 + $0x38] sm:$0xf]
      %v258 = vld [vmem:[%s223 + $0x3c] sm:$0xff]
      %v259 = vld [vmem:[%s223 + $0x44] sm:$0xf]
      %v260 = vld [vmem:[%s223 + $0x48] sm:$0xff]
      %v261 = vld [vmem:[%s223 + $0x50] sm:$0xf]
      %v262 = vld [vmem:[%s223 + $0x54] sm:$0xff]
      %v263 = vld [vmem:[%s223 + $0x5c] sm:$0xf]
      %v264 = vld [vmem:[%s223 + $0x60] sm:$0xff]
      %v265 = vld [vmem:[%s223 + $0x68] sm:$0xf]
      %v266 = vld [vmem:[%s223 + $0x6c] sm:$0xff]
      %v267 = vld [vmem:[%s223 + $0x74] sm:$0xf]
      %v268 = vld [vmem:[%s223 + $0x78] sm:$0xff]
      %v269 = vld [vmem:[%s223 + $0x80] sm:$0xf]
      %v270 = vld [vmem:[%s223 + $0x84] sm:$0xff]
      %v271 = vld [vmem:[%s223 + $0x8c] sm:$0xf]
      %v272 = vld [vmem:[%s223 + $0x90] sm:$0xff]
      %v273 = vld [vmem:[%s223 + $0x98] sm:$0xf]
      %v274 = vld [vmem:[%s223 + $0x9c] sm:$0xff]
      %v275 = vld [vmem:[%s223 + $0xa4] sm:$0xf]
      %v276 = vld [vmem:[%s223 + $0xa8] sm:$0xff]
      %v277 = vld [vmem:[%s223 + $0xb0] sm:$0xf]
      %v278 = vld [vmem:[%s223 + $0xb4] sm:$0xff]
      %v279 = vld [vmem:[%s223 + $0xbc] sm:$0xf]
      %v280 = vld [vmem:[%s223 + $0xc0] sm:$0xff]
      %v281 = vld [vmem:[%s223 + $0xc8] sm:$0xf]
      %v282 = vld [vmem:[%s223 + $0xcc] sm:$0xff]
      %v283 = vld [vmem:[%s223 + $0xd4] sm:$0xf]
      %v284 = vld [vmem:[%s223 + $0xd8] sm:$0xff]
      %v285 = vld [vmem:[%s223 + $0xe0] sm:$0xf]
      %v286 = vld [vmem:[%s223 + $0xe4] sm:$0xff]
      %v287 = vld [vmem:[%s223 + $0xec] sm:$0xf]
      %v288 = vld [vmem:[%s223 + $0xf0] sm:$0xff]
      %v289 = vld [vmem:[%s223 + $0xf8] sm:$0xf]
      %v290 = vld [vmem:[%s223 + $0xfc] sm:$0xff]
      %v291 = vld [vmem:[%s223 + $0x104] sm:$0xf]
      %v292 = vld [vmem:[%s223 + $0x108] sm:$0xff]
      %v293 = vld [vmem:[%s223 + $0x110] sm:$0xf]
      %v294 = vld [vmem:[%s223 + $0x114] sm:$0xff]
      %v295 = vld [vmem:[%s223 + $0x11c] sm:$0xf]
      %v296 = vld [vmem:[%s223 + $0x120] sm:$0xff]
      %v297 = vld [vmem:[%s223 + $0x128] sm:$0xf]
      %v298 = vld [vmem:[%s223 + $0x12c] sm:$0xff]
      %v299 = vld [vmem:[%s223 + $0x134] sm:$0xf]
      %v300 = vld [vmem:[%s223 + $0x138] sm:$0xff]
      %v301 = vld [vmem:[%s223 + $0x140] sm:$0xf]
      %v302 = vld [vmem:[%s223 + $0x144] sm:$0xff]
      %v303 = vld [vmem:[%s223 + $0x14c] sm:$0xf]
      %v304 = vld [vmem:[%s223 + $0x150] sm:$0xff]
      %v305 = vld [vmem:[%s223 + $0x158] sm:$0xf]
      %v306 = vld [vmem:[%s223 + $0x15c] sm:$0xff]
      %v307 = vld [vmem:[%s223 + $0x164] sm:$0xf]
      %v308 = vld [vmem:[%s223 + $0x168] sm:$0xff]
      %v309 = vld [vmem:[%s223 + $0x170] sm:$0xf]
      %v310 = vld [vmem:[%s223 + $0x174] sm:$0xff]
      %v311 = vld [vmem:[%s223 + $0x17c] sm:$0xf]
      %v312 = vld [vmem:[%s228] sm:$0xf]
      %v313 = vld [vmem:[%s228 + $0x4] sm:$0xf]
      %v314 = vld [vmem:[%s228 + $0x8] sm:$0xf]
      %v315 = vld [vmem:[%s228 + $0xc] sm:$0xf]
      %v316 = vld [vmem:[%s228 + $0x10] sm:$0xf]
      %v317 = vld [vmem:[%s228 + $0x14] sm:$0xf]
      %v318 = vld [vmem:[%s228 + $0x18] sm:$0xf]
      %v319 = vld [vmem:[%s228 + $0x1c] sm:$0xf]
      %v320 = vld [vmem:[%s228 + $0x20] sm:$0xf]
      %v321 = vld [vmem:[%s228 + $0x24] sm:$0xf]
      %v322 = vld [vmem:[%s228 + $0x28] sm:$0xf]
      %v323 = vld [vmem:[%s228 + $0x2c] sm:$0xf]
      %v324 = vld [vmem:[%s228 + $0x30] sm:$0xf]
      %v325 = vld [vmem:[%s228 + $0x34] sm:$0xf]
      %v326 = vld [vmem:[%s228 + $0x38] sm:$0xf]
      %v327 = vld [vmem:[%s228 + $0x3c] sm:$0xf]
      %v328 = vld [vmem:[%s228 + $0x40] sm:$0xf]
      %v329 = vld [vmem:[%s228 + $0x44] sm:$0xf]
      %v330 = vld [vmem:[%s228 + $0x48] sm:$0xf]
      %v331 = vld [vmem:[%s228 + $0x4c] sm:$0xf]
      %v332 = vld [vmem:[%s228 + $0x50] sm:$0xf]
      %v333 = vld [vmem:[%s228 + $0x54] sm:$0xf]
      %v334 = vld [vmem:[%s228 + $0x58] sm:$0xf]
      %v335 = vld [vmem:[%s228 + $0x5c] sm:$0xf]
      %v336 = vld [vmem:[%s228 + $0x60] sm:$0xf]
      %v337 = vld [vmem:[%s228 + $0x64] sm:$0xf]
      %v338 = vld [vmem:[%s228 + $0x68] sm:$0xf]
      %v339 = vld [vmem:[%s228 + $0x6c] sm:$0xf]
      %v340 = vld [vmem:[%s228 + $0x70] sm:$0xf]
      %v341 = vld [vmem:[%s228 + $0x74] sm:$0xf]
      %v342 = vld [vmem:[%s228 + $0x78] sm:$0xf]
      %v343 = vld [vmem:[%s228 + $0x7c] sm:$0xf]
      %v344 = vld [vmem:[%s228 + $0x80] sm:$0xf]
      %v345 = vld [vmem:[%s228 + $0x84] sm:$0xf]
      %v346 = vld [vmem:[%s228 + $0x88] sm:$0xf]
      %v347 = vld [vmem:[%s228 + $0x8c] sm:$0xf]
      %v412 = vunpack.c.l.b16 %v248
      %v413 = vunpack.c.h.b16 %v248
      %v414 = vunpack.c.l.b16 %v249
      %v415 = vunpack.c.l.b16 %v250
      %v416 = vunpack.c.h.b16 %v250
      %v417 = vunpack.c.l.b16 %v251
      %v418 = vunpack.c.l.b16 %v252
      %v419 = vunpack.c.h.b16 %v252
      %v420 = vunpack.c.l.b16 %v253
      %v421 = vunpack.c.l.b16 %v254
      %v422 = vunpack.c.h.b16 %v254
      %v423 = vunpack.c.l.b16 %v255
      %v424 = vunpack.c.l.b16 %v256
      %v425 = vunpack.c.h.b16 %v256
      %v426 = vunpack.c.l.b16 %v257
      %v427 = vunpack.c.l.b16 %v258
      %v428 = vunpack.c.h.b16 %v258
      %v429 = vunpack.c.l.b16 %v259
      %v430 = vunpack.c.l.b16 %v260
      %v431 = vunpack.c.h.b16 %v260
      %v432 = vunpack.c.l.b16 %v261
      %v433 = vunpack.c.l.b16 %v262
      %v434 = vunpack.c.h.b16 %v262
      %v435 = vunpack.c.l.b16 %v263
      %v436 = vunpack.c.l.b16 %v264
      %v437 = vunpack.c.h.b16 %v264
      %v438 = vunpack.c.l.b16 %v265
      %v439 = vunpack.c.l.b16 %v266
      %v440 = vunpack.c.h.b16 %v266
      %v441 = vunpack.c.l.b16 %v267
      %v442 = vunpack.c.l.b16 %v268
      %v443 = vunpack.c.h.b16 %v268
      %v444 = vunpack.c.l.b16 %v269
      %v445 = vunpack.c.l.b16 %v270
      %v446 = vunpack.c.h.b16 %v270
      %v447 = vunpack.c.l.b16 %v271
      %v448 = vunpack.c.l.b16 %v272
      %v449 = vunpack.c.h.b16 %v272
      %v450 = vunpack.c.l.b16 %v273
      %v451 = vunpack.c.l.b16 %v274
      %v452 = vunpack.c.h.b16 %v274
      %v453 = vunpack.c.l.b16 %v275
      %v454 = vunpack.c.l.b16 %v276
      %v455 = vunpack.c.h.b16 %v276
      %v456 = vunpack.c.l.b16 %v277
      %v457 = vunpack.c.l.b16 %v278
      %v458 = vunpack.c.h.b16 %v278
      %v459 = vunpack.c.l.b16 %v279
      %v460 = vunpack.c.l.b16 %v280
      %v461 = vunpack.c.h.b16 %v280
      %v462 = vunpack.c.l.b16 %v281
      %v463 = vunpack.c.l.b16 %v282
      %v464 = vunpack.c.h.b16 %v282
      %v465 = vunpack.c.l.b16 %v283
      %v466 = vunpack.c.l.b16 %v284
      %v467 = vunpack.c.h.b16 %v284
      %v468 = vunpack.c.l.b16 %v285
      %v469 = vunpack.c.l.b16 %v286
      %v470 = vunpack.c.h.b16 %v286
      %v471 = vunpack.c.l.b16 %v287
      %v472 = vunpack.c.l.b16 %v288
      %v473 = vunpack.c.h.b16 %v288
      %v474 = vunpack.c.l.b16 %v289
      %v475 = vunpack.c.l.b16 %v290
      %v476 = vunpack.c.h.b16 %v290
      %v477 = vunpack.c.l.b16 %v291
      %v478 = vunpack.c.l.b16 %v292
      %v479 = vunpack.c.h.b16 %v292
      %v480 = vunpack.c.l.b16 %v293
      %v481 = vunpack.c.l.b16 %v294
      %v482 = vunpack.c.h.b16 %v294
      %v483 = vunpack.c.l.b16 %v295
      %v484 = vunpack.c.l.b16 %v296
      %v485 = vunpack.c.h.b16 %v296
      %v486 = vunpack.c.l.b16 %v297
      %v487 = vunpack.c.l.b16 %v298
      %v488 = vunpack.c.h.b16 %v298
      %v489 = vunpack.c.l.b16 %v299
      %v490 = vunpack.c.l.b16 %v300
      %v491 = vunpack.c.h.b16 %v300
      %v492 = vunpack.c.l.b16 %v301
      %v493 = vunpack.c.l.b16 %v302
      %v494 = vunpack.c.h.b16 %v302
      %v495 = vunpack.c.l.b16 %v303
      %v496 = vunpack.c.l.b16 %v304
      %v497 = vunpack.c.h.b16 %v304
      %v498 = vunpack.c.l.b16 %v305
      %v499 = vunpack.c.l.b16 %v306
      %v500 = vunpack.c.h.b16 %v306
      %v501 = vunpack.c.l.b16 %v307
      %v502 = vunpack.c.l.b16 %v308
      %v503 = vunpack.c.h.b16 %v308
      %v504 = vunpack.c.l.b16 %v309
      %v505 = vunpack.c.l.b16 %v310
      %v506 = vunpack.c.h.b16 %v310
      %v507 = vunpack.c.l.b16 %v311
      %v508 = vpack.c.b16 %v415, %v412
      %v509 = vpack.c.b16 %v416, %v413
      %v510 = vpack.c.b16 %v417, %v414
      %v511 = vpack.c.b16 %v421, %v418
      %v512 = vpack.c.b16 %v422, %v419
      %v513 = vpack.c.b16 %v423, %v420
      %v514 = vpack.c.b16 %v427, %v424
      %v515 = vpack.c.b16 %v428, %v425
      %v516 = vpack.c.b16 %v429, %v426
      %v517 = vpack.c.b16 %v433, %v430
      %v518 = vpack.c.b16 %v434, %v431
      %v519 = vpack.c.b16 %v435, %v432
      %v520 = vpack.c.b16 %v439, %v436
      %v521 = vpack.c.b16 %v440, %v437
      %v522 = vpack.c.b16 %v441, %v438
      %v523 = vpack.c.b16 %v445, %v442
      %v524 = vpack.c.b16 %v446, %v443
      %v525 = vpack.c.b16 %v447, %v444
      %v526 = vpack.c.b16 %v451, %v448
      %v527 = vpack.c.b16 %v452, %v449
      %v528 = vpack.c.b16 %v453, %v450
      %v529 = vpack.c.b16 %v457, %v454
      %v530 = vpack.c.b16 %v458, %v455
      %v531 = vpack.c.b16 %v459, %v456
      %v532 = vpack.c.b16 %v463, %v460
      %v533 = vpack.c.b16 %v464, %v461
      %v534 = vpack.c.b16 %v465, %v462
      %v535 = vpack.c.b16 %v469, %v466
      %v536 = vpack.c.b16 %v470, %v467
      %v537 = vpack.c.b16 %v471, %v468
      %v538 = vpack.c.b16 %v475, %v472
      %v539 = vpack.c.b16 %v476, %v473
      %v540 = vpack.c.b16 %v477, %v474
      %v541 = vpack.c.b16 %v481, %v478
      %v542 = vpack.c.b16 %v482, %v479
      %v543 = vpack.c.b16 %v483, %v480
      %v544 = vpack.c.b16 %v487, %v484
      %v545 = vpack.c.b16 %v488, %v485
      %v546 = vpack.c.b16 %v489, %v486
      %v547 = vpack.c.b16 %v493, %v490
      %v548 = vpack.c.b16 %v494, %v491
      %v549 = vpack.c.b16 %v495, %v492
      %v550 = vpack.c.b16 %v499, %v496
      %v551 = vpack.c.b16 %v500, %v497
      %v552 = vpack.c.b16 %v501, %v498
      %v553 = vpack.c.b16 %v505, %v502
      %v554 = vpack.c.b16 %v506, %v503
      %v555 = vpack.c.b16 %v507, %v504
      %v624 = vunpack.c.l.b16 %v312
      %v625 = vunpack.c.l.b16 %v313
      %v626 = vunpack.c.l.b16 %v314
      %v627 = vunpack.c.l.b16 %v315
      %v628 = vunpack.c.l.b16 %v316
      %v629 = vunpack.c.l.b16 %v317
      %v630 = vunpack.c.l.b16 %v318
      %v631 = vunpack.c.l.b16 %v319
      %v632 = vunpack.c.l.b16 %v320
      %v633 = vunpack.c.l.b16 %v321
      %v634 = vunpack.c.l.b16 %v322
      %v635 = vunpack.c.l.b16 %v323
      %v636 = vunpack.c.l.b16 %v324
      %v637 = vunpack.c.l.b16 %v325
      %v638 = vunpack.c.l.b16 %v326
      %v639 = vunpack.c.l.b16 %v327
      %v640 = vunpack.c.l.b16 %v328
      %v641 = vunpack.c.l.b16 %v329
      %v642 = vunpack.c.l.b16 %v330
      %v643 = vunpack.c.l.b16 %v331
      %v644 = vunpack.c.l.b16 %v332
      %v645 = vunpack.c.l.b16 %v333
      %v646 = vunpack.c.l.b16 %v334
      %v647 = vunpack.c.l.b16 %v335
      %v648 = vunpack.c.l.b16 %v336
      %v649 = vunpack.c.l.b16 %v337
      %v650 = vunpack.c.l.b16 %v338
      %v651 = vunpack.c.l.b16 %v339
      %v652 = vunpack.c.l.b16 %v340
      %v653 = vunpack.c.l.b16 %v341
      %v654 = vunpack.c.l.b16 %v342
      %v655 = vunpack.c.l.b16 %v343
      %v656 = vunpack.c.l.b16 %v344
      %v657 = vunpack.c.l.b16 %v345
      %v658 = vunpack.c.l.b16 %v346
      %v659 = vunpack.c.l.b16 %v347
      %v660 = vpack.c.b16 %v625, %v624
      %v661 = vpack.c.b16 %v627, %v626
      %v662 = vpack.c.b16 %v629, %v628
      %v663 = vpack.c.b16 %v631, %v630
      %v664 = vpack.c.b16 %v633, %v632
      %v665 = vpack.c.b16 %v635, %v634
      %v666 = vpack.c.b16 %v637, %v636
      %v667 = vpack.c.b16 %v639, %v638
      %v668 = vpack.c.b16 %v641, %v640
      %v669 = vpack.c.b16 %v643, %v642
      %v670 = vpack.c.b16 %v645, %v644
      %v671 = vpack.c.b16 %v647, %v646
      %v672 = vpack.c.b16 %v649, %v648
      %v673 = vpack.c.b16 %v651, %v650
      %v674 = vpack.c.b16 %v653, %v652
      %v675 = vpack.c.b16 %v655, %v654
      %v676 = vpack.c.b16 %v657, %v656
      %v677 = vpack.c.b16 %v659, %v658
      %vm696 = vcmask 261120
      %v698 = vsel %vm696, %v510, 0
      %v701 = vsel %vm696, %v513, 0
      %v704 = vsel %vm696, %v516, 0
      %v707 = vsel %vm696, %v519, 0
      %v710 = vsel %vm696, %v522, 0
      %v713 = vsel %vm696, %v525, 0
      %v716 = vsel %vm696, %v528, 0
      %v719 = vsel %vm696, %v531, 0
      %v722 = vsel %vm696, %v534, 0
      %v725 = vsel %vm696, %v537, 0
      %v728 = vsel %vm696, %v540, 0
      %v731 = vsel %vm696, %v543, 0
      %v734 = vsel %vm696, %v546, 0
      %v737 = vsel %vm696, %v549, 0
      %v740 = vsel %vm696, %v552, 0
      %v743 = vsel %vm696, %v555, 0
      %745 = vmatpush.bf16.msra.mxu0 %v667
      %746 = vmatpush.bf16.msra.mxu0 %v666
      %747 = vmatpush.bf16.msra.mxu0 %v665
      %748 = vmatpush.bf16.msra.mxu0 %v664
      %749 = vmatpush.bf16.msra.mxu0 %v663
      %750 = vmatpush.bf16.msra.mxu0 %v662
      %751 = vmatpush.bf16.msra.mxu0 %v661
      %752 = vmatpush.bf16.msra.mxu0 %v660
      %753 = vmatmul.bf16.gmra.mxu0 %v508
      %v754 = vpop.f32.mrf.mxu0
      %v755 = vadd.f32 0.0, %v754
      %v756 = vpop.f32.mrf.mxu0
      %v757 = vadd.f32 0.0, %v756
      %758 = vmatmul.bf16.gmra.mxu0 %v511
      %v759 = vpop.f32.mrf.mxu0
      %v760 = vadd.f32 0.0, %v759
      %v761 = vpop.f32.mrf.mxu0
      %v762 = vadd.f32 0.0, %v761
      %763 = vmatmul.bf16.gmra.mxu0 %v514
      %v764 = vpop.f32.mrf.mxu0
      %v765 = vadd.f32 0.0, %v764
      %v766 = vpop.f32.mrf.mxu0
      %v767 = vadd.f32 0.0, %v766
      %768 = vmatmul.bf16.gmra.mxu0 %v517
      %v769 = vpop.f32.mrf.mxu0
      %v770 = vadd.f32 0.0, %v769
      %v771 = vpop.f32.mrf.mxu0
      %v772 = vadd.f32 0.0, %v771
      %773 = vmatmul.bf16.gmra.mxu0 %v520
      %v774 = vpop.f32.mrf.mxu0
      %v775 = vadd.f32 0.0, %v774
      %v776 = vpop.f32.mrf.mxu0
      %v777 = vadd.f32 0.0, %v776
      %778 = vmatmul.bf16.gmra.mxu0 %v523
      %v779 = vpop.f32.mrf.mxu0
      %v780 = vadd.f32 0.0, %v779
      %v781 = vpop.f32.mrf.mxu0
      %v782 = vadd.f32 0.0, %v781
      %783 = vmatmul.bf16.gmra.mxu0 %v526
      %v784 = vpop.f32.mrf.mxu0
      %v785 = vadd.f32 0.0, %v784
      %v786 = vpop.f32.mrf.mxu0
      %v787 = vadd.f32 0.0, %v786
      %788 = vmatmul.bf16.gmra.mxu0 %v529
      %v789 = vpop.f32.mrf.mxu0
      %v790 = vadd.f32 0.0, %v789
      %v791 = vpop.f32.mrf.mxu0
      %v792 = vadd.f32 0.0, %v791
      %793 = vmatmul.bf16.gmra.mxu0 %v532
      %v794 = vpop.f32.mrf.mxu0
      %v795 = vadd.f32 0.0, %v794
      %v796 = vpop.f32.mrf.mxu0
      %v797 = vadd.f32 0.0, %v796
      %798 = vmatmul.bf16.gmra.mxu0 %v535
      %v799 = vpop.f32.mrf.mxu0
      %v800 = vadd.f32 0.0, %v799
      %v801 = vpop.f32.mrf.mxu0
      %v802 = vadd.f32 0.0, %v801
      %803 = vmatmul.bf16.gmra.mxu0 %v538
      %v804 = vpop.f32.mrf.mxu0
      %v805 = vadd.f32 0.0, %v804
      %v806 = vpop.f32.mrf.mxu0
      %v807 = vadd.f32 0.0, %v806
      %808 = vmatmul.bf16.gmra.mxu0 %v541
      %v809 = vpop.f32.mrf.mxu0
      %v810 = vadd.f32 0.0, %v809
      %v811 = vpop.f32.mrf.mxu0
      %v812 = vadd.f32 0.0, %v811
      %813 = vmatmul.bf16.gmra.mxu0 %v544
      %v814 = vpop.f32.mrf.mxu0
      %v815 = vadd.f32 0.0, %v814
      %v816 = vpop.f32.mrf.mxu0
      %v817 = vadd.f32 0.0, %v816
      %818 = vmatmul.bf16.gmra.mxu0 %v547
      %v819 = vpop.f32.mrf.mxu0
      %v820 = vadd.f32 0.0, %v819
      %v821 = vpop.f32.mrf.mxu0
      %v822 = vadd.f32 0.0, %v821
      %823 = vmatmul.bf16.gmra.mxu0 %v550
      %v824 = vpop.f32.mrf.mxu0
      %v825 = vadd.f32 0.0, %v824
      %v826 = vpop.f32.mrf.mxu0
      %v827 = vadd.f32 0.0, %v826
      %828 = vmatmul.bf16.gmra.mxu0 %v553
      %v829 = vpop.f32.mrf.mxu0
      %v830 = vadd.f32 0.0, %v829
      %v831 = vpop.f32.mrf.mxu0
      %v832 = vadd.f32 0.0, %v831
      %833 = vdwg.mxu0
      %834 = vmatpush.bf16.msra.mxu0 %v675
      %835 = vmatpush.bf16.msra.mxu0 %v674
      %836 = vmatpush.bf16.msra.mxu0 %v673
      %837 = vmatpush.bf16.msra.mxu0 %v672
      %838 = vmatpush.bf16.msra.mxu0 %v671
      %839 = vmatpush.bf16.msra.mxu0 %v670
      %840 = vmatpush.bf16.msra.mxu0 %v669
      %841 = vmatpush.bf16.msra.mxu0 %v668
      %842 = vmatmul.bf16.gmra.mxu0 %v509
      %v843 = vpop.f32.mrf.mxu0
      %v844 = vadd.f32 %v755, %v843
      %v845 = vpop.f32.mrf.mxu0
      %v846 = vadd.f32 %v757, %v845
      %847 = vmatmul.bf16.gmra.mxu0 %v512
      %v848 = vpop.f32.mrf.mxu0
      %v849 = vadd.f32 %v760, %v848
      %v850 = vpop.f32.mrf.mxu0
      %v851 = vadd.f32 %v762, %v850
      %852 = vmatmul.bf16.gmra.mxu0 %v515
      %v853 = vpop.f32.mrf.mxu0
      %v854 = vadd.f32 %v765, %v853
      %v855 = vpop.f32.mrf.mxu0
      %v856 = vadd.f32 %v767, %v855
      %857 = vmatmul.bf16.gmra.mxu0 %v518
      %v858 = vpop.f32.mrf.mxu0
      %v859 = vadd.f32 %v770, %v858
      %v860 = vpop.f32.mrf.mxu0
      %v861 = vadd.f32 %v772, %v860
      %862 = vmatmul.bf16.gmra.mxu0 %v521
      %v863 = vpop.f32.mrf.mxu0
      %v864 = vadd.f32 %v775, %v863
      %v865 = vpop.f32.mrf.mxu0
      %v866 = vadd.f32 %v777, %v865
      %867 = vmatmul.bf16.gmra.mxu0 %v524
      %v868 = vpop.f32.mrf.mxu0
      %v869 = vadd.f32 %v780, %v868
      %v870 = vpop.f32.mrf.mxu0
      %v871 = vadd.f32 %v782, %v870
      %872 = vmatmul.bf16.gmra.mxu0 %v527
      %v873 = vpop.f32.mrf.mxu0
      %v874 = vadd.f32 %v785, %v873
      %v875 = vpop.f32.mrf.mxu0
      %v876 = vadd.f32 %v787, %v875
      %877 = vmatmul.bf16.gmra.mxu0 %v530
      %v878 = vpop.f32.mrf.mxu0
      %v879 = vadd.f32 %v790, %v878
      %v880 = vpop.f32.mrf.mxu0
      %v881 = vadd.f32 %v792, %v880
      %882 = vmatmul.bf16.gmra.mxu0 %v533
      %v883 = vpop.f32.mrf.mxu0
      %v884 = vadd.f32 %v795, %v883
      %v885 = vpop.f32.mrf.mxu0
      %v886 = vadd.f32 %v797, %v885
      %887 = vmatmul.bf16.gmra.mxu0 %v536
      %v888 = vpop.f32.mrf.mxu0
      %v889 = vadd.f32 %v800, %v888
      %v890 = vpop.f32.mrf.mxu0
      %v891 = vadd.f32 %v802, %v890
      %892 = vmatmul.bf16.gmra.mxu0 %v539
      %v893 = vpop.f32.mrf.mxu0
      %v894 = vadd.f32 %v805, %v893
      %v895 = vpop.f32.mrf.mxu0
      %v896 = vadd.f32 %v807, %v895
      %897 = vmatmul.bf16.gmra.mxu0 %v542
      %v898 = vpop.f32.mrf.mxu0
      %v899 = vadd.f32 %v810, %v898
      %v900 = vpop.f32.mrf.mxu0
      %v901 = vadd.f32 %v812, %v900
      %902 = vmatmul.bf16.gmra.mxu0 %v545
      %v903 = vpop.f32.mrf.mxu0
      %v904 = vadd.f32 %v815, %v903
      %v905 = vpop.f32.mrf.mxu0
      %v906 = vadd.f32 %v817, %v905
      %907 = vmatmul.bf16.gmra.mxu0 %v548
      %v908 = vpop.f32.mrf.mxu0
      %v909 = vadd.f32 %v820, %v908
      %v910 = vpop.f32.mrf.mxu0
      %v911 = vadd.f32 %v822, %v910
      %912 = vmatmul.bf16.gmra.mxu0 %v551
      %v913 = vpop.f32.mrf.mxu0
      %v914 = vadd.f32 %v825, %v913
      %v915 = vpop.f32.mrf.mxu0
      %v916 = vadd.f32 %v827, %v915
      %917 = vmatmul.bf16.gmra.mxu0 %v554
      %v918 = vpop.f32.mrf.mxu0
      %v919 = vadd.f32 %v830, %v918
      %v920 = vpop.f32.mrf.mxu0
      %v921 = vadd.f32 %v832, %v920
      %922 = vdwg.mxu0
      %923 = vmatpush.bf16.msra.mxu0 0
      %924 = vmatpush.bf16.msra.mxu0 0
      %925 = vmatpush.bf16.msra.mxu0 0
      %926 = vmatpush.bf16.msra.mxu0 0
      %927 = vmatpush.bf16.msra.mxu0 0
      %928 = vmatpush.bf16.msra.mxu0 0
      %929 = vmatpush.bf16.msra.mxu0 %v677
      %930 = vmatpush.bf16.msra.mxu0 %v676
      %931 = vmatmul.bf16.gmra.mxu0 %v698
      %v932 = vpop.f32.mrf.mxu0
      %v933 = vadd.f32 %v844, %v932
      %v934 = vpop.f32.mrf.mxu0
      %v935 = vadd.f32 %v846, %v934
      %936 = vmatmul.bf16.gmra.mxu0 %v701
      %v937 = vpop.f32.mrf.mxu0
      %v938 = vadd.f32 %v849, %v937
      %v939 = vpop.f32.mrf.mxu0
      %v940 = vadd.f32 %v851, %v939
      %941 = vmatmul.bf16.gmra.mxu0 %v704
      %v942 = vpop.f32.mrf.mxu0
      %v943 = vadd.f32 %v854, %v942
      %v944 = vpop.f32.mrf.mxu0
      %v945 = vadd.f32 %v856, %v944
      %946 = vmatmul.bf16.gmra.mxu0 %v707
      %v947 = vpop.f32.mrf.mxu0
      %v948 = vadd.f32 %v859, %v947
      %v949 = vpop.f32.mrf.mxu0
      %v950 = vadd.f32 %v861, %v949
      %951 = vmatmul.bf16.gmra.mxu0 %v710
      %v952 = vpop.f32.mrf.mxu0
      %v953 = vadd.f32 %v864, %v952
      %v954 = vpop.f32.mrf.mxu0
      %v955 = vadd.f32 %v866, %v954
      %956 = vmatmul.bf16.gmra.mxu0 %v713
      %v957 = vpop.f32.mrf.mxu0
      %v958 = vadd.f32 %v869, %v957
      %v959 = vpop.f32.mrf.mxu0
      %v960 = vadd.f32 %v871, %v959
      %961 = vmatmul.bf16.gmra.mxu0 %v716
      %v962 = vpop.f32.mrf.mxu0
      %v963 = vadd.f32 %v874, %v962
      %v964 = vpop.f32.mrf.mxu0
      %v965 = vadd.f32 %v876, %v964
      %966 = vmatmul.bf16.gmra.mxu0 %v719
      %v967 = vpop.f32.mrf.mxu0
      %v968 = vadd.f32 %v879, %v967
      %v969 = vpop.f32.mrf.mxu0
      %v970 = vadd.f32 %v881, %v969
      %971 = vmatmul.bf16.gmra.mxu0 %v722
      %v972 = vpop.f32.mrf.mxu0
      %v973 = vadd.f32 %v884, %v972
      %v974 = vpop.f32.mrf.mxu0
      %v975 = vadd.f32 %v886, %v974
      %976 = vmatmul.bf16.gmra.mxu0 %v725
      %v977 = vpop.f32.mrf.mxu0
      %v978 = vadd.f32 %v889, %v977
      %v979 = vpop.f32.mrf.mxu0
      %v980 = vadd.f32 %v891, %v979
      %981 = vmatmul.bf16.gmra.mxu0 %v728
      %v982 = vpop.f32.mrf.mxu0
      %v983 = vadd.f32 %v894, %v982
      %v984 = vpop.f32.mrf.mxu0
      %v985 = vadd.f32 %v896, %v984
      %986 = vmatmul.bf16.gmra.mxu0 %v731
      %v987 = vpop.f32.mrf.mxu0
      %v988 = vadd.f32 %v899, %v987
      %v989 = vpop.f32.mrf.mxu0
      %v990 = vadd.f32 %v901, %v989
      %991 = vmatmul.bf16.gmra.mxu0 %v734
      %v992 = vpop.f32.mrf.mxu0
      %v993 = vadd.f32 %v904, %v992
      %v994 = vpop.f32.mrf.mxu0
      %v995 = vadd.f32 %v906, %v994
      %996 = vmatmul.bf16.gmra.mxu0 %v737
      %v997 = vpop.f32.mrf.mxu0
      %v998 = vadd.f32 %v909, %v997
      %v999 = vpop.f32.mrf.mxu0
      %v1000 = vadd.f32 %v911, %v999
      %1001 = vmatmul.bf16.gmra.mxu0 %v740
      %v1002 = vpop.f32.mrf.mxu0
      %v1003 = vadd.f32 %v914, %v1002
      %v1004 = vpop.f32.mrf.mxu0
      %v1005 = vadd.f32 %v916, %v1004
      %1006 = vmatmul.bf16.gmra.mxu0 %v743
      %v1007 = vpop.f32.mrf.mxu0
      %v1008 = vadd.f32 %v919, %v1007
      %v1009 = vpop.f32.mrf.mxu0
      %v1010 = vadd.f32 %v921, %v1009
      %1011 = vdwg.mxu0
      %v1012 = vmul.f32 %v933, 0.2
      %v1013 = vmul.f32 %v935, 0.2
      %v1014 = vmul.f32 %v938, 0.2
      %v1015 = vmul.f32 %v940, 0.2
      %v1016 = vmul.f32 %v943, 0.2
      %v1017 = vmul.f32 %v945, 0.2
      %v1018 = vmul.f32 %v948, 0.2
      %v1019 = vmul.f32 %v950, 0.2
      %v1020 = vmul.f32 %v953, 0.2
      %v1021 = vmul.f32 %v955, 0.2
      %v1022 = vmul.f32 %v958, 0.2
      %v1023 = vmul.f32 %v960, 0.2
      %v1024 = vmul.f32 %v963, 0.2
      %v1025 = vmul.f32 %v965, 0.2
      %v1026 = vmul.f32 %v968, 0.2
      %v1027 = vmul.f32 %v970, 0.2
      %v1028 = vmul.f32 %v973, 0.2
      %v1029 = vmul.f32 %v975, 0.2
      %v1030 = vmul.f32 %v978, 0.2
      %v1031 = vmul.f32 %v980, 0.2
      %v1032 = vmul.f32 %v983, 0.2
      %v1033 = vmul.f32 %v985, 0.2
      %v1034 = vmul.f32 %v988, 0.2
      %v1035 = vmul.f32 %v990, 0.2
      %v1036 = vmul.f32 %v993, 0.2
      %v1037 = vmul.f32 %v995, 0.2
      %v1038 = vmul.f32 %v998, 0.2
      %v1039 = vmul.f32 %v1000, 0.2
      %v1040 = vmul.f32 %v1003, 0.2
      %v1041 = vmul.f32 %v1005, 0.2
      %v1042 = vmul.f32 %v1008, 0.2
      %v1043 = vmul.f32 %v1010, 0.2
      %v1044 = vmax.f32 %v933, %v1012
      %v1045 = vmax.f32 %v935, %v1013
      %v1046 = vmax.f32 %v938, %v1014
      %v1047 = vmax.f32 %v940, %v1015
      %v1048 = vmax.f32 %v943, %v1016
      %v1049 = vmax.f32 %v945, %v1017
      %v1050 = vmax.f32 %v948, %v1018
      %v1051 = vmax.f32 %v950, %v1019
      %v1052 = vmax.f32 %v953, %v1020
      %v1053 = vmax.f32 %v955, %v1021
      %v1054 = vmax.f32 %v958, %v1022
      %v1055 = vmax.f32 %v960, %v1023
      %v1056 = vmax.f32 %v963, %v1024
      %v1057 = vmax.f32 %v965, %v1025
      %v1058 = vmax.f32 %v968, %v1026
      %v1059 = vmax.f32 %v970, %v1027
      %v1060 = vmax.f32 %v973, %v1028
      %v1061 = vmax.f32 %v975, %v1029
      %v1062 = vmax.f32 %v978, %v1030
      %v1063 = vmax.f32 %v980, %v1031
      %v1064 = vmax.f32 %v983, %v1032
      %v1065 = vmax.f32 %v985, %v1033
      %v1066 = vmax.f32 %v988, %v1034
      %v1067 = vmax.f32 %v990, %v1035
      %v1068 = vmax.f32 %v993, %v1036
      %v1069 = vmax.f32 %v995, %v1037
      %v1070 = vmax.f32 %v998, %v1038
      %v1071 = vmax.f32 %v1000, %v1039
      %v1072 = vmax.f32 %v1003, %v1040
      %v1073 = vmax.f32 %v1005, %v1041
      %v1074 = vmax.f32 %v1008, %v1042
      %v1075 = vmax.f32 %v1010, %v1043
      %v1076 = vld [vmem:[%s236] sm:$0xf]
      %v1077 = vld [vmem:[%s236 + $0x4] sm:$0xf]
      %v1078 = vld [vmem:[%s236 + $0x8] sm:$0xf]
      %v1079 = vld [vmem:[%s236 + $0xc] sm:$0xf]
      %v1080 = vld [vmem:[%s236 + $0x10] sm:$0xf]
      %v1081 = vld [vmem:[%s236 + $0x14] sm:$0xf]
      %v1082 = vld [vmem:[%s236 + $0x18] sm:$0xf]
      %v1083 = vld [vmem:[%s236 + $0x1c] sm:$0xf]
      %v1084 = vld [vmem:[%s236 + $0x20] sm:$0xf]
      %v1085 = vld [vmem:[%s236 + $0x24] sm:$0xf]
      %v1086 = vld [vmem:[%s236 + $0x28] sm:$0xf]
      %v1087 = vld [vmem:[%s236 + $0x2c] sm:$0xf]
      %v1088 = vld [vmem:[%s236 + $0x30] sm:$0xf]
      %v1089 = vld [vmem:[%s236 + $0x34] sm:$0xf]
      %v1090 = vld [vmem:[%s236 + $0x38] sm:$0xf]
      %v1091 = vld [vmem:[%s236 + $0x3c] sm:$0xf]
      %v1092 = vld [vmem:[%s236 + $0x40] sm:$0xf]
      %v1093 = vld [vmem:[%s236 + $0x44] sm:$0xf]
      %v1094 = vld [vmem:[%s236 + $0x48] sm:$0xf]
      %v1095 = vld [vmem:[%s236 + $0x4c] sm:$0xf]
      %v1096 = vld [vmem:[%s236 + $0x50] sm:$0xf]
      %v1097 = vld [vmem:[%s236 + $0x54] sm:$0xf]
      %v1098 = vld [vmem:[%s236 + $0x58] sm:$0xf]
      %v1099 = vld [vmem:[%s236 + $0x5c] sm:$0xf]
      %v1100 = vld [vmem:[%s236 + $0x60] sm:$0xf]
      %v1101 = vld [vmem:[%s236 + $0x64] sm:$0xf]
      %v1102 = vld [vmem:[%s236 + $0x68] sm:$0xf]
      %v1103 = vld [vmem:[%s236 + $0x6c] sm:$0xf]
      %v1104 = vld [vmem:[%s236 + $0x70] sm:$0xf]
      %v1105 = vld [vmem:[%s236 + $0x74] sm:$0xf]
      %v1106 = vld [vmem:[%s236 + $0x78] sm:$0xf]
      %v1107 = vld [vmem:[%s236 + $0x7c] sm:$0xf]
      %v1108 = vunpack.c.l.bf16 %v1076
      %v1109 = vunpack.c.l.bf16 %v1077
      %v1110 = vunpack.c.l.bf16 %v1078
      %v1111 = vunpack.c.l.bf16 %v1079
      %v1112 = vunpack.c.l.bf16 %v1080
      %v1113 = vunpack.c.l.bf16 %v1081
      %v1114 = vunpack.c.l.bf16 %v1082
      %v1115 = vunpack.c.l.bf16 %v1083
      %v1116 = vunpack.c.l.bf16 %v1084
      %v1117 = vunpack.c.l.bf16 %v1085
      %v1118 = vunpack.c.l.bf16 %v1086
      %v1119 = vunpack.c.l.bf16 %v1087
      %v1120 = vunpack.c.l.bf16 %v1088
      %v1121 = vunpack.c.l.bf16 %v1089
      %v1122 = vunpack.c.l.bf16 %v1090
      %v1123 = vunpack.c.l.bf16 %v1091
      %v1124 = vunpack.c.l.bf16 %v1092
      %v1125 = vunpack.c.l.bf16 %v1093
      %v1126 = vunpack.c.l.bf16 %v1094
      %v1127 = vunpack.c.l.bf16 %v1095
      %v1128 = vunpack.c.l.bf16 %v1096
      %v1129 = vunpack.c.l.bf16 %v1097
      %v1130 = vunpack.c.l.bf16 %v1098
      %v1131 = vunpack.c.l.bf16 %v1099
      %v1132 = vunpack.c.l.bf16 %v1100
      %v1133 = vunpack.c.l.bf16 %v1101
      %v1134 = vunpack.c.l.bf16 %v1102
      %v1135 = vunpack.c.l.bf16 %v1103
      %v1136 = vunpack.c.l.bf16 %v1104
      %v1137 = vunpack.c.l.bf16 %v1105
      %v1138 = vunpack.c.l.bf16 %v1106
      %v1139 = vunpack.c.l.bf16 %v1107
      %v1140 = vadd.f32 %v1044, %v1108
      %v1141 = vadd.f32 %v1045, %v1109
      %v1142 = vadd.f32 %v1046, %v1110
      %v1143 = vadd.f32 %v1047, %v1111
      %v1144 = vadd.f32 %v1048, %v1112
      %v1145 = vadd.f32 %v1049, %v1113
      %v1146 = vadd.f32 %v1050, %v1114
      %v1147 = vadd.f32 %v1051, %v1115
      %v1148 = vadd.f32 %v1052, %v1116
      %v1149 = vadd.f32 %v1053, %v1117
      %v1150 = vadd.f32 %v1054, %v1118
      %v1151 = vadd.f32 %v1055, %v1119
      %v1152 = vadd.f32 %v1056, %v1120
      %v1153 = vadd.f32 %v1057, %v1121
      %v1154 = vadd.f32 %v1058, %v1122
      %v1155 = vadd.f32 %v1059, %v1123
      %v1156 = vadd.f32 %v1060, %v1124
      %v1157 = vadd.f32 %v1061, %v1125
      %v1158 = vadd.f32 %v1062, %v1126
      %v1159 = vadd.f32 %v1063, %v1127
      %v1160 = vadd.f32 %v1064, %v1128
      %v1161 = vadd.f32 %v1065, %v1129
      %v1162 = vadd.f32 %v1066, %v1130
      %v1163 = vadd.f32 %v1067, %v1131
      %v1164 = vadd.f32 %v1068, %v1132
      %v1165 = vadd.f32 %v1069, %v1133
      %v1166 = vadd.f32 %v1070, %v1134
      %v1167 = vadd.f32 %v1071, %v1135
      %v1168 = vadd.f32 %v1072, %v1136
      %v1169 = vadd.f32 %v1073, %v1137
      %v1170 = vadd.f32 %v1074, %v1138
      %v1171 = vadd.f32 %v1075, %v1139
      %v1172 = vpack.c.bf16 %v1140, %v1140
      %v1173 = vpack.c.bf16 %v1141, %v1141
      %v1174 = vpack.c.bf16 %v1142, %v1142
      %v1175 = vpack.c.bf16 %v1143, %v1143
      %v1176 = vpack.c.bf16 %v1144, %v1144
      %v1177 = vpack.c.bf16 %v1145, %v1145
      %v1178 = vpack.c.bf16 %v1146, %v1146
      %v1179 = vpack.c.bf16 %v1147, %v1147
      %v1180 = vpack.c.bf16 %v1148, %v1148
      %v1181 = vpack.c.bf16 %v1149, %v1149
      %v1182 = vpack.c.bf16 %v1150, %v1150
      %v1183 = vpack.c.bf16 %v1151, %v1151
      %v1184 = vpack.c.bf16 %v1152, %v1152
      %v1185 = vpack.c.bf16 %v1153, %v1153
      %v1186 = vpack.c.bf16 %v1154, %v1154
      %v1187 = vpack.c.bf16 %v1155, %v1155
      %v1188 = vpack.c.bf16 %v1156, %v1156
      %v1189 = vpack.c.bf16 %v1157, %v1157
      %v1190 = vpack.c.bf16 %v1158, %v1158
      %v1191 = vpack.c.bf16 %v1159, %v1159
      %v1192 = vpack.c.bf16 %v1160, %v1160
      %v1193 = vpack.c.bf16 %v1161, %v1161
      %v1194 = vpack.c.bf16 %v1162, %v1162
      %v1195 = vpack.c.bf16 %v1163, %v1163
      %v1196 = vpack.c.bf16 %v1164, %v1164
      %v1197 = vpack.c.bf16 %v1165, %v1165
      %v1198 = vpack.c.bf16 %v1166, %v1166
      %v1199 = vpack.c.bf16 %v1167, %v1167
      %v1200 = vpack.c.bf16 %v1168, %v1168
      %v1201 = vpack.c.bf16 %v1169, %v1169
      %v1202 = vpack.c.bf16 %v1170, %v1170
      %v1203 = vpack.c.bf16 %v1171, %v1171
      %1204 = vst [vmem:[%s245] sm:$0xf] %v1172
      %1205 = vst [vmem:[%s245 + $0x4] sm:$0xf] %v1173
      %1206 = vst [vmem:[%s245 + $0x8] sm:$0xf] %v1174
      %1207 = vst [vmem:[%s245 + $0xc] sm:$0xf] %v1175
      %1208 = vst [vmem:[%s245 + $0x10] sm:$0xf] %v1176
      %1209 = vst [vmem:[%s245 + $0x14] sm:$0xf] %v1177
      %1210 = vst [vmem:[%s245 + $0x18] sm:$0xf] %v1178
      %1211 = vst [vmem:[%s245 + $0x1c] sm:$0xf] %v1179
      %1212 = vst [vmem:[%s245 + $0x20] sm:$0xf] %v1180
      %1213 = vst [vmem:[%s245 + $0x24] sm:$0xf] %v1181
      %1214 = vst [vmem:[%s245 + $0x28] sm:$0xf] %v1182
      %1215 = vst [vmem:[%s245 + $0x2c] sm:$0xf] %v1183
      %1216 = vst [vmem:[%s245 + $0x30] sm:$0xf] %v1184
      %1217 = vst [vmem:[%s245 + $0x34] sm:$0xf] %v1185
      %1218 = vst [vmem:[%s245 + $0x38] sm:$0xf] %v1186
      %1219 = vst [vmem:[%s245 + $0x3c] sm:$0xf] %v1187
      %1220 = vst [vmem:[%s245 + $0x40] sm:$0xf] %v1188
      %1221 = vst [vmem:[%s245 + $0x44] sm:$0xf] %v1189
      %1222 = vst [vmem:[%s245 + $0x48] sm:$0xf] %v1190
      %1223 = vst [vmem:[%s245 + $0x4c] sm:$0xf] %v1191
      %1224 = vst [vmem:[%s245 + $0x50] sm:$0xf] %v1192
      %1225 = vst [vmem:[%s245 + $0x54] sm:$0xf] %v1193
      %1226 = vst [vmem:[%s245 + $0x58] sm:$0xf] %v1194
      %1227 = vst [vmem:[%s245 + $0x5c] sm:$0xf] %v1195
      %1228 = vst [vmem:[%s245 + $0x60] sm:$0xf] %v1196
      %1229 = vst [vmem:[%s245 + $0x64] sm:$0xf] %v1197
      %1230 = vst [vmem:[%s245 + $0x68] sm:$0xf] %v1198
      %1231 = vst [vmem:[%s245 + $0x6c] sm:$0xf] %v1199
      %1232 = vst [vmem:[%s245 + $0x70] sm:$0xf] %v1200
      %1233 = vst [vmem:[%s245 + $0x74] sm:$0xf] %v1201
      %1234 = vst [vmem:[%s245 + $0x78] sm:$0xf] %v1202
      %1235 = vst [vmem:[%s245 + $0x7c] sm:$0xf] %v1203
      %s1236 = smul.u32 32, %s18
      %p1237 = scmp.lt.s32.totalorder %s1236, 63
      %s1238 = scalar_select %p1237, %s1236, 63
      %p1239 = scmp.lt.s32.totalorder %s19, 0
      %s1240 = scalar_select %p1239, %s19, 0
      %s1241 = sadd.s32 %s1240, %s1238
      %s1242 = smul.addr %s1241, 4
      %s1243 = scalar_lea.vmem %s3, %s1242
      // Predicated region
      $region33: #{discriminator_unet_forward.16} parent=31 // pred_check
        %p1244 = pneg %p126
      $region34: #{discriminator_unet_forward.16} parent=31 // pred_check_branch
        %1246 = sbr.rel (%p1244) target = $region36
      $region35: #{discriminator_unet_forward.16} parent=31 // pred_region
        %s1247 = smul.u32 32, %s18
      $region36: #{discriminator_unet_forward.16} parent=31 // pred_fallthru
        _
    $region32: #{discriminator_unet_forward.16} parent=5 // pred_fallthru
      _
    %p1248 = scmp.le.s32.totalorder 2, %s9
    // Predicated region
    $region37: #{discriminator_unet_forward.16} parent=5 // pred_check
      %p1249 = pneg %p1248
    $region38: #{discriminator_unet_forward.16} parent=5 // pred_check_branch
      %1251 = sbr.rel (%p1249) target = $region40
    $region39: #{discriminator_unet_forward.16} parent=5 // pred_region
      %s1252 = ssub.s32 %s9, 2
      // Predicated region
      $region41: #{discriminator_unet_forward.16} parent=39 // pred_check
        %p1253 = pneg %p132
      $region42: #{discriminator_unet_forward.16} parent=39 // pred_check_branch
        %1255 = sbr.rel (%p1253) target = $region44
      $region43: #{discriminator_unet_forward.16} parent=39 // pred_region
        %s1256 = smul.u32 32, %s20
        %p1257 = scmp.lt.s32.totalorder %s1256, 63
        %s1258 = scalar_select %p1257, %s1256, 63
        %p1259 = scmp.lt.s32.totalorder %s21, 0
        %s1260 = scalar_select %p1259, %s21, 0
        %s1261 = sadd.s32 %s1260, %s1258
        %s1262 = smul.addr %s1261, 4
        %s1263 = scalar_lea.vmem %s3, %s1262
      $region44: #{discriminator_unet_forward.16} parent=39 // pred_fallthru
        _
    $region40: #{discriminator_unet_forward.16} parent=5 // pred_fallthru
      _
  $region6: #{discriminator_unet_forward.16} parent=0 // loop_footer
    %s13 = sadd.s32 1, %s9
  $region7: #{discriminator_unet_forward.16} parent=0 // loop_footer_branch
    %8 = sbr.rel target = $region3
  $region8: #{discriminator_unet_forward.16} parent=0 // loop_exit
    _

// kernel: discriminator_unet_forward.17
$region0: #{discriminator_unet_forward.17}
  #allocation0 [shape = 'u32[]', space=smem, size = 0x4, offset = 0x4, fixed_abs, tag = 'smem constant byte address 0x4 - core index']
  #allocation1 [shape = 'u32[72,128]{1,0:T(1,128)}', space=vmem, size = 0x9000, scoped, tag = 'internal scratch']
  %s0 = inlined_call_operand.vmem [shape: bf16[512,144], index: 0, kind: input, shape index: {}]
  %s1 = inlined_call_operand.vmem [shape: bf16[144,128], index: 1, kind: input, shape index: {}]
  %s2 = inlined_call_operand.vmem [shape: bf16[512,128], index: 2, kind: output, shape index: {}]
  %s3 = sld [smem:[#allocation0]]
  $region41: #{discriminator_unet_forward.17} parent=0
    _
  %s5 = ssub.s32 1, %s3
  %s6 = scalar_select 0, %s5, %s3
  loop: start=0, step=1, limit=4
  $region2: #{discriminator_unet_forward.17} parent=0 // loop_pre_header
    _
  $region3: #{discriminator_unet_forward.17} parent=0 // loop_header
    %s8 = sphi 0, %s12
    %p9 = scmp.ge.s32.totalorder %s8, 4
    %s15 = sphi 0, %s27
    %s16 = sphi 0, %s23
    %s17 = sphi 0, %s15
    %s18 = sphi 0, %s16
    %s19 = sphi 0, %s17
    %s20 = sphi 0, %s18
    %s30 = sphi 0, %s32
    %s33 = sphi 0, %s30
    %s34 = sphi 0, %s33
    %s50 = sphi 0, %s34
    %s56 = sphi 0, %s58
    %s59 = sphi 0, %s56
    %s60 = sphi 0, %s59
    %s76 = sphi 0, %s60
    %s84 = sphi 0, %s86
    %s87 = sphi 0, %s84
    %s88 = sphi 0, %s87
    %s104 = sphi 0, %s88
  $region4: #{discriminator_unet_forward.17} parent=0 // loop_header_branch
    %11 = sbr.rel (%p9) target = $region8
  $region5: #{discriminator_unet_forward.17} parent=0 // loop_body
    %s13 = ssub.s32 %s8, 1
    %s14 = ssub.s32 %s8, 2
    %s21 = sadd.s32 1, %s16
    %p22 = scmp.ge.s32.totalorder %s21, 1
    %s23 = scalar_select %p22, 0, %s21
    %s24 = sadd.s32 1, %s15
    %s25 = scalar_select %p22, %s24, %s15
    %p26 = scmp.ge.s32.totalorder %s25, 2
    %s27 = scalar_select %p26, 0, %s25
    %s28 = ssub.s32 %s15, %s27
    %p29 = scmp.eq.s32.totalorder %s28, 0
    %s31 = sadd.s32 %s30, 1
    %s32 = scalar_select %p29, %s30, %s31
    %p35 = pneg %p29
    %p36 = scmp.eq.s32.totalorder %s8, 1
    %p37 = por %p35, %p36
    %p38 = scmp.ne.s32.totalorder %s30, %s33
    %p39 = scmp.eq.s32.totalorder %s8, 0
    %p40 = por %p38, %p39
    %p41 = scmp.ne.s32.totalorder %s30, %s33
    %p42 = scmp.eq.s32.totalorder %s13, 1
    %p43 = por %p41, %p42
    %p44 = scmp.ne.s32.totalorder %s33, %s34
    %p45 = scmp.eq.s32.totalorder %s13, 0
    %p46 = por %p44, %p45
    %p47 = scmp.ne.s32.totalorder %s33, %s34
    %p48 = scmp.eq.s32.totalorder %s14, 1
    %p49 = por %p47, %p48
    %p51 = scmp.ne.s32.totalorder %s34, %s50
    %p52 = scmp.eq.s32.totalorder %s14, 0
    %p53 = por %p51, %p52
    %s54 = ssub.s32 %s16, %s23
    %p55 = scmp.eq.s32.totalorder %s54, 0
    %s57 = sadd.s32 %s56, 1
    %s58 = scalar_select %p55, %s56, %s57
    %p61 = pneg %p55
    %p62 = scmp.eq.s32.totalorder %s8, 1
    %p63 = por %p61, %p62
    %p64 = scmp.ne.s32.totalorder %s56, %s59
    %p65 = scmp.eq.s32.totalorder %s8, 0
    %p66 = por %p64, %p65
    %p67 = scmp.ne.s32.totalorder %s56, %s59
    %p68 = scmp.eq.s32.totalorder %s13, 1
    %p69 = por %p67, %p68
    %p70 = scmp.ne.s32.totalorder %s59, %s60
    %p71 = scmp.eq.s32.totalorder %s13, 0
    %p72 = por %p70, %p71
    %p73 = scmp.ne.s32.totalorder %s59, %s60
    %p74 = scmp.eq.s32.totalorder %s14, 1
    %p75 = por %p73, %p74
    %p77 = scmp.ne.s32.totalorder %s60, %s76
    %p78 = scmp.eq.s32.totalorder %s14, 0
    %p79 = por %p77, %p78
    %s80 = ssub.s32 %s15, %s27
    %s81 = ssub.s32 %s16, %s23
    %s82 = sor.u32 %s80, %s81
    %p83 = scmp.eq.s32.totalorder %s82, 0
    %s85 = sadd.s32 %s84, 1
    %s86 = scalar_select %p83, %s84, %s85
    %p89 = pneg %p83
    %p90 = scmp.eq.s32.totalorder %s8, 1
    %p91 = por %p89, %p90
    %p92 = scmp.ne.s32.totalorder %s84, %s87
    %p93 = scmp.eq.s32.totalorder %s8, 0
    %p94 = por %p92, %p93
    %p95 = scmp.ne.s32.totalorder %s84, %s87
    %p96 = scmp.eq.s32.totalorder %s13, 1
    %p97 = por %p95, %p96
    %p98 = scmp.ne.s32.totalorder %s87, %s88
    %p99 = scmp.eq.s32.totalorder %s13, 0
    %p100 = por %p98, %p99
    %p101 = scmp.ne.s32.totalorder %s87, %s88
    %p102 = scmp.eq.s32.totalorder %s14, 1
    %p103 = por %p101, %p102
    %p105 = scmp.ne.s32.totalorder %s88, %s104
    %p106 = scmp.eq.s32.totalorder %s14, 0
    %p107 = por %p105, %p106
    %p108 = scmp.le.s32.totalorder 1, %s8
    %p109 = scmp.lt.s32.totalorder %s8, 3
    %p110 = pnand %p108, %p109
    %p111 = pneg %p110
    // Predicated region
    $region9: #{discriminator_unet_forward.17} parent=5 // pred_check
      _
    $region10: #{discriminator_unet_forward.17} parent=5 // pred_check_branch
      %113 = sbr.rel (%p110) target = $region12
    $region11: #{discriminator_unet_forward.17} parent=5 // pred_region
      %s114 = ssub.s32 %s8, 1
      // Predicated region
      $region13: #{discriminator_unet_forward.17} parent=11 // pred_check
        %p115 = pneg %p72
      $region14: #{discriminator_unet_forward.17} parent=11 // pred_check_branch
        %117 = sbr.rel (%p115) target = $region16
      $region15: #{discriminator_unet_forward.17} parent=11 // pred_region
        %p118 = scmp.lt.s32.totalorder %s18, 0
        %s119 = scalar_select %p118, %s18, 0
        %s120 = smul.addr %s119, 4
        %s121 = scalar_lea.vmem %s1, %s120
      $region16: #{discriminator_unet_forward.17} parent=11 // pred_fallthru
        _
    $region12: #{discriminator_unet_forward.17} parent=5 // pred_fallthru
      _
    %p122 = scmp.lt.s32.totalorder %s8, 2
    // Predicated region
    $region17: #{discriminator_unet_forward.17} parent=5 // pred_check
      %p123 = pneg %p122
    $region18: #{discriminator_unet_forward.17} parent=5 // pred_check_branch
      %125 = sbr.rel (%p123) target = $region20
    $region19: #{discriminator_unet_forward.17} parent=5 // pred_region
      // Predicated region
      $region21: #{discriminator_unet_forward.17} parent=19 // pred_check
        %p126 = pneg %p40
      $region22: #{discriminator_unet_forward.17} parent=19 // pred_check_branch
        %128 = sbr.rel (%p126) target = $region24
      $region23: #{discriminator_unet_forward.17} parent=19 // pred_region
        %s129 = smul.u32 32, %s15
        %p130 = scmp.lt.s32.totalorder %s129, 63
        %s131 = scalar_select %p130, %s129, 63
        %s132 = smul.addr %s131, 2
        %s133 = smul.addr %s132, 4
        %s134 = scalar_lea.vmem %s0, %s133
        %s135 = smul.u32 32, %s15
      $region24: #{discriminator_unet_forward.17} parent=19 // pred_fallthru
        _
    $region20: #{discriminator_unet_forward.17} parent=5 // pred_fallthru
      _
    %p136 = scmp.le.s32.totalorder 1, %s8
    %p137 = scmp.lt.s32.totalorder %s8, 3
    %p138 = pnand %p136, %p137
    %p139 = pneg %p138
    // Predicated region
    $region25: #{discriminator_unet_forward.17} parent=5 // pred_check
      _
    $region26: #{discriminator_unet_forward.17} parent=5 // pred_check_branch
      %141 = sbr.rel (%p138) target = $region28
    $region27: #{discriminator_unet_forward.17} parent=5 // pred_region
      %s142 = ssub.s32 %s8, 1
      %s143 = smul.u32 32, %s17
      %p144 = scmp.lt.s32.totalorder %s143, 63
      %s145 = scalar_select %p144, %s143, 63
      %s146 = smul.addr %s145, 2
      %s147 = smul.addr %s146, 4
      %s148 = scalar_lea.vmem %s0, %s147
      %p149 = pneg %p46
      %p150 = pneg %p43
      %p151 = scmp.lt.s32.totalorder %s18, 0
      %s152 = scalar_select %p151, %s18, 0
      %s153 = smul.addr %s152, 4
      %s154 = scalar_lea.vmem %s1, %s153
      %p155 = pneg %p72
      %p156 = pneg %p69
      %p157 = pneg %p100
      %p158 = pneg %p97
      %s159 = smul.u32 32, %s17
      %p160 = scmp.lt.s32.totalorder %s159, 63
      %s161 = scalar_select %p160, %s159, 63
      %p162 = scmp.lt.s32.totalorder %s18, 0
      %s163 = scalar_select %p162, %s18, 0
      %s164 = sadd.s32 %s163, %s161
      %s165 = smul.addr %s164, 4
      %s166 = scalar_lea.vmem %s2, %s165
      %s167 = smul.u32 32, %s17
      %p168 = scmp.lt.s32.totalorder %s167, 63
      %s169 = scalar_select %p168, %s167, 63
      %s170 = smul.addr %s169, 2
      %s171 = smul.addr %s170, 4
      %s172 = scalar_lea.vmem %s0, %s171
      %s173 = smul.u32 32, %s17
      %p174 = scmp.lt.s32.totalorder %s18, 0
      %s175 = scalar_select %p174, %s18, 0
      %s176 = smul.addr %s175, 4
      %s177 = scalar_lea.vmem %s1, %s176
      %s178 = smul.u32 32, %s17
      %p179 = scmp.lt.s32.totalorder %s178, 63
      %s180 = scalar_select %p179, %s178, 63
      %p181 = scmp.lt.s32.totalorder %s18, 0
      %s182 = scalar_select %p181, %s18, 0
      %s183 = sadd.s32 %s182, %s180
      %s184 = smul.addr %s183, 4
      %s185 = scalar_lea.vmem %s2, %s184
      %s186 = smul.u32 32, %s17
      %v188 = vld [vmem:[%s172] sm:$0xff]
      %v189 = vld [vmem:[%s172 + $0x8] sm:$0xff]
      %v190 = vld [vmem:[%s172 + $0x10] sm:$0xff]
      %v191 = vld [vmem:[%s172 + $0x18] sm:$0xff]
      %v192 = vld [vmem:[%s172 + $0x20] sm:$0xff]
      %v193 = vld [vmem:[%s172 + $0x28] sm:$0xff]
      %v194 = vld [vmem:[%s172 + $0x30] sm:$0xff]
      %v195 = vld [vmem:[%s172 + $0x38] sm:$0xff]
      %v196 = vld [vmem:[%s172 + $0x40] sm:$0xff]
      %v197 = vld [vmem:[%s172 + $0x48] sm:$0xff]
      %v198 = vld [vmem:[%s172 + $0x50] sm:$0xff]
      %v199 = vld [vmem:[%s172 + $0x58] sm:$0xff]
      %v200 = vld [vmem:[%s172 + $0x60] sm:$0xff]
      %v201 = vld [vmem:[%s172 + $0x68] sm:$0xff]
      %v202 = vld [vmem:[%s172 + $0x70] sm:$0xff]
      %v203 = vld [vmem:[%s172 + $0x78] sm:$0xff]
      %v204 = vld [vmem:[%s172 + $0x80] sm:$0xff]
      %v205 = vld [vmem:[%s172 + $0x88] sm:$0xff]
      %v206 = vld [vmem:[%s172 + $0x90] sm:$0xff]
      %v207 = vld [vmem:[%s172 + $0x98] sm:$0xff]
      %v208 = vld [vmem:[%s172 + $0xa0] sm:$0xff]
      %v209 = vld [vmem:[%s172 + $0xa8] sm:$0xff]
      %v210 = vld [vmem:[%s172 + $0xb0] sm:$0xff]
      %v211 = vld [vmem:[%s172 + $0xb8] sm:$0xff]
      %v212 = vld [vmem:[%s172 + $0xc0] sm:$0xff]
      %v213 = vld [vmem:[%s172 + $0xc8] sm:$0xff]
      %v214 = vld [vmem:[%s172 + $0xd0] sm:$0xff]
      %v215 = vld [vmem:[%s172 + $0xd8] sm:$0xff]
      %v216 = vld [vmem:[%s172 + $0xe0] sm:$0xff]
      %v217 = vld [vmem:[%s172 + $0xe8] sm:$0xff]
      %v218 = vld [vmem:[%s172 + $0xf0] sm:$0xff]
      %v219 = vld [vmem:[%s172 + $0xf8] sm:$0xff]
      %v220 = vld [vmem:[%s177] sm:$0xf]
      %v221 = vld [vmem:[%s177 + $0x4] sm:$0xf]
      %v222 = vld [vmem:[%s177 + $0x8] sm:$0xf]
      %v223 = vld [vmem:[%s177 + $0xc] sm:$0xf]
      %v224 = vld [vmem:[%s177 + $0x10] sm:$0xf]
      %v225 = vld [vmem:[%s177 + $0x14] sm:$0xf]
      %v226 = vld [vmem:[%s177 + $0x18] sm:$0xf]
      %v227 = vld [vmem:[%s177 + $0x1c] sm:$0xf]
      %v228 = vld [vmem:[%s177 + $0x20] sm:$0xf]
      %v229 = vld [vmem:[%s177 + $0x24] sm:$0xf]
      %v230 = vld [vmem:[%s177 + $0x28] sm:$0xf]
      %v231 = vld [vmem:[%s177 + $0x2c] sm:$0xf]
      %v232 = vld [vmem:[%s177 + $0x30] sm:$0xf]
      %v233 = vld [vmem:[%s177 + $0x34] sm:$0xf]
      %v234 = vld [vmem:[%s177 + $0x38] sm:$0xf]
      %v235 = vld [vmem:[%s177 + $0x3c] sm:$0xf]
      %v236 = vld [vmem:[%s177 + $0x40] sm:$0xf]
      %v237 = vld [vmem:[%s177 + $0x44] sm:$0xf]
      %v270 = vunpack.c.l.b16 %v188
      %v271 = vunpack.c.h.b16 %v188
      %v272 = vunpack.c.l.b16 %v189
      %v273 = vunpack.c.h.b16 %v189
      %v274 = vunpack.c.l.b16 %v190
      %v275 = vunpack.c.h.b16 %v190
      %v276 = vunpack.c.l.b16 %v191
      %v277 = vunpack.c.h.b16 %v191
      %v278 = vunpack.c.l.b16 %v192
      %v279 = vunpack.c.h.b16 %v192
      %v280 = vunpack.c.l.b16 %v193
      %v281 = vunpack.c.h.b16 %v193
      %v282 = vunpack.c.l.b16 %v194
      %v283 = vunpack.c.h.b16 %v194
      %v284 = vunpack.c.l.b16 %v195
      %v285 = vunpack.c.h.b16 %v195
      %v286 = vunpack.c.l.b16 %v196
      %v287 = vunpack.c.h.b16 %v196
      %v288 = vunpack.c.l.b16 %v197
      %v289 = vunpack.c.h.b16 %v197
      %v290 = vunpack.c.l.b16 %v198
      %v291 = vunpack.c.h.b16 %v198
      %v292 = vunpack.c.l.b16 %v199
      %v293 = vunpack.c.h.b16 %v199
      %v294 = vunpack.c.l.b16 %v200
      %v295 = vunpack.c.h.b16 %v200
      %v296 = vunpack.c.l.b16 %v201
      %v297 = vunpack.c.h.b16 %v201
      %v298 = vunpack.c.l.b16 %v202
      %v299 = vunpack.c.h.b16 %v202
      %v300 = vunpack.c.l.b16 %v203
      %v301 = vunpack.c.h.b16 %v203
      %v302 = vunpack.c.l.b16 %v204
      %v303 = vunpack.c.h.b16 %v204
      %v304 = vunpack.c.l.b16 %v205
      %v305 = vunpack.c.h.b16 %v205
      %v306 = vunpack.c.l.b16 %v206
      %v307 = vunpack.c.h.b16 %v206
      %v308 = vunpack.c.l.b16 %v207
      %v309 = vunpack.c.h.b16 %v207
      %v310 = vunpack.c.l.b16 %v208
      %v311 = vunpack.c.h.b16 %v208
      %v312 = vunpack.c.l.b16 %v209
      %v313 = vunpack.c.h.b16 %v209
      %v314 = vunpack.c.l.b16 %v210
      %v315 = vunpack.c.h.b16 %v210
      %v316 = vunpack.c.l.b16 %v211
      %v317 = vunpack.c.h.b16 %v211
      %v318 = vunpack.c.l.b16 %v212
      %v319 = vunpack.c.h.b16 %v212
      %v320 = vunpack.c.l.b16 %v213
      %v321 = vunpack.c.h.b16 %v213
      %v322 = vunpack.c.l.b16 %v214
      %v323 = vunpack.c.h.b16 %v214
      %v324 = vunpack.c.l.b16 %v215
      %v325 = vunpack.c.h.b16 %v215
      %v326 = vunpack.c.l.b16 %v216
      %v327 = vunpack.c.h.b16 %v216
      %v328 = vunpack.c.l.b16 %v217
      %v329 = vunpack.c.h.b16 %v217
      %v330 = vunpack.c.l.b16 %v218
      %v331 = vunpack.c.h.b16 %v218
      %v332 = vunpack.c.l.b16 %v219
      %v333 = vunpack.c.h.b16 %v219
      %v334 = vpack.c.b16 %v272, %v270
      %v335 = vpack.c.b16 %v273, %v271
      %v336 = vpack.c.b16 %v276, %v274
      %v337 = vpack.c.b16 %v277, %v275
      %v338 = vpack.c.b16 %v280, %v278
      %v339 = vpack.c.b16 %v281, %v279
      %v340 = vpack.c.b16 %v284, %v282
      %v341 = vpack.c.b16 %v285, %v283
      %v342 = vpack.c.b16 %v288, %v286
      %v343 = vpack.c.b16 %v289, %v287
      %v344 = vpack.c.b16 %v292, %v290
      %v345 = vpack.c.b16 %v293, %v291
      %v346 = vpack.c.b16 %v296, %v294
      %v347 = vpack.c.b16 %v297, %v295
      %v348 = vpack.c.b16 %v300, %v298
      %v349 = vpack.c.b16 %v301, %v299
      %v350 = vpack.c.b16 %v304, %v302
      %v351 = vpack.c.b16 %v305, %v303
      %v352 = vpack.c.b16 %v308, %v306
      %v353 = vpack.c.b16 %v309, %v307
      %v354 = vpack.c.b16 %v312, %v310
      %v355 = vpack.c.b16 %v313, %v311
      %v356 = vpack.c.b16 %v316, %v314
      %v357 = vpack.c.b16 %v317, %v315
      %v358 = vpack.c.b16 %v320, %v318
      %v359 = vpack.c.b16 %v321, %v319
      %v360 = vpack.c.b16 %v324, %v322
      %v361 = vpack.c.b16 %v325, %v323
      %v362 = vpack.c.b16 %v328, %v326
      %v363 = vpack.c.b16 %v329, %v327
      %v364 = vpack.c.b16 %v332, %v330
      %v365 = vpack.c.b16 %v333, %v331
      %v400 = vunpack.c.l.b16 %v220
      %v401 = vunpack.c.l.b16 %v221
      %v402 = vunpack.c.l.b16 %v222
      %v403 = vunpack.c.l.b16 %v223
      %v404 = vunpack.c.l.b16 %v224
      %v405 = vunpack.c.l.b16 %v225
      %v406 = vunpack.c.l.b16 %v226
      %v407 = vunpack.c.l.b16 %v227
      %v408 = vunpack.c.l.b16 %v228
      %v409 = vunpack.c.l.b16 %v229
      %v410 = vunpack.c.l.b16 %v230
      %v411 = vunpack.c.l.b16 %v231
      %v412 = vunpack.c.l.b16 %v232
      %v413 = vunpack.c.l.b16 %v233
      %v414 = vunpack.c.l.b16 %v234
      %v415 = vunpack.c.l.b16 %v235
      %v416 = vunpack.c.l.b16 %v236
      %v417 = vunpack.c.l.b16 %v237
      %v418 = vpack.c.b16 %v401, %v400
      %v419 = vpack.c.b16 %v403, %v402
      %v420 = vpack.c.b16 %v405, %v404
      %v421 = vpack.c.b16 %v407, %v406
      %v422 = vpack.c.b16 %v409, %v408
      %v423 = vpack.c.b16 %v411, %v410
      %v424 = vpack.c.b16 %v413, %v412
      %v425 = vpack.c.b16 %v415, %v414
      %v426 = vpack.c.b16 %v417, %v416
      %vm436 = vcmask 130048
      %v438 = vsel %vm436, %v335, 0
      %v441 = vsel %vm436, %v337, 0
      %v444 = vsel %vm436, %v339, 0
      %v447 = vsel %vm436, %v341, 0
      %v450 = vsel %vm436, %v343, 0
      %v453 = vsel %vm436, %v345, 0
      %v456 = vsel %vm436, %v347, 0
      %v459 = vsel %vm436, %v349, 0
      %v462 = vsel %vm436, %v351, 0
      %v465 = vsel %vm436, %v353, 0
      %v468 = vsel %vm436, %v355, 0
      %v471 = vsel %vm436, %v357, 0
      %v474 = vsel %vm436, %v359, 0
      %v477 = vsel %vm436, %v361, 0
      %v480 = vsel %vm436, %v363, 0
      %v483 = vsel %vm436, %v365, 0
      %485 = vmatpush.bf16.msra.mxu0 %v425
      %486 = vmatpush.bf16.msra.mxu0 %v424
      %487 = vmatpush.bf16.msra.mxu0 %v423
      %488 = vmatpush.bf16.msra.mxu0 %v422
      %489 = vmatpush.bf16.msra.mxu0 %v421
      %490 = vmatpush.bf16.msra.mxu0 %v420
      %491 = vmatpush.bf16.msra.mxu0 %v419
      %492 = vmatpush.bf16.msra.mxu0 %v418
      %493 = vmatmul.bf16.gmra.mxu0 %v334
      %v494 = vpop.f32.mrf.mxu0
      %v495 = vadd.f32 0.0, %v494
      %v496 = vpop.f32.mrf.mxu0
      %v497 = vadd.f32 0.0, %v496
      %498 = vmatmul.bf16.gmra.mxu0 %v336
      %v499 = vpop.f32.mrf.mxu0
      %v500 = vadd.f32 0.0, %v499
      %v501 = vpop.f32.mrf.mxu0
      %v502 = vadd.f32 0.0, %v501
      %503 = vmatmul.bf16.gmra.mxu0 %v338
      %v504 = vpop.f32.mrf.mxu0
      %v505 = vadd.f32 0.0, %v504
      %v506 = vpop.f32.mrf.mxu0
      %v507 = vadd.f32 0.0, %v506
      %508 = vmatmul.bf16.gmra.mxu0 %v340
      %v509 = vpop.f32.mrf.mxu0
      %v510 = vadd.f32 0.0, %v509
      %v511 = vpop.f32.mrf.mxu0
      %v512 = vadd.f32 0.0, %v511
      %513 = vmatmul.bf16.gmra.mxu0 %v342
      %v514 = vpop.f32.mrf.mxu0
      %v515 = vadd.f32 0.0, %v514
      %v516 = vpop.f32.mrf.mxu0
      %v517 = vadd.f32 0.0, %v516
      %518 = vmatmul.bf16.gmra.mxu0 %v344
      %v519 = vpop.f32.mrf.mxu0
      %v520 = vadd.f32 0.0, %v519
      %v521 = vpop.f32.mrf.mxu0
      %v522 = vadd.f32 0.0, %v521
      %523 = vmatmul.bf16.gmra.mxu0 %v346
      %v524 = vpop.f32.mrf.mxu0
      %v525 = vadd.f32 0.0, %v524
      %v526 = vpop.f32.mrf.mxu0
      %v527 = vadd.f32 0.0, %v526
      %528 = vmatmul.bf16.gmra.mxu0 %v348
      %v529 = vpop.f32.mrf.mxu0
      %v530 = vadd.f32 0.0, %v529
      %v531 = vpop.f32.mrf.mxu0
      %v532 = vadd.f32 0.0, %v531
      %533 = vmatmul.bf16.gmra.mxu0 %v350
      %v534 = vpop.f32.mrf.mxu0
      %v535 = vadd.f32 0.0, %v534
      %v536 = vpop.f32.mrf.mxu0
      %v537 = vadd.f32 0.0, %v536
      %538 = vmatmul.bf16.gmra.mxu0 %v352
      %v539 = vpop.f32.mrf.mxu0
      %v540 = vadd.f32 0.0, %v539
      %v541 = vpop.f32.mrf.mxu0
      %v542 = vadd.f32 0.0, %v541
      %543 = vmatmul.bf16.gmra.mxu0 %v354
      %v544 = vpop.f32.mrf.mxu0
      %v545 = vadd.f32 0.0, %v544
      %v546 = vpop.f32.mrf.mxu0
      %v547 = vadd.f32 0.0, %v546
      %548 = vmatmul.bf16.gmra.mxu0 %v356
      %v549 = vpop.f32.mrf.mxu0
      %v550 = vadd.f32 0.0, %v549
      %v551 = vpop.f32.mrf.mxu0
      %v552 = vadd.f32 0.0, %v551
      %553 = vmatmul.bf16.gmra.mxu0 %v358
      %v554 = vpop.f32.mrf.mxu0
      %v555 = vadd.f32 0.0, %v554
      %v556 = vpop.f32.mrf.mxu0
      %v557 = vadd.f32 0.0, %v556
      %558 = vmatmul.bf16.gmra.mxu0 %v360
      %v559 = vpop.f32.mrf.mxu0
      %v560 = vadd.f32 0.0, %v559
      %v561 = vpop.f32.mrf.mxu0
      %v562 = vadd.f32 0.0, %v561
      %563 = vmatmul.bf16.gmra.mxu0 %v362
      %v564 = vpop.f32.mrf.mxu0
      %v565 = vadd.f32 0.0, %v564
      %v566 = vpop.f32.mrf.mxu0
      %v567 = vadd.f32 0.0, %v566
      %568 = vmatmul.bf16.gmra.mxu0 %v364
      %v569 = vpop.f32.mrf.mxu0
      %v570 = vadd.f32 0.0, %v569
      %v571 = vpop.f32.mrf.mxu0
      %v572 = vadd.f32 0.0, %v571
      %573 = vdwg.mxu0
      %574 = vmatpush.bf16.msra.mxu0 0
      %575 = vmatpush.bf16.msra.mxu0 0
      %576 = vmatpush.bf16.msra.mxu0 0
      %577 = vmatpush.bf16.msra.mxu0 0
      %578 = vmatpush.bf16.msra.mxu0 0
      %579 = vmatpush.bf16.msra.mxu0 0
      %580 = vmatpush.bf16.msra.mxu0 0
      %581 = vmatpush.bf16.msra.mxu0 %v426
      %582 = vmatmul.bf16.gmra.mxu0 %v438
      %v583 = vpop.f32.mrf.mxu0
      %v584 = vadd.f32 %v495, %v583
      %v585 = vpop.f32.mrf.mxu0
      %v586 = vadd.f32 %v497, %v585
      %587 = vmatmul.bf16.gmra.mxu0 %v441
      %v588 = vpop.f32.mrf.mxu0
      %v589 = vadd.f32 %v500, %v588
      %v590 = vpop.f32.mrf.mxu0
      %v591 = vadd.f32 %v502, %v590
      %592 = vmatmul.bf16.gmra.mxu0 %v444
      %v593 = vpop.f32.mrf.mxu0
      %v594 = vadd.f32 %v505, %v593
      %v595 = vpop.f32.mrf.mxu0
      %v596 = vadd.f32 %v507, %v595
      %597 = vmatmul.bf16.gmra.mxu0 %v447
      %v598 = vpop.f32.mrf.mxu0
      %v599 = vadd.f32 %v510, %v598
      %v600 = vpop.f32.mrf.mxu0
      %v601 = vadd.f32 %v512, %v600
      %602 = vmatmul.bf16.gmra.mxu0 %v450
      %v603 = vpop.f32.mrf.mxu0
      %v604 = vadd.f32 %v515, %v603
      %v605 = vpop.f32.mrf.mxu0
      %v606 = vadd.f32 %v517, %v605
      %607 = vmatmul.bf16.gmra.mxu0 %v453
      %v608 = vpop.f32.mrf.mxu0
      %v609 = vadd.f32 %v520, %v608
      %v610 = vpop.f32.mrf.mxu0
      %v611 = vadd.f32 %v522, %v610
      %612 = vmatmul.bf16.gmra.mxu0 %v456
      %v613 = vpop.f32.mrf.mxu0
      %v614 = vadd.f32 %v525, %v613
      %v615 = vpop.f32.mrf.mxu0
      %v616 = vadd.f32 %v527, %v615
      %617 = vmatmul.bf16.gmra.mxu0 %v459
      %v618 = vpop.f32.mrf.mxu0
      %v619 = vadd.f32 %v530, %v618
      %v620 = vpop.f32.mrf.mxu0
      %v621 = vadd.f32 %v532, %v620
      %622 = vmatmul.bf16.gmra.mxu0 %v462
      %v623 = vpop.f32.mrf.mxu0
      %v624 = vadd.f32 %v535, %v623
      %v625 = vpop.f32.mrf.mxu0
      %v626 = vadd.f32 %v537, %v625
      %627 = vmatmul.bf16.gmra.mxu0 %v465
      %v628 = vpop.f32.mrf.mxu0
      %v629 = vadd.f32 %v540, %v628
      %v630 = vpop.f32.mrf.mxu0
      %v631 = vadd.f32 %v542, %v630
      %632 = vmatmul.bf16.gmra.mxu0 %v468
      %v633 = vpop.f32.mrf.mxu0
      %v634 = vadd.f32 %v545, %v633
      %v635 = vpop.f32.mrf.mxu0
      %v636 = vadd.f32 %v547, %v635
      %637 = vmatmul.bf16.gmra.mxu0 %v471
      %v638 = vpop.f32.mrf.mxu0
      %v639 = vadd.f32 %v550, %v638
      %v640 = vpop.f32.mrf.mxu0
      %v641 = vadd.f32 %v552, %v640
      %642 = vmatmul.bf16.gmra.mxu0 %v474
      %v643 = vpop.f32.mrf.mxu0
      %v644 = vadd.f32 %v555, %v643
      %v645 = vpop.f32.mrf.mxu0
      %v646 = vadd.f32 %v557, %v645
      %647 = vmatmul.bf16.gmra.mxu0 %v477
      %v648 = vpop.f32.mrf.mxu0
      %v649 = vadd.f32 %v560, %v648
      %v650 = vpop.f32.mrf.mxu0
      %v651 = vadd.f32 %v562, %v650
      %652 = vmatmul.bf16.gmra.mxu0 %v480
      %v653 = vpop.f32.mrf.mxu0
      %v654 = vadd.f32 %v565, %v653
      %v655 = vpop.f32.mrf.mxu0
      %v656 = vadd.f32 %v567, %v655
      %657 = vmatmul.bf16.gmra.mxu0 %v483
      %v658 = vpop.f32.mrf.mxu0
      %v659 = vadd.f32 %v570, %v658
      %v660 = vpop.f32.mrf.mxu0
      %v661 = vadd.f32 %v572, %v660
      %662 = vdwg.mxu0
      %v663 = vmul.f32 %v584, 0.2
      %v664 = vmul.f32 %v586, 0.2
      %v665 = vmul.f32 %v589, 0.2
      %v666 = vmul.f32 %v591, 0.2
      %v667 = vmul.f32 %v594, 0.2
      %v668 = vmul.f32 %v596, 0.2
      %v669 = vmul.f32 %v599, 0.2
      %v670 = vmul.f32 %v601, 0.2
      %v671 = vmul.f32 %v604, 0.2
      %v672 = vmul.f32 %v606, 0.2
      %v673 = vmul.f32 %v609, 0.2
      %v674 = vmul.f32 %v611, 0.2
      %v675 = vmul.f32 %v614, 0.2
      %v676 = vmul.f32 %v616, 0.2
      %v677 = vmul.f32 %v619, 0.2
      %v678 = vmul.f32 %v621, 0.2
      %v679 = vmul.f32 %v624, 0.2
      %v680 = vmul.f32 %v626, 0.2
      %v681 = vmul.f32 %v629, 0.2
      %v682 = vmul.f32 %v631, 0.2
      %v683 = vmul.f32 %v634, 0.2
      %v684 = vmul.f32 %v636, 0.2
      %v685 = vmul.f32 %v639, 0.2
      %v686 = vmul.f32 %v641, 0.2
      %v687 = vmul.f32 %v644, 0.2
      %v688 = vmul.f32 %v646, 0.2
      %v689 = vmul.f32 %v649, 0.2
      %v690 = vmul.f32 %v651, 0.2
      %v691 = vmul.f32 %v654, 0.2
      %v692 = vmul.f32 %v656, 0.2
      %v693 = vmul.f32 %v659, 0.2
      %v694 = vmul.f32 %v661, 0.2
      %v695 = vmax.f32 %v584, %v663
      %v696 = vmax.f32 %v586, %v664
      %v697 = vmax.f32 %v589, %v665
      %v698 = vmax.f32 %v591, %v666
      %v699 = vmax.f32 %v594, %v667
      %v700 = vmax.f32 %v596, %v668
      %v701 = vmax.f32 %v599, %v669
      %v702 = vmax.f32 %v601, %v670
      %v703 = vmax.f32 %v604, %v671
      %v704 = vmax.f32 %v606, %v672
      %v705 = vmax.f32 %v609, %v673
      %v706 = vmax.f32 %v611, %v674
      %v707 = vmax.f32 %v614, %v675
      %v708 = vmax.f32 %v616, %v676
      %v709 = vmax.f32 %v619, %v677
      %v710 = vmax.f32 %v621, %v678
      %v711 = vmax.f32 %v624, %v679
      %v712 = vmax.f32 %v626, %v680
      %v713 = vmax.f32 %v629, %v681
      %v714 = vmax.f32 %v631, %v682
      %v715 = vmax.f32 %v634, %v683
      %v716 = vmax.f32 %v636, %v684
      %v717 = vmax.f32 %v639, %v685
      %v718 = vmax.f32 %v641, %v686
      %v719 = vmax.f32 %v644, %v687
      %v720 = vmax.f32 %v646, %v688
      %v721 = vmax.f32 %v649, %v689
      %v722 = vmax.f32 %v651, %v690
      %v723 = vmax.f32 %v654, %v691
      %v724 = vmax.f32 %v656, %v692
      %v725 = vmax.f32 %v659, %v693
      %v726 = vmax.f32 %v661, %v694
      %v727 = vpack.c.bf16 %v695, %v695
      %v728 = vpack.c.bf16 %v696, %v696
      %v729 = vpack.c.bf16 %v697, %v697
      %v730 = vpack.c.bf16 %v698, %v698
      %v731 = vpack.c.bf16 %v699, %v699
      %v732 = vpack.c.bf16 %v700, %v700
      %v733 = vpack.c.bf16 %v701, %v701
      %v734 = vpack.c.bf16 %v702, %v702
      %v735 = vpack.c.bf16 %v703, %v703
      %v736 = vpack.c.bf16 %v704, %v704
      %v737 = vpack.c.bf16 %v705, %v705
      %v738 = vpack.c.bf16 %v706, %v706
      %v739 = vpack.c.bf16 %v707, %v707
      %v740 = vpack.c.bf16 %v708, %v708
      %v741 = vpack.c.bf16 %v709, %v709
      %v742 = vpack.c.bf16 %v710, %v710
      %v743 = vpack.c.bf16 %v711, %v711
      %v744 = vpack.c.bf16 %v712, %v712
      %v745 = vpack.c.bf16 %v713, %v713
      %v746 = vpack.c.bf16 %v714, %v714
      %v747 = vpack.c.bf16 %v715, %v715
      %v748 = vpack.c.bf16 %v716, %v716
      %v749 = vpack.c.bf16 %v717, %v717
      %v750 = vpack.c.bf16 %v718, %v718
      %v751 = vpack.c.bf16 %v719, %v719
      %v752 = vpack.c.bf16 %v720, %v720
      %v753 = vpack.c.bf16 %v721, %v721
      %v754 = vpack.c.bf16 %v722, %v722
      %v755 = vpack.c.bf16 %v723, %v723
      %v756 = vpack.c.bf16 %v724, %v724
      %v757 = vpack.c.bf16 %v725, %v725
      %v758 = vpack.c.bf16 %v726, %v726
      %759 = vst [vmem:[%s185] sm:$0xf] %v727
      %760 = vst [vmem:[%s185 + $0x4] sm:$0xf] %v728
      %761 = vst [vmem:[%s185 + $0x8] sm:$0xf] %v729
      %762 = vst [vmem:[%s185 + $0xc] sm:$0xf] %v730
      %763 = vst [vmem:[%s185 + $0x10] sm:$0xf] %v731
      %764 = vst [vmem:[%s185 + $0x14] sm:$0xf] %v732
      %765 = vst [vmem:[%s185 + $0x18] sm:$0xf] %v733
      %766 = vst [vmem:[%s185 + $0x1c] sm:$0xf] %v734
      %767 = vst [vmem:[%s185 + $0x20] sm:$0xf] %v735
      %768 = vst [vmem:[%s185 + $0x24] sm:$0xf] %v736
      %769 = vst [vmem:[%s185 + $0x28] sm:$0xf] %v737
      %770 = vst [vmem:[%s185 + $0x2c] sm:$0xf] %v738
      %771 = vst [vmem:[%s185 + $0x30] sm:$0xf] %v739
      %772 = vst [vmem:[%s185 + $0x34] sm:$0xf] %v740
      %773 = vst [vmem:[%s185 + $0x38] sm:$0xf] %v741
      %774 = vst [vmem:[%s185 + $0x3c] sm:$0xf] %v742
      %775 = vst [vmem:[%s185 + $0x40] sm:$0xf] %v743
      %776 = vst [vmem:[%s185 + $0x44] sm:$0xf] %v744
      %777 = vst [vmem:[%s185 + $0x48] sm:$0xf] %v745
      %778 = vst [vmem:[%s185 + $0x4c] sm:$0xf] %v746
      %779 = vst [vmem:[%s185 + $0x50] sm:$0xf] %v747
      %780 = vst [vmem:[%s185 + $0x54] sm:$0xf] %v748
      %781 = vst [vmem:[%s185 + $0x58] sm:$0xf] %v749
      %782 = vst [vmem:[%s185 + $0x5c] sm:$0xf] %v750
      %783 = vst [vmem:[%s185 + $0x60] sm:$0xf] %v751
      %784 = vst [vmem:[%s185 + $0x64] sm:$0xf] %v752
      %785 = vst [vmem:[%s185 + $0x68] sm:$0xf] %v753
      %786 = vst [vmem:[%s185 + $0x6c] sm:$0xf] %v754
      %787 = vst [vmem:[%s185 + $0x70] sm:$0xf] %v755
      %788 = vst [vmem:[%s185 + $0x74] sm:$0xf] %v756
      %789 = vst [vmem:[%s185 + $0x78] sm:$0xf] %v757
      %790 = vst [vmem:[%s185 + $0x7c] sm:$0xf] %v758
      %s791 = smul.u32 32, %s17
      %p792 = scmp.lt.s32.totalorder %s791, 63
      %s793 = scalar_select %p792, %s791, 63
      %p794 = scmp.lt.s32.totalorder %s18, 0
      %s795 = scalar_select %p794, %s18, 0
      %s796 = sadd.s32 %s795, %s793
      %s797 = smul.addr %s796, 4
      %s798 = scalar_lea.vmem %s2, %s797
      // Predicated region
      $region29: #{discriminator_unet_forward.17} parent=27 // pred_check
        %p799 = pneg %p97
      $region30: #{discriminator_unet_forward.17} parent=27 // pred_check_branch
        %801 = sbr.rel (%p799) target = $region32
      $region31: #{discriminator_unet_forward.17} parent=27 // pred_region
        %s802 = smul.u32 32, %s17
      $region32: #{discriminator_unet_forward.17} parent=27 // pred_fallthru
        _
    $region28: #{discriminator_unet_forward.17} parent=5 // pred_fallthru
      _
    %p803 = scmp.le.s32.totalorder 2, %s8
    // Predicated region
    $region33: #{discriminator_unet_forward.17} parent=5 // pred_check
      %p804 = pneg %p803
    $region34: #{discriminator_unet_forward.17} parent=5 // pred_check_branch
      %806 = sbr.rel (%p804) target = $region36
    $region35: #{discriminator_unet_forward.17} parent=5 // pred_region
      %s807 = ssub.s32 %s8, 2
      // Predicated region
      $region37: #{discriminator_unet_forward.17} parent=35 // pred_check
        %p808 = pneg %p103
      $region38: #{discriminator_unet_forward.17} parent=35 // pred_check_branch
        %810 = sbr.rel (%p808) target = $region40
      $region39: #{discriminator_unet_forward.17} parent=35 // pred_region
        %s811 = smul.u32 32, %s19
        %p812 = scmp.lt.s32.totalorder %s811, 63
        %s813 = scalar_select %p812, %s811, 63
        %p814 = scmp.lt.s32.totalorder %s20, 0
        %s815 = scalar_select %p814, %s20, 0
        %s816 = sadd.s32 %s815, %s813
        %s817 = smul.addr %s816, 4
        %s818 = scalar_lea.vmem %s2, %s817
      $region40: #{discriminator_unet_forward.17} parent=35 // pred_fallthru
        _
    $region36: #{discriminator_unet_forward.17} parent=5 // pred_fallthru
      _
  $region6: #{discriminator_unet_forward.17} parent=0 // loop_footer
    %s12 = sadd.s32 1, %s8
  $region7: #{discriminator_unet_forward.17} parent=0 // loop_footer_branch
    %7 = sbr.rel target = $region3
  $region8: #{discriminator_unet_forward.17} parent=0 // loop_exit
    _

// kernel: discriminator_unet_forward.19
$region0: #{discriminator_unet_forward.19}
  #allocation0 [shape = 'u32[]', space=smem, size = 0x4, offset = 0x4, fixed_abs, tag = 'smem constant byte address 0x4 - core index']
  #allocation1 [shape = 'u32[72,128]{1,0:T(1,128)}', space=vmem, size = 0x9000, scoped, tag = 'internal scratch']
  %s0 = inlined_call_operand.vmem [shape: bf16[512,144], index: 0, kind: input, shape index: {}]
  %s1 = inlined_call_operand.vmem [shape: bf16[144,128], index: 1, kind: input, shape index: {}]
  %s2 = inlined_call_operand.vmem [shape: f32[1,128], index: 2, kind: input, shape index: {}]
  %s3 = inlined_call_operand.vmem [shape: bf16[512,128], index: 3, kind: output, shape index: {}]
  %s4 = sld [smem:[#allocation0]]
  $region45: #{discriminator_unet_forward.19} parent=0
    _
  %s6 = ssub.s32 1, %s4
  %s7 = scalar_select 0, %s6, %s4
  loop: start=0, step=1, limit=4
  $region2: #{discriminator_unet_forward.19} parent=0 // loop_pre_header
    _
  $region3: #{discriminator_unet_forward.19} parent=0 // loop_header
    %s9 = sphi 0, %s13
    %p10 = scmp.ge.s32.totalorder %s9, 4
    %s16 = sphi 0, %s28
    %s17 = sphi 0, %s24
    %s18 = sphi 0, %s16
    %s19 = sphi 0, %s17
    %s20 = sphi 0, %s18
    %s21 = sphi 0, %s19
    %s31 = sphi 0, %s33
    %s34 = sphi 0, %s31
    %s35 = sphi 0, %s34
    %s51 = sphi 0, %s35
    %s57 = sphi 0, %s59
    %s60 = sphi 0, %s57
    %s61 = sphi 0, %s60
    %s77 = sphi 0, %s61
    %s83 = sphi 0, %s85
    %s86 = sphi 0, %s83
    %s87 = sphi 0, %s86
    %s103 = sphi 0, %s87
    %s111 = sphi 0, %s113
    %s114 = sphi 0, %s111
    %s115 = sphi 0, %s114
    %s131 = sphi 0, %s115
  $region4: #{discriminator_unet_forward.19} parent=0 // loop_header_branch
    %12 = sbr.rel (%p10) target = $region8
  $region5: #{discriminator_unet_forward.19} parent=0 // loop_body
    %s14 = ssub.s32 %s9, 1
    %s15 = ssub.s32 %s9, 2
    %s22 = sadd.s32 1, %s17
    %p23 = scmp.ge.s32.totalorder %s22, 1
    %s24 = scalar_select %p23, 0, %s22
    %s25 = sadd.s32 1, %s16
    %s26 = scalar_select %p23, %s25, %s16
    %p27 = scmp.ge.s32.totalorder %s26, 2
    %s28 = scalar_select %p27, 0, %s26
    %s29 = ssub.s32 %s16, %s28
    %p30 = scmp.eq.s32.totalorder %s29, 0
    %s32 = sadd.s32 %s31, 1
    %s33 = scalar_select %p30, %s31, %s32
    %p36 = pneg %p30
    %p37 = scmp.eq.s32.totalorder %s9, 1
    %p38 = por %p36, %p37
    %p39 = scmp.ne.s32.totalorder %s31, %s34
    %p40 = scmp.eq.s32.totalorder %s9, 0
    %p41 = por %p39, %p40
    %p42 = scmp.ne.s32.totalorder %s31, %s34
    %p43 = scmp.eq.s32.totalorder %s14, 1
    %p44 = por %p42, %p43
    %p45 = scmp.ne.s32.totalorder %s34, %s35
    %p46 = scmp.eq.s32.totalorder %s14, 0
    %p47 = por %p45, %p46
    %p48 = scmp.ne.s32.totalorder %s34, %s35
    %p49 = scmp.eq.s32.totalorder %s15, 1
    %p50 = por %p48, %p49
    %p52 = scmp.ne.s32.totalorder %s35, %s51
    %p53 = scmp.eq.s32.totalorder %s15, 0
    %p54 = por %p52, %p53
    %s55 = ssub.s32 %s17, %s24
    %p56 = scmp.eq.s32.totalorder %s55, 0
    %s58 = sadd.s32 %s57, 1
    %s59 = scalar_select %p56, %s57, %s58
    %p62 = pneg %p56
    %p63 = scmp.eq.s32.totalorder %s9, 1
    %p64 = por %p62, %p63
    %p65 = scmp.ne.s32.totalorder %s57, %s60
    %p66 = scmp.eq.s32.totalorder %s9, 0
    %p67 = por %p65, %p66
    %p68 = scmp.ne.s32.totalorder %s57, %s60
    %p69 = scmp.eq.s32.totalorder %s14, 1
    %p70 = por %p68, %p69
    %p71 = scmp.ne.s32.totalorder %s60, %s61
    %p72 = scmp.eq.s32.totalorder %s14, 0
    %p73 = por %p71, %p72
    %p74 = scmp.ne.s32.totalorder %s60, %s61
    %p75 = scmp.eq.s32.totalorder %s15, 1
    %p76 = por %p74, %p75
    %p78 = scmp.ne.s32.totalorder %s61, %s77
    %p79 = scmp.eq.s32.totalorder %s15, 0
    %p80 = por %p78, %p79
    %s81 = ssub.s32 %s17, %s24
    %p82 = scmp.eq.s32.totalorder %s81, 0
    %s84 = sadd.s32 %s83, 1
    %s85 = scalar_select %p82, %s83, %s84
    %p88 = pneg %p82
    %p89 = scmp.eq.s32.totalorder %s9, 1
    %p90 = por %p88, %p89
    %p91 = scmp.ne.s32.totalorder %s83, %s86
    %p92 = scmp.eq.s32.totalorder %s9, 0
    %p93 = por %p91, %p92
    %p94 = scmp.ne.s32.totalorder %s83, %s86
    %p95 = scmp.eq.s32.totalorder %s14, 1
    %p96 = por %p94, %p95
    %p97 = scmp.ne.s32.totalorder %s86, %s87
    %p98 = scmp.eq.s32.totalorder %s14, 0
    %p99 = por %p97, %p98
    %p100 = scmp.ne.s32.totalorder %s86, %s87
    %p101 = scmp.eq.s32.totalorder %s15, 1
    %p102 = por %p100, %p101
    %p104 = scmp.ne.s32.totalorder %s87, %s103
    %p105 = scmp.eq.s32.totalorder %s15, 0
    %p106 = por %p104, %p105
    %s107 = ssub.s32 %s16, %s28
    %s108 = ssub.s32 %s17, %s24
    %s109 = sor.u32 %s107, %s108
    %p110 = scmp.eq.s32.totalorder %s109, 0
    %s112 = sadd.s32 %s111, 1
    %s113 = scalar_select %p110, %s111, %s112
    %p116 = pneg %p110
    %p117 = scmp.eq.s32.totalorder %s9, 1
    %p118 = por %p116, %p117
    %p119 = scmp.ne.s32.totalorder %s111, %s114
    %p120 = scmp.eq.s32.totalorder %s9, 0
    %p121 = por %p119, %p120
    %p122 = scmp.ne.s32.totalorder %s111, %s114
    %p123 = scmp.eq.s32.totalorder %s14, 1
    %p124 = por %p122, %p123
    %p125 = scmp.ne.s32.totalorder %s114, %s115
    %p126 = scmp.eq.s32.totalorder %s14, 0
    %p127 = por %p125, %p126
    %p128 = scmp.ne.s32.totalorder %s114, %s115
    %p129 = scmp.eq.s32.totalorder %s15, 1
    %p130 = por %p128, %p129
    %p132 = scmp.ne.s32.totalorder %s115, %s131
    %p133 = scmp.eq.s32.totalorder %s15, 0
    %p134 = por %p132, %p133
    %p135 = scmp.le.s32.totalorder 1, %s9
    %p136 = scmp.lt.s32.totalorder %s9, 3
    %p137 = pnand %p135, %p136
    %p138 = pneg %p137
    // Predicated region
    $region9: #{discriminator_unet_forward.19} parent=5 // pred_check
      _
    $region10: #{discriminator_unet_forward.19} parent=5 // pred_check_branch
      %140 = sbr.rel (%p137) target = $region12
    $region11: #{discriminator_unet_forward.19} parent=5 // pred_region
      %s141 = ssub.s32 %s9, 1
      // Predicated region
      $region13: #{discriminator_unet_forward.19} parent=11 // pred_check
        %p142 = pneg %p73
      $region14: #{discriminator_unet_forward.19} parent=11 // pred_check_branch
        %144 = sbr.rel (%p142) target = $region16
      $region15: #{discriminator_unet_forward.19} parent=11 // pred_region
        %p145 = scmp.lt.s32.totalorder %s19, 0
        %s146 = scalar_select %p145, %s19, 0
        %s147 = smul.addr %s146, 4
        %s148 = scalar_lea.vmem %s1, %s147
      $region16: #{discriminator_unet_forward.19} parent=11 // pred_fallthru
        _
      // Predicated region
      $region17: #{discriminator_unet_forward.19} parent=11 // pred_check
        %p149 = pneg %p99
      $region18: #{discriminator_unet_forward.19} parent=11 // pred_check_branch
        %151 = sbr.rel (%p149) target = $region20
      $region19: #{discriminator_unet_forward.19} parent=11 // pred_region
        %p152 = scmp.lt.s32.totalorder %s19, 0
        %s153 = scalar_select %p152, %s19, 0
        %s154 = scalar_lea.vmem %s2, %s153
      $region20: #{discriminator_unet_forward.19} parent=11 // pred_fallthru
        _
    $region12: #{discriminator_unet_forward.19} parent=5 // pred_fallthru
      _
    %p155 = scmp.lt.s32.totalorder %s9, 2
    // Predicated region
    $region21: #{discriminator_unet_forward.19} parent=5 // pred_check
      %p156 = pneg %p155
    $region22: #{discriminator_unet_forward.19} parent=5 // pred_check_branch
      %158 = sbr.rel (%p156) target = $region24
    $region23: #{discriminator_unet_forward.19} parent=5 // pred_region
      // Predicated region
      $region25: #{discriminator_unet_forward.19} parent=23 // pred_check
        %p159 = pneg %p41
      $region26: #{discriminator_unet_forward.19} parent=23 // pred_check_branch
        %161 = sbr.rel (%p159) target = $region28
      $region27: #{discriminator_unet_forward.19} parent=23 // pred_region
        %s162 = smul.u32 32, %s16
        %p163 = scmp.lt.s32.totalorder %s162, 63
        %s164 = scalar_select %p163, %s162, 63
        %s165 = smul.addr %s164, 2
        %s166 = smul.addr %s165, 4
        %s167 = scalar_lea.vmem %s0, %s166
        %s168 = smul.u32 32, %s16
      $region28: #{discriminator_unet_forward.19} parent=23 // pred_fallthru
        _
    $region24: #{discriminator_unet_forward.19} parent=5 // pred_fallthru
      _
    %p169 = scmp.le.s32.totalorder 1, %s9
    %p170 = scmp.lt.s32.totalorder %s9, 3
    %p171 = pnand %p169, %p170
    %p172 = pneg %p171
    // Predicated region
    $region29: #{discriminator_unet_forward.19} parent=5 // pred_check
      _
    $region30: #{discriminator_unet_forward.19} parent=5 // pred_check_branch
      %174 = sbr.rel (%p171) target = $region32
    $region31: #{discriminator_unet_forward.19} parent=5 // pred_region
      %s175 = ssub.s32 %s9, 1
      %s176 = smul.u32 32, %s18
      %p177 = scmp.lt.s32.totalorder %s176, 63
      %s178 = scalar_select %p177, %s176, 63
      %s179 = smul.addr %s178, 2
      %s180 = smul.addr %s179, 4
      %s181 = scalar_lea.vmem %s0, %s180
      %p182 = pneg %p47
      %p183 = pneg %p44
      %p184 = scmp.lt.s32.totalorder %s19, 0
      %s185 = scalar_select %p184, %s19, 0
      %s186 = smul.addr %s185, 4
      %s187 = scalar_lea.vmem %s1, %s186
      %p188 = pneg %p73
      %p189 = pneg %p70
      %p190 = scmp.lt.s32.totalorder %s19, 0
      %s191 = scalar_select %p190, %s19, 0
      %s192 = scalar_lea.vmem %s2, %s191
      %p193 = pneg %p99
      %p194 = pneg %p96
      %p195 = pneg %p127
      %p196 = pneg %p124
      %s197 = smul.u32 32, %s18
      %p198 = scmp.lt.s32.totalorder %s197, 63
      %s199 = scalar_select %p198, %s197, 63
      %p200 = scmp.lt.s32.totalorder %s19, 0
      %s201 = scalar_select %p200, %s19, 0
      %s202 = sadd.s32 %s201, %s199
      %s203 = smul.addr %s202, 4
      %s204 = scalar_lea.vmem %s3, %s203
      %s205 = smul.u32 32, %s18
      %p206 = scmp.lt.s32.totalorder %s205, 63
      %s207 = scalar_select %p206, %s205, 63
      %s208 = smul.addr %s207, 2
      %s209 = smul.addr %s208, 4
      %s210 = scalar_lea.vmem %s0, %s209
      %s211 = smul.u32 32, %s18
      %p212 = scmp.lt.s32.totalorder %s19, 0
      %s213 = scalar_select %p212, %s19, 0
      %s214 = smul.addr %s213, 4
      %s215 = scalar_lea.vmem %s1, %s214
      %p216 = scmp.lt.s32.totalorder %s19, 0
      %s217 = scalar_select %p216, %s19, 0
      %s218 = scalar_lea.vmem %s2, %s217
      %s219 = smul.u32 32, %s18
      %p220 = scmp.lt.s32.totalorder %s219, 63
      %s221 = scalar_select %p220, %s219, 63
      %p222 = scmp.lt.s32.totalorder %s19, 0
      %s223 = scalar_select %p222, %s19, 0
      %s224 = sadd.s32 %s223, %s221
      %s225 = smul.addr %s224, 4
      %s226 = scalar_lea.vmem %s3, %s225
      %s227 = smul.u32 32, %s18
      %v229 = vld [vmem:[%s210] sm:$0xff]
      %v230 = vld [vmem:[%s210 + $0x8] sm:$0xff]
      %v231 = vld [vmem:[%s210 + $0x10] sm:$0xff]
      %v232 = vld [vmem:[%s210 + $0x18] sm:$0xff]
      %v233 = vld [vmem:[%s210 + $0x20] sm:$0xff]
      %v234 = vld [vmem:[%s210 + $0x28] sm:$0xff]
      %v235 = vld [vmem:[%s210 + $0x30] sm:$0xff]
      %v236 = vld [vmem:[%s210 + $0x38] sm:$0xff]
      %v237 = vld [vmem:[%s210 + $0x40] sm:$0xff]
      %v238 = vld [vmem:[%s210 + $0x48] sm:$0xff]
      %v239 = vld [vmem:[%s210 + $0x50] sm:$0xff]
      %v240 = vld [vmem:[%s210 + $0x58] sm:$0xff]
      %v241 = vld [vmem:[%s210 + $0x60] sm:$0xff]
      %v242 = vld [vmem:[%s210 + $0x68] sm:$0xff]
      %v243 = vld [vmem:[%s210 + $0x70] sm:$0xff]
      %v244 = vld [vmem:[%s210 + $0x78] sm:$0xff]
      %v245 = vld [vmem:[%s210 + $0x80] sm:$0xff]
      %v246 = vld [vmem:[%s210 + $0x88] sm:$0xff]
      %v247 = vld [vmem:[%s210 + $0x90] sm:$0xff]
      %v248 = vld [vmem:[%s210 + $0x98] sm:$0xff]
      %v249 = vld [vmem:[%s210 + $0xa0] sm:$0xff]
      %v250 = vld [vmem:[%s210 + $0xa8] sm:$0xff]
      %v251 = vld [vmem:[%s210 + $0xb0] sm:$0xff]
      %v252 = vld [vmem:[%s210 + $0xb8] sm:$0xff]
      %v253 = vld [vmem:[%s210 + $0xc0] sm:$0xff]
      %v254 = vld [vmem:[%s210 + $0xc8] sm:$0xff]
      %v255 = vld [vmem:[%s210 + $0xd0] sm:$0xff]
      %v256 = vld [vmem:[%s210 + $0xd8] sm:$0xff]
      %v257 = vld [vmem:[%s210 + $0xe0] sm:$0xff]
      %v258 = vld [vmem:[%s210 + $0xe8] sm:$0xff]
      %v259 = vld [vmem:[%s210 + $0xf0] sm:$0xff]
      %v260 = vld [vmem:[%s210 + $0xf8] sm:$0xff]
      %v261 = vld [vmem:[%s215] sm:$0xf]
      %v262 = vld [vmem:[%s215 + $0x4] sm:$0xf]
      %v263 = vld [vmem:[%s215 + $0x8] sm:$0xf]
      %v264 = vld [vmem:[%s215 + $0xc] sm:$0xf]
      %v265 = vld [vmem:[%s215 + $0x10] sm:$0xf]
      %v266 = vld [vmem:[%s215 + $0x14] sm:$0xf]
      %v267 = vld [vmem:[%s215 + $0x18] sm:$0xf]
      %v268 = vld [vmem:[%s215 + $0x1c] sm:$0xf]
      %v269 = vld [vmem:[%s215 + $0x20] sm:$0xf]
      %v270 = vld [vmem:[%s215 + $0x24] sm:$0xf]
      %v271 = vld [vmem:[%s215 + $0x28] sm:$0xf]
      %v272 = vld [vmem:[%s215 + $0x2c] sm:$0xf]
      %v273 = vld [vmem:[%s215 + $0x30] sm:$0xf]
      %v274 = vld [vmem:[%s215 + $0x34] sm:$0xf]
      %v275 = vld [vmem:[%s215 + $0x38] sm:$0xf]
      %v276 = vld [vmem:[%s215 + $0x3c] sm:$0xf]
      %v277 = vld [vmem:[%s215 + $0x40] sm:$0xf]
      %v278 = vld [vmem:[%s215 + $0x44] sm:$0xf]
      %v279 = vld [vmem:[%s218] sm:$0x1]
      %v281 = vperm.slane %v279, 0
      %v315 = vunpack.c.l.b16 %v229
      %v316 = vunpack.c.h.b16 %v229
      %v317 = vunpack.c.l.b16 %v230
      %v318 = vunpack.c.h.b16 %v230
      %v319 = vunpack.c.l.b16 %v231
      %v320 = vunpack.c.h.b16 %v231
      %v321 = vunpack.c.l.b16 %v232
      %v322 = vunpack.c.h.b16 %v232
      %v323 = vunpack.c.l.b16 %v233
      %v324 = vunpack.c.h.b16 %v233
      %v325 = vunpack.c.l.b16 %v234
      %v326 = vunpack.c.h.b16 %v234
      %v327 = vunpack.c.l.b16 %v235
      %v328 = vunpack.c.h.b16 %v235
      %v329 = vunpack.c.l.b16 %v236
      %v330 = vunpack.c.h.b16 %v236
      %v331 = vunpack.c.l.b16 %v237
      %v332 = vunpack.c.h.b16 %v237
      %v333 = vunpack.c.l.b16 %v238
      %v334 = vunpack.c.h.b16 %v238
      %v335 = vunpack.c.l.b16 %v239
      %v336 = vunpack.c.h.b16 %v239
      %v337 = vunpack.c.l.b16 %v240
      %v338 = vunpack.c.h.b16 %v240
      %v339 = vunpack.c.l.b16 %v241
      %v340 = vunpack.c.h.b16 %v241
      %v341 = vunpack.c.l.b16 %v242
      %v342 = vunpack.c.h.b16 %v242
      %v343 = vunpack.c.l.b16 %v243
      %v344 = vunpack.c.h.b16 %v243
      %v345 = vunpack.c.l.b16 %v244
      %v346 = vunpack.c.h.b16 %v244
      %v347 = vunpack.c.l.b16 %v245
      %v348 = vunpack.c.h.b16 %v245
      %v349 = vunpack.c.l.b16 %v246
      %v350 = vunpack.c.h.b16 %v246
      %v351 = vunpack.c.l.b16 %v247
      %v352 = vunpack.c.h.b16 %v247
      %v353 = vunpack.c.l.b16 %v248
      %v354 = vunpack.c.h.b16 %v248
      %v355 = vunpack.c.l.b16 %v249
      %v356 = vunpack.c.h.b16 %v249
      %v357 = vunpack.c.l.b16 %v250
      %v358 = vunpack.c.h.b16 %v250
      %v359 = vunpack.c.l.b16 %v251
      %v360 = vunpack.c.h.b16 %v251
      %v361 = vunpack.c.l.b16 %v252
      %v362 = vunpack.c.h.b16 %v252
      %v363 = vunpack.c.l.b16 %v253
      %v364 = vunpack.c.h.b16 %v253
      %v365 = vunpack.c.l.b16 %v254
      %v366 = vunpack.c.h.b16 %v254
      %v367 = vunpack.c.l.b16 %v255
      %v368 = vunpack.c.h.b16 %v255
      %v369 = vunpack.c.l.b16 %v256
      %v370 = vunpack.c.h.b16 %v256
      %v371 = vunpack.c.l.b16 %v257
      %v372 = vunpack.c.h.b16 %v257
      %v373 = vunpack.c.l.b16 %v258
      %v374 = vunpack.c.h.b16 %v258
      %v375 = vunpack.c.l.b16 %v259
      %v376 = vunpack.c.h.b16 %v259
      %v377 = vunpack.c.l.b16 %v260
      %v378 = vunpack.c.h.b16 %v260
      %v379 = vpack.c.b16 %v317, %v315
      %v380 = vpack.c.b16 %v318, %v316
      %v381 = vpack.c.b16 %v321, %v319
      %v382 = vpack.c.b16 %v322, %v320
      %v383 = vpack.c.b16 %v325, %v323
      %v384 = vpack.c.b16 %v326, %v324
      %v385 = vpack.c.b16 %v329, %v327
      %v386 = vpack.c.b16 %v330, %v328
      %v387 = vpack.c.b16 %v333, %v331
      %v388 = vpack.c.b16 %v334, %v332
      %v389 = vpack.c.b16 %v337, %v335
      %v390 = vpack.c.b16 %v338, %v336
      %v391 = vpack.c.b16 %v341, %v339
      %v392 = vpack.c.b16 %v342, %v340
      %v393 = vpack.c.b16 %v345, %v343
      %v394 = vpack.c.b16 %v346, %v344
      %v395 = vpack.c.b16 %v349, %v347
      %v396 = vpack.c.b16 %v350, %v348
      %v397 = vpack.c.b16 %v353, %v351
      %v398 = vpack.c.b16 %v354, %v352
      %v399 = vpack.c.b16 %v357, %v355
      %v400 = vpack.c.b16 %v358, %v356
      %v401 = vpack.c.b16 %v361, %v359
      %v402 = vpack.c.b16 %v362, %v360
      %v403 = vpack.c.b16 %v365, %v363
      %v404 = vpack.c.b16 %v366, %v364
      %v405 = vpack.c.b16 %v369, %v367
      %v406 = vpack.c.b16 %v370, %v368
      %v407 = vpack.c.b16 %v373, %v371
      %v408 = vpack.c.b16 %v374, %v372
      %v409 = vpack.c.b16 %v377, %v375
      %v410 = vpack.c.b16 %v378, %v376
      %v445 = vunpack.c.l.b16 %v261
      %v446 = vunpack.c.l.b16 %v262
      %v447 = vunpack.c.l.b16 %v263
      %v448 = vunpack.c.l.b16 %v264
      %v449 = vunpack.c.l.b16 %v265
      %v450 = vunpack.c.l.b16 %v266
      %v451 = vunpack.c.l.b16 %v267
      %v452 = vunpack.c.l.b16 %v268
      %v453 = vunpack.c.l.b16 %v269
      %v454 = vunpack.c.l.b16 %v270
      %v455 = vunpack.c.l.b16 %v271
      %v456 = vunpack.c.l.b16 %v272
      %v457 = vunpack.c.l.b16 %v273
      %v458 = vunpack.c.l.b16 %v274
      %v459 = vunpack.c.l.b16 %v275
      %v460 = vunpack.c.l.b16 %v276
      %v461 = vunpack.c.l.b16 %v277
      %v462 = vunpack.c.l.b16 %v278
      %v463 = vpack.c.b16 %v446, %v445
      %v464 = vpack.c.b16 %v448, %v447
      %v465 = vpack.c.b16 %v450, %v449
      %v466 = vpack.c.b16 %v452, %v451
      %v467 = vpack.c.b16 %v454, %v453
      %v468 = vpack.c.b16 %v456, %v455
      %v469 = vpack.c.b16 %v458, %v457
      %v470 = vpack.c.b16 %v460, %v459
      %v471 = vpack.c.b16 %v462, %v461
      %vm481 = vcmask 130048
      %v483 = vsel %vm481, %v380, 0
      %v486 = vsel %vm481, %v382, 0
      %v489 = vsel %vm481, %v384, 0
      %v492 = vsel %vm481, %v386, 0
      %v495 = vsel %vm481, %v388, 0
      %v498 = vsel %vm481, %v390, 0
      %v501 = vsel %vm481, %v392, 0
      %v504 = vsel %vm481, %v394, 0
      %v507 = vsel %vm481, %v396, 0
      %v510 = vsel %vm481, %v398, 0
      %v513 = vsel %vm481, %v400, 0
      %v516 = vsel %vm481, %v402, 0
      %v519 = vsel %vm481, %v404, 0
      %v522 = vsel %vm481, %v406, 0
      %v525 = vsel %vm481, %v408, 0
      %v528 = vsel %vm481, %v410, 0
      %530 = vmatpush.bf16.msra.mxu0 %v470
      %531 = vmatpush.bf16.msra.mxu0 %v469
      %532 = vmatpush.bf16.msra.mxu0 %v468
      %533 = vmatpush.bf16.msra.mxu0 %v467
      %534 = vmatpush.bf16.msra.mxu0 %v466
      %535 = vmatpush.bf16.msra.mxu0 %v465
      %536 = vmatpush.bf16.msra.mxu0 %v464
      %537 = vmatpush.bf16.msra.mxu0 %v463
      %538 = vmatmul.bf16.gmra.mxu0 %v379
      %v539 = vpop.f32.mrf.mxu0
      %v540 = vadd.f32 %v281, %v539
      %v541 = vpop.f32.mrf.mxu0
      %v542 = vadd.f32 %v281, %v541
      %543 = vmatmul.bf16.gmra.mxu0 %v381
      %v544 = vpop.f32.mrf.mxu0
      %v545 = vadd.f32 %v281, %v544
      %v546 = vpop.f32.mrf.mxu0
      %v547 = vadd.f32 %v281, %v546
      %548 = vmatmul.bf16.gmra.mxu0 %v383
      %v549 = vpop.f32.mrf.mxu0
      %v550 = vadd.f32 %v281, %v549
      %v551 = vpop.f32.mrf.mxu0
      %v552 = vadd.f32 %v281, %v551
      %553 = vmatmul.bf16.gmra.mxu0 %v385
      %v554 = vpop.f32.mrf.mxu0
      %v555 = vadd.f32 %v281, %v554
      %v556 = vpop.f32.mrf.mxu0
      %v557 = vadd.f32 %v281, %v556
      %558 = vmatmul.bf16.gmra.mxu0 %v387
      %v559 = vpop.f32.mrf.mxu0
      %v560 = vadd.f32 %v281, %v559
      %v561 = vpop.f32.mrf.mxu0
      %v562 = vadd.f32 %v281, %v561
      %563 = vmatmul.bf16.gmra.mxu0 %v389
      %v564 = vpop.f32.mrf.mxu0
      %v565 = vadd.f32 %v281, %v564
      %v566 = vpop.f32.mrf.mxu0
      %v567 = vadd.f32 %v281, %v566
      %568 = vmatmul.bf16.gmra.mxu0 %v391
      %v569 = vpop.f32.mrf.mxu0
      %v570 = vadd.f32 %v281, %v569
      %v571 = vpop.f32.mrf.mxu0
      %v572 = vadd.f32 %v281, %v571
      %573 = vmatmul.bf16.gmra.mxu0 %v393
      %v574 = vpop.f32.mrf.mxu0
      %v575 = vadd.f32 %v281, %v574
      %v576 = vpop.f32.mrf.mxu0
      %v577 = vadd.f32 %v281, %v576
      %578 = vmatmul.bf16.gmra.mxu0 %v395
      %v579 = vpop.f32.mrf.mxu0
      %v580 = vadd.f32 %v281, %v579
      %v581 = vpop.f32.mrf.mxu0
      %v582 = vadd.f32 %v281, %v581
      %583 = vmatmul.bf16.gmra.mxu0 %v397
      %v584 = vpop.f32.mrf.mxu0
      %v585 = vadd.f32 %v281, %v584
      %v586 = vpop.f32.mrf.mxu0
      %v587 = vadd.f32 %v281, %v586
      %588 = vmatmul.bf16.gmra.mxu0 %v399
      %v589 = vpop.f32.mrf.mxu0
      %v590 = vadd.f32 %v281, %v589
      %v591 = vpop.f32.mrf.mxu0
      %v592 = vadd.f32 %v281, %v591
      %593 = vmatmul.bf16.gmra.mxu0 %v401
      %v594 = vpop.f32.mrf.mxu0
      %v595 = vadd.f32 %v281, %v594
      %v596 = vpop.f32.mrf.mxu0
      %v597 = vadd.f32 %v281, %v596
      %598 = vmatmul.bf16.gmra.mxu0 %v403
      %v599 = vpop.f32.mrf.mxu0
      %v600 = vadd.f32 %v281, %v599
      %v601 = vpop.f32.mrf.mxu0
      %v602 = vadd.f32 %v281, %v601
      %603 = vmatmul.bf16.gmra.mxu0 %v405
      %v604 = vpop.f32.mrf.mxu0
      %v605 = vadd.f32 %v281, %v604
      %v606 = vpop.f32.mrf.mxu0
      %v607 = vadd.f32 %v281, %v606
      %608 = vmatmul.bf16.gmra.mxu0 %v407
      %v609 = vpop.f32.mrf.mxu0
      %v610 = vadd.f32 %v281, %v609
      %v611 = vpop.f32.mrf.mxu0
      %v612 = vadd.f32 %v281, %v611
      %613 = vmatmul.bf16.gmra.mxu0 %v409
      %v614 = vpop.f32.mrf.mxu0
      %v615 = vadd.f32 %v281, %v614
      %v616 = vpop.f32.mrf.mxu0
      %v617 = vadd.f32 %v281, %v616
      %618 = vdwg.mxu0
      %619 = vmatpush.bf16.msra.mxu0 0
      %620 = vmatpush.bf16.msra.mxu0 0
      %621 = vmatpush.bf16.msra.mxu0 0
      %622 = vmatpush.bf16.msra.mxu0 0
      %623 = vmatpush.bf16.msra.mxu0 0
      %624 = vmatpush.bf16.msra.mxu0 0
      %625 = vmatpush.bf16.msra.mxu0 0
      %626 = vmatpush.bf16.msra.mxu0 %v471
      %627 = vmatmul.bf16.gmra.mxu0 %v483
      %v628 = vpop.f32.mrf.mxu0
      %v629 = vadd.f32 %v540, %v628
      %v630 = vpop.f32.mrf.mxu0
      %v631 = vadd.f32 %v542, %v630
      %632 = vmatmul.bf16.gmra.mxu0 %v486
      %v633 = vpop.f32.mrf.mxu0
      %v634 = vadd.f32 %v545, %v633
      %v635 = vpop.f32.mrf.mxu0
      %v636 = vadd.f32 %v547, %v635
      %637 = vmatmul.bf16.gmra.mxu0 %v489
      %v638 = vpop.f32.mrf.mxu0
      %v639 = vadd.f32 %v550, %v638
      %v640 = vpop.f32.mrf.mxu0
      %v641 = vadd.f32 %v552, %v640
      %642 = vmatmul.bf16.gmra.mxu0 %v492
      %v643 = vpop.f32.mrf.mxu0
      %v644 = vadd.f32 %v555, %v643
      %v645 = vpop.f32.mrf.mxu0
      %v646 = vadd.f32 %v557, %v645
      %647 = vmatmul.bf16.gmra.mxu0 %v495
      %v648 = vpop.f32.mrf.mxu0
      %v649 = vadd.f32 %v560, %v648
      %v650 = vpop.f32.mrf.mxu0
      %v651 = vadd.f32 %v562, %v650
      %652 = vmatmul.bf16.gmra.mxu0 %v498
      %v653 = vpop.f32.mrf.mxu0
      %v654 = vadd.f32 %v565, %v653
      %v655 = vpop.f32.mrf.mxu0
      %v656 = vadd.f32 %v567, %v655
      %657 = vmatmul.bf16.gmra.mxu0 %v501
      %v658 = vpop.f32.mrf.mxu0
      %v659 = vadd.f32 %v570, %v658
      %v660 = vpop.f32.mrf.mxu0
      %v661 = vadd.f32 %v572, %v660
      %662 = vmatmul.bf16.gmra.mxu0 %v504
      %v663 = vpop.f32.mrf.mxu0
      %v664 = vadd.f32 %v575, %v663
      %v665 = vpop.f32.mrf.mxu0
      %v666 = vadd.f32 %v577, %v665
      %667 = vmatmul.bf16.gmra.mxu0 %v507
      %v668 = vpop.f32.mrf.mxu0
      %v669 = vadd.f32 %v580, %v668
      %v670 = vpop.f32.mrf.mxu0
      %v671 = vadd.f32 %v582, %v670
      %672 = vmatmul.bf16.gmra.mxu0 %v510
      %v673 = vpop.f32.mrf.mxu0
      %v674 = vadd.f32 %v585, %v673
      %v675 = vpop.f32.mrf.mxu0
      %v676 = vadd.f32 %v587, %v675
      %677 = vmatmul.bf16.gmra.mxu0 %v513
      %v678 = vpop.f32.mrf.mxu0
      %v679 = vadd.f32 %v590, %v678
      %v680 = vpop.f32.mrf.mxu0
      %v681 = vadd.f32 %v592, %v680
      %682 = vmatmul.bf16.gmra.mxu0 %v516
      %v683 = vpop.f32.mrf.mxu0
      %v684 = vadd.f32 %v595, %v683
      %v685 = vpop.f32.mrf.mxu0
      %v686 = vadd.f32 %v597, %v685
      %687 = vmatmul.bf16.gmra.mxu0 %v519
      %v688 = vpop.f32.mrf.mxu0
      %v689 = vadd.f32 %v600, %v688
      %v690 = vpop.f32.mrf.mxu0
      %v691 = vadd.f32 %v602, %v690
      %692 = vmatmul.bf16.gmra.mxu0 %v522
      %v693 = vpop.f32.mrf.mxu0
      %v694 = vadd.f32 %v605, %v693
      %v695 = vpop.f32.mrf.mxu0
      %v696 = vadd.f32 %v607, %v695
      %697 = vmatmul.bf16.gmra.mxu0 %v525
      %v698 = vpop.f32.mrf.mxu0
      %v699 = vadd.f32 %v610, %v698
      %v700 = vpop.f32.mrf.mxu0
      %v701 = vadd.f32 %v612, %v700
      %702 = vmatmul.bf16.gmra.mxu0 %v528
      %v703 = vpop.f32.mrf.mxu0
      %v704 = vadd.f32 %v615, %v703
      %v705 = vpop.f32.mrf.mxu0
      %v706 = vadd.f32 %v617, %v705
      %707 = vdwg.mxu0
      %v708 = vpack.c.bf16 %v629, %v629
      %v709 = vpack.c.bf16 %v631, %v631
      %v710 = vpack.c.bf16 %v634, %v634
      %v711 = vpack.c.bf16 %v636, %v636
      %v712 = vpack.c.bf16 %v639, %v639
      %v713 = vpack.c.bf16 %v641, %v641
      %v714 = vpack.c.bf16 %v644, %v644
      %v715 = vpack.c.bf16 %v646, %v646
      %v716 = vpack.c.bf16 %v649, %v649
      %v717 = vpack.c.bf16 %v651, %v651
      %v718 = vpack.c.bf16 %v654, %v654
      %v719 = vpack.c.bf16 %v656, %v656
      %v720 = vpack.c.bf16 %v659, %v659
      %v721 = vpack.c.bf16 %v661, %v661
      %v722 = vpack.c.bf16 %v664, %v664
      %v723 = vpack.c.bf16 %v666, %v666
      %v724 = vpack.c.bf16 %v669, %v669
      %v725 = vpack.c.bf16 %v671, %v671
      %v726 = vpack.c.bf16 %v674, %v674
      %v727 = vpack.c.bf16 %v676, %v676
      %v728 = vpack.c.bf16 %v679, %v679
      %v729 = vpack.c.bf16 %v681, %v681
      %v730 = vpack.c.bf16 %v684, %v684
      %v731 = vpack.c.bf16 %v686, %v686
      %v732 = vpack.c.bf16 %v689, %v689
      %v733 = vpack.c.bf16 %v691, %v691
      %v734 = vpack.c.bf16 %v694, %v694
      %v735 = vpack.c.bf16 %v696, %v696
      %v736 = vpack.c.bf16 %v699, %v699
      %v737 = vpack.c.bf16 %v701, %v701
      %v738 = vpack.c.bf16 %v704, %v704
      %v739 = vpack.c.bf16 %v706, %v706
      %740 = vst [vmem:[%s226] sm:$0xf] %v708
      %741 = vst [vmem:[%s226 + $0x4] sm:$0xf] %v709
      %742 = vst [vmem:[%s226 + $0x8] sm:$0xf] %v710
      %743 = vst [vmem:[%s226 + $0xc] sm:$0xf] %v711
      %744 = vst [vmem:[%s226 + $0x10] sm:$0xf] %v712
      %745 = vst [vmem:[%s226 + $0x14] sm:$0xf] %v713
      %746 = vst [vmem:[%s226 + $0x18] sm:$0xf] %v714
      %747 = vst [vmem:[%s226 + $0x1c] sm:$0xf] %v715
      %748 = vst [vmem:[%s226 + $0x20] sm:$0xf] %v716
      %749 = vst [vmem:[%s226 + $0x24] sm:$0xf] %v717
      %750 = vst [vmem:[%s226 + $0x28] sm:$0xf] %v718
      %751 = vst [vmem:[%s226 + $0x2c] sm:$0xf] %v719
      %752 = vst [vmem:[%s226 + $0x30] sm:$0xf] %v720
      %753 = vst [vmem:[%s226 + $0x34] sm:$0xf] %v721
      %754 = vst [vmem:[%s226 + $0x38] sm:$0xf] %v722
      %755 = vst [vmem:[%s226 + $0x3c] sm:$0xf] %v723
      %756 = vst [vmem:[%s226 + $0x40] sm:$0xf] %v724
      %757 = vst [vmem:[%s226 + $0x44] sm:$0xf] %v725
      %758 = vst [vmem:[%s226 + $0x48] sm:$0xf] %v726
      %759 = vst [vmem:[%s226 + $0x4c] sm:$0xf] %v727
      %760 = vst [vmem:[%s226 + $0x50] sm:$0xf] %v728
      %761 = vst [vmem:[%s226 + $0x54] sm:$0xf] %v729
      %762 = vst [vmem:[%s226 + $0x58] sm:$0xf] %v730
      %763 = vst [vmem:[%s226 + $0x5c] sm:$0xf] %v731
      %764 = vst [vmem:[%s226 + $0x60] sm:$0xf] %v732
      %765 = vst [vmem:[%s226 + $0x64] sm:$0xf] %v733
      %766 = vst [vmem:[%s226 + $0x68] sm:$0xf] %v734
      %767 = vst [vmem:[%s226 + $0x6c] sm:$0xf] %v735
      %768 = vst [vmem:[%s226 + $0x70] sm:$0xf] %v736
      %769 = vst [vmem:[%s226 + $0x74] sm:$0xf] %v737
      %770 = vst [vmem:[%s226 + $0x78] sm:$0xf] %v738
      %771 = vst [vmem:[%s226 + $0x7c] sm:$0xf] %v739
      %s772 = smul.u32 32, %s18
      %p773 = scmp.lt.s32.totalorder %s772, 63
      %s774 = scalar_select %p773, %s772, 63
      %p775 = scmp.lt.s32.totalorder %s19, 0
      %s776 = scalar_select %p775, %s19, 0
      %s777 = sadd.s32 %s776, %s774
      %s778 = smul.addr %s777, 4
      %s779 = scalar_lea.vmem %s3, %s778
      // Predicated region
      $region33: #{discriminator_unet_forward.19} parent=31 // pred_check
        %p780 = pneg %p124
      $region34: #{discriminator_unet_forward.19} parent=31 // pred_check_branch
        %782 = sbr.rel (%p780) target = $region36
      $region35: #{discriminator_unet_forward.19} parent=31 // pred_region
        %s783 = smul.u32 32, %s18
      $region36: #{discriminator_unet_forward.19} parent=31 // pred_fallthru
        _
    $region32: #{discriminator_unet_forward.19} parent=5 // pred_fallthru
      _
    %p784 = scmp.le.s32.totalorder 2, %s9
    // Predicated region
    $region37: #{discriminator_unet_forward.19} parent=5 // pred_check
      %p785 = pneg %p784
    $region38: #{discriminator_unet_forward.19} parent=5 // pred_check_branch
      %787 = sbr.rel (%p785) target = $region40
    $region39: #{discriminator_unet_forward.19} parent=5 // pred_region
      %s788 = ssub.s32 %s9, 2
      // Predicated region
      $region41: #{discriminator_unet_forward.19} parent=39 // pred_check
        %p789 = pneg %p130
      $region42: #{discriminator_unet_forward.19} parent=39 // pred_check_branch
        %791 = sbr.rel (%p789) target = $region44
      $region43: #{discriminator_unet_forward.19} parent=39 // pred_region
        %s792 = smul.u32 32, %s20
        %p793 = scmp.lt.s32.totalorder %s792, 63
        %s794 = scalar_select %p793, %s792, 63
        %p795 = scmp.lt.s32.totalorder %s21, 0
        %s796 = scalar_select %p795, %s21, 0
        %s797 = sadd.s32 %s796, %s794
        %s798 = smul.addr %s797, 4
        %s799 = scalar_lea.vmem %s3, %s798
      $region44: #{discriminator_unet_forward.19} parent=39 // pred_fallthru
        _
    $region40: #{discriminator_unet_forward.19} parent=5 // pred_fallthru
      _
  $region6: #{discriminator_unet_forward.19} parent=0 // loop_footer
    %s13 = sadd.s32 1, %s9
  $region7: #{discriminator_unet_forward.19} parent=0 // loop_footer_branch
    %8 = sbr.rel target = $region3
  $region8: #{discriminator_unet_forward.19} parent=0 // loop_exit
    _

</llo_original>
